<compile_context>
chip_gen: v5e
topology: v5e:2x2
jax: 0.10.0
libtpu: 0.0.40
codegen_flags: <defaults>
</compile_context>

<pallas_src>
import functools

import jax
import jax.numpy as jnp
from jax import lax
from jax.experimental import pallas as pl
from jax.experimental.pallas import tpu as pltpu


# ---------------------------------------------------------------------------
# In-kernel helpers (traced inside the Pallas kernel body).
# ---------------------------------------------------------------------------
def _lstm_step(gpre_t, h, c, whh, H):
    """One LSTM cell step given the precomputed input projection gpre_t = x@Wih + b."""
    gates = gpre_t + jnp.dot(h, whh, preferred_element_type=jnp.float32)   # (B, 4H)
    # Full-width sigmoid (valid for i, f, o; wasted-but-free on the g slice),
    # tanh only on the g slice.  PyTorch gate order: i, f, g, o.
    sg = jax.nn.sigmoid(gates)
    i = sg[:, 0 * H:1 * H]
    f = sg[:, 1 * H:2 * H]
    o = sg[:, 3 * H:4 * H]
    g = jnp.tanh(gates[:, 2 * H:3 * H])
    c_new = f * c + i * g
    h_new = o * jnp.tanh(c_new)
    return h_new, c_new


def _blstm_layer_flat(x_flat, wih, b, whh_f, whh_b, we_f, we_b, be, T, B):
    """One bidirectional LSTM layer + Linear embedding on a flat (T*B, In) slab.

    wih: (In, 8H) = [Wih_fwd | Wih_bwd], b: (1, 8H) = [b_fwd | b_bwd]
    we_f / we_b: top / bottom halves of the (2H, Out) embedding weight.
    Returns (T*B, Out).
    """
    H = whh_f.shape[0]

    # ---- hoisted input projection for BOTH directions, bias folded in --------
    gpre = jnp.dot(x_flat, wih, preferred_element_type=jnp.float32) + b     # (T*B, 8H)

    h_f = jnp.zeros((B, H), jnp.float32)
    c_f = jnp.zeros((B, H), jnp.float32)
    h_b = jnp.zeros((B, H), jnp.float32)
    c_b = jnp.zeros((B, H), jnp.float32)

    hf_steps = [None] * T
    hb_steps = [None] * T

    # ---- merged, statically-unrolled recurrence (fwd at t, bwd at T-1-t) -----
    for t in range(T):
        s = T - 1 - t
        gf = gpre[t * B:(t + 1) * B, 0 * H:4 * H]      # (B, 4H), static slice
        gb = gpre[s * B:(s + 1) * B, 4 * H:8 * H]      # (B, 4H), static slice
        h_f, c_f = _lstm_step(gf, h_f, c_f, whh_f, H)
        h_b, c_b = _lstm_step(gb, h_b, c_b, whh_b, H)
        hf_steps[t] = h_f
        hb_steps[s] = h_b

    hf_flat = jnp.concatenate(hf_steps, axis=0)        # (T*B, H), t-major rows
    hb_flat = jnp.concatenate(hb_steps, axis=0)        # (T*B, H)

    # ---- embedding without concat: split-weight matmuls ----------------------
    out = (jnp.dot(hf_flat, we_f, preferred_element_type=jnp.float32)
           + jnp.dot(hb_flat, we_b, preferred_element_type=jnp.float32)
           + be)                                       # (T*B, Out)
    return out


# ---------------------------------------------------------------------------
# Fused kernel: BLSTM(C->H->H) followed by BLSTM(H->H->Classes).
# ---------------------------------------------------------------------------
def crnn_head_kernel(x_ref,
                     wih1_ref, b1_ref, whh1f_ref, whh1b_ref, we1f_ref, we1b_ref, be1_ref,
                     wih2_ref, b2_ref, whh2f_ref, whh2b_ref, we2f_ref, we2b_ref, be2_ref,
                     out_ref, *, T, B):
    x = x_ref[...]                                               # (T*B, C)
    y1 = _blstm_layer_flat(x,
                           wih1_ref[...], b1_ref[...],
                           whh1f_ref[...], whh1b_ref[...],
                           we1f_ref[...], we1b_ref[...], be1_ref[...],
                           T, B)                                 # (T*B, H)
    y2 = _blstm_layer_flat(y1,
                           wih2_ref[...], b2_ref[...],
                           whh2f_ref[...], whh2b_ref[...],
                           we2f_ref[...], we2b_ref[...], be2_ref[...],
                           T, B)                                 # (T*B, Classes)
    out_ref[...] = y2


def _pack_layer(p):
    """Pre-pack one layer's params for the kernel (done in XLA, once per call)."""
    H = p["whh_f"].shape[0]
    wih = jnp.concatenate([p["wih_f"], p["wih_b"]], axis=1)      # (In, 8H)
    b = jnp.concatenate([p["b_f"], p["b_b"]], axis=1)            # (1, 8H)
    return (wih, b, p["whh_f"], p["whh_b"],
            p["wemb"][:H], p["wemb"][H:], p["bemb"])


@jax.jit
def crnn_head_forward(x_nchw, params_list):
    """PyTorch-equivalent forward: NCHW (b,c,1,w) -> (T=w, b, classes)."""
    b, c, h, w = x_nchw.shape
    assert h == 1, "the height of conv must be 1"
    # TODO(synk): use_attention / use_conv branches of the CRNN head are not
    # exercised by the default config and are not implemented here.
    x = jnp.transpose(jnp.squeeze(x_nchw, axis=2), (2, 0, 1))    # (T, B, C)
    T, B, C = x.shape
    x_flat = x.reshape(T * B, C)

    OUT = params_list[-1]["wemb"].shape[1]
    args = (x_flat,) + _pack_layer(params_list[0]) + _pack_layer(params_list[1])

    vmem = pl.BlockSpec(memory_space=pltpu.MemorySpace.VMEM)
    kernel = functools.partial(crnn_head_kernel, T=T, B=B)
    out_flat = pl.pallas_call(
        kernel,
        out_shape=jax.ShapeDtypeStruct((T * B, OUT), jnp.float32),
        in_specs=[vmem] * len(args),
        out_specs=vmem,
    )(*args)
    return out_flat.reshape(T, B, OUT)


# ---------------------------------------------------------------------------
# Deterministic parameter init (nn.LSTM / nn.Linear shapes; weights stored
# pre-transposed as (In, 4H) / (H, 4H) / (2H, Out) for x @ W layout).
# ---------------------------------------------------------------------------
def init_blstm_params(key, n_in, n_hidden, n_out):
    ks = jax.random.split(key, 9)
    s_lstm = 1.0 / jnp.sqrt(jnp.float32(n_hidden))
    s_lin = 1.0 / jnp.sqrt(jnp.float32(2 * n_hidden))

    def u(k, shape, s):
        return jax.random.uniform(k, shape, jnp.float32, -s, s)

    return {
        "wih_f": u(ks[0], (n_in, 4 * n_hidden), s_lstm),
        "whh_f": u(ks[1], (n_hidden, 4 * n_hidden), s_lstm),
        "b_f":  u(ks[2], (1, 4 * n_hidden), s_lstm),   # = b_ih + b_hh folded
        "wih_b": u(ks[3], (n_in, 4 * n_hidden), s_lstm),
        "whh_b": u(ks[4], (n_hidden, 4 * n_hidden), s_lstm),
        "b_b":  u(ks[5], (1, 4 * n_hidden), s_lstm),
        "wemb": u(ks[6], (2 * n_hidden, n_out), s_lin),
        "bemb": u(ks[7], (1, n_out), s_lin),
    }


# ---------------------------------------------------------------------------
# Pure-JAX reference (lax.scan) for correctness checking.
# ---------------------------------------------------------------------------
def blstm_ref(x, p):
    T, B, _ = x.shape
    H = p["whh_f"].shape[0]

    def run(x_seq, wih, whh, b):
        def step(carry, x_t):
            h, c = carry
            gates = x_t @ wih + h @ whh + b
            i = jax.nn.sigmoid(gates[:, :H])
            f = jax.nn.sigmoid(gates[:, H:2 * H])
            g = jnp.tanh(gates[:, 2 * H:3 * H])
            o = jax.nn.sigmoid(gates[:, 3 * H:])
            c = f * c + i * g
            h = o * jnp.tanh(c)
            return (h, c), h

        init = (jnp.zeros((B, H), jnp.float32), jnp.zeros((B, H), jnp.float32))
        _, hs = lax.scan(step, init, x_seq)
        return hs

    hf = run(x, p["wih_f"], p["whh_f"], p["b_f"])
    hb = run(x[::-1], p["wih_b"], p["whh_b"], p["b_b"])[::-1]
    rec = jnp.concatenate([hf, hb], axis=-1)
    out = rec.reshape(T * B, 2 * H) @ p["wemb"] + p["bemb"]
    return out.reshape(T, B, -1)


def crnn_head_ref(x_nchw, params_list):
    x = jnp.transpose(jnp.squeeze(x_nchw, axis=2), (2, 0, 1))
    for p in params_list:
        x = blstm_ref(x, p)
    return x


if __name__ == "__main__":
    # Small shapes consistent with the module: inchannel=32, hidden=32, classes=64.
    B, C, Himg, W = 2, 32, 1, 8
    HIDDEN, CLASSES = 32, 64

    key = jax.random.PRNGKey(0)
    kx, k1, k2 = jax.random.split(key, 3)
    x = jax.random.normal(kx, (B, C, Himg, W), jnp.float32)

    params = [
        init_blstm_params(k1, C, HIDDEN, HIDDEN),        # BLSTM(inchannel, hidden, hidden)
        init_blstm_params(k2, HIDDEN, HIDDEN, CLASSES),  # BLSTM(hidden, hidden, classes)
    ]

    out = crnn_head_forward(x, params)
    out = jax.block_until_ready(out)

    ref = crnn_head_ref(x, params)
    assert out.shape == (W, B, CLASSES), out.shape
    assert jnp.allclose(out, ref, rtol=1e-4, atol=1e-4), "mismatch vs reference"

    print("KERNEL_OK")
</pallas_src>

<mosaic_0001>
module attributes {stable_mosaic.version = 11 : i64} {
  func.func @crnn_head_kernel(%arg0: memref<16x32xf32, #tpu.memory_space<vmem>>, %arg1: memref<32x256xf32, #tpu.memory_space<vmem>>, %arg2: memref<1x256xf32, #tpu.memory_space<vmem>>, %arg3: memref<32x128xf32, #tpu.memory_space<vmem>>, %arg4: memref<32x128xf32, #tpu.memory_space<vmem>>, %arg5: memref<32x32xf32, #tpu.memory_space<vmem>>, %arg6: memref<32x32xf32, #tpu.memory_space<vmem>>, %arg7: memref<1x32xf32, #tpu.memory_space<vmem>>, %arg8: memref<32x256xf32, #tpu.memory_space<vmem>>, %arg9: memref<1x256xf32, #tpu.memory_space<vmem>>, %arg10: memref<32x128xf32, #tpu.memory_space<vmem>>, %arg11: memref<32x128xf32, #tpu.memory_space<vmem>>, %arg12: memref<32x64xf32, #tpu.memory_space<vmem>>, %arg13: memref<32x64xf32, #tpu.memory_space<vmem>>, %arg14: memref<1x64xf32, #tpu.memory_space<vmem>>, %arg15: memref<16x64xf32, #tpu.memory_space<vmem>>) attributes {dimension_semantics = [], scalar_prefetch = 0 : i64, scratch_operands = 0 : i64, tpu.core_type = #tpu.core_type<tc>} {
    %c0 = arith.constant 0 : index
    %c0_0 = arith.constant 0 : index
    %0 = vector.load %arg0[%c0, %c0_0] : memref<16x32xf32, #tpu.memory_space<vmem>>, vector<16x32xf32>
    %c0_1 = arith.constant 0 : index
    %c0_2 = arith.constant 0 : index
    %1 = vector.load %arg1[%c0_1, %c0_2] : memref<32x256xf32, #tpu.memory_space<vmem>>, vector<32x256xf32>
    %c0_3 = arith.constant 0 : index
    %c0_4 = arith.constant 0 : index
    %2 = vector.load %arg2[%c0_3, %c0_4] : memref<1x256xf32, #tpu.memory_space<vmem>>, vector<1x256xf32>
    %c0_5 = arith.constant 0 : index
    %c0_6 = arith.constant 0 : index
    %3 = vector.load %arg3[%c0_5, %c0_6] : memref<32x128xf32, #tpu.memory_space<vmem>>, vector<32x128xf32>
    %c0_7 = arith.constant 0 : index
    %c0_8 = arith.constant 0 : index
    %4 = vector.load %arg4[%c0_7, %c0_8] : memref<32x128xf32, #tpu.memory_space<vmem>>, vector<32x128xf32>
    %c0_9 = arith.constant 0 : index
    %c0_10 = arith.constant 0 : index
    %5 = vector.load %arg5[%c0_9, %c0_10] : memref<32x32xf32, #tpu.memory_space<vmem>>, vector<32x32xf32>
    %c0_11 = arith.constant 0 : index
    %c0_12 = arith.constant 0 : index
    %6 = vector.load %arg6[%c0_11, %c0_12] : memref<32x32xf32, #tpu.memory_space<vmem>>, vector<32x32xf32>
    %c0_13 = arith.constant 0 : index
    %c0_14 = arith.constant 0 : index
    %7 = vector.load %arg7[%c0_13, %c0_14] : memref<1x32xf32, #tpu.memory_space<vmem>>, vector<1x32xf32>
    %cst = arith.constant dense<0.000000e+00> : vector<16x256xf32>
    %8 = tpu.matmul %0, %1, %cst {dimension_numbers = #tpu.dot_dimension_numbers<[1], [0], [0], [1], [0, 0, 1, 1], [], []>} : vector<16x32xf32>, vector<32x256xf32>, vector<16x256xf32> -> vector<16x256xf32>
    %9 = vector.broadcast %2 : vector<1x256xf32> to vector<16x256xf32>
    %10 = arith.addf %8, %9 : vector<16x256xf32>
    %cst_15 = arith.constant 0.000000e+00 : f32
    %11 = vector.broadcast %cst_15 : f32 to vector<2x32xf32>
    %cst_16 = arith.constant 0.000000e+00 : f32
    %12 = vector.broadcast %cst_16 : f32 to vector<2x32xf32>
    %cst_17 = arith.constant 0.000000e+00 : f32
    %13 = vector.broadcast %cst_17 : f32 to vector<2x32xf32>
    %cst_18 = arith.constant 0.000000e+00 : f32
    %14 = vector.broadcast %cst_18 : f32 to vector<2x32xf32>
    %15 = vector.extract_strided_slice %10 {offsets = [0, 0], sizes = [2, 128], strides = [1, 1]} : vector<16x256xf32> to vector<2x128xf32>
    %16 = vector.extract_strided_slice %10 {offsets = [14, 128], sizes = [2, 128], strides = [1, 1]} : vector<16x256xf32> to vector<2x128xf32>
    %cst_19 = arith.constant dense<0.000000e+00> : vector<2x128xf32>
    %17 = tpu.matmul %11, %3, %cst_19 {dimension_numbers = #tpu.dot_dimension_numbers<[1], [0], [0], [1], [0, 0, 1, 1], [], []>} : vector<2x32xf32>, vector<32x128xf32>, vector<2x128xf32> -> vector<2x128xf32>
    %18 = arith.addf %15, %17 : vector<2x128xf32>
    %19 = arith.negf %18 : vector<2x128xf32>
    %20 = math.exp %19 : vector<2x128xf32>
    %cst_20 = arith.constant 1.000000e+00 : f32
    %21 = vector.broadcast %cst_20 : f32 to vector<2x128xf32>
    %22 = arith.addf %21, %20 : vector<2x128xf32>
    %23 = arith.divf %21, %22 : vector<2x128xf32>
    %24 = vector.extract_strided_slice %23 {offsets = [0, 0], sizes = [2, 32], strides = [1, 1]} : vector<2x128xf32> to vector<2x32xf32>
    %25 = vector.extract_strided_slice %23 {offsets = [0, 32], sizes = [2, 32], strides = [1, 1]} : vector<2x128xf32> to vector<2x32xf32>
    %26 = vector.extract_strided_slice %23 {offsets = [0, 96], sizes = [2, 32], strides = [1, 1]} : vector<2x128xf32> to vector<2x32xf32>
    %27 = vector.extract_strided_slice %18 {offsets = [0, 64], sizes = [2, 32], strides = [1, 1]} : vector<2x128xf32> to vector<2x32xf32>
    %28 = math.tanh %27 : vector<2x32xf32>
    %29 = arith.mulf %25, %12 : vector<2x32xf32>
    %30 = arith.mulf %24, %28 : vector<2x32xf32>
    %31 = arith.addf %29, %30 : vector<2x32xf32>
    %32 = math.tanh %31 : vector<2x32xf32>
    %33 = arith.mulf %26, %32 : vector<2x32xf32>
    %cst_21 = arith.constant dense<0.000000e+00> : vector<2x128xf32>
    %34 = tpu.matmul %13, %4, %cst_21 {dimension_numbers = #tpu.dot_dimension_numbers<[1], [0], [0], [1], [0, 0, 1, 1], [], []>} : vector<2x32xf32>, vector<32x128xf32>, vector<2x128xf32> -> vector<2x128xf32>
    %35 = arith.addf %16, %34 : vector<2x128xf32>
    %36 = arith.negf %35 : vector<2x128xf32>
    %37 = math.exp %36 : vector<2x128xf32>
    %cst_22 = arith.constant 1.000000e+00 : f32
    %38 = vector.broadcast %cst_22 : f32 to vector<2x128xf32>
    %39 = arith.addf %38, %37 : vector<2x128xf32>
    %40 = arith.divf %38, %39 : vector<2x128xf32>
    %41 = vector.extract_strided_slice %40 {offsets = [0, 0], sizes = [2, 32], strides = [1, 1]} : vector<2x128xf32> to vector<2x32xf32>
    %42 = vector.extract_strided_slice %40 {offsets = [0, 32], sizes = [2, 32], strides = [1, 1]} : vector<2x128xf32> to vector<2x32xf32>
    %43 = vector.extract_strided_slice %40 {offsets = [0, 96], sizes = [2, 32], strides = [1, 1]} : vector<2x128xf32> to vector<2x32xf32>
    %44 = vector.extract_strided_slice %35 {offsets = [0, 64], sizes = [2, 32], strides = [1, 1]} : vector<2x128xf32> to vector<2x32xf32>
    %45 = math.tanh %44 : vector<2x32xf32>
    %46 = arith.mulf %42, %14 : vector<2x32xf32>
    %47 = arith.mulf %41, %45 : vector<2x32xf32>
    %48 = arith.addf %46, %47 : vector<2x32xf32>
    %49 = math.tanh %48 : vector<2x32xf32>
    %50 = arith.mulf %43, %49 : vector<2x32xf32>
    %51 = vector.extract_strided_slice %10 {offsets = [2, 0], sizes = [2, 128], strides = [1, 1]} : vector<16x256xf32> to vector<2x128xf32>
    %52 = vector.extract_strided_slice %10 {offsets = [12, 128], sizes = [2, 128], strides = [1, 1]} : vector<16x256xf32> to vector<2x128xf32>
    %cst_23 = arith.constant dense<0.000000e+00> : vector<2x128xf32>
    %53 = tpu.matmul %33, %3, %cst_23 {dimension_numbers = #tpu.dot_dimension_numbers<[1], [0], [0], [1], [0, 0, 1, 1], [], []>} : vector<2x32xf32>, vector<32x128xf32>, vector<2x128xf32> -> vector<2x128xf32>
    %54 = arith.addf %51, %53 : vector<2x128xf32>
    %55 = arith.negf %54 : vector<2x128xf32>
    %56 = math.exp %55 : vector<2x128xf32>
    %cst_24 = arith.constant 1.000000e+00 : f32
    %57 = vector.broadcast %cst_24 : f32 to vector<2x128xf32>
    %58 = arith.addf %57, %56 : vector<2x128xf32>
    %59 = arith.divf %57, %58 : vector<2x128xf32>
    %60 = vector.extract_strided_slice %59 {offsets = [0, 0], sizes = [2, 32], strides = [1, 1]} : vector<2x128xf32> to vector<2x32xf32>
    %61 = vector.extract_strided_slice %59 {offsets = [0, 32], sizes = [2, 32], strides = [1, 1]} : vector<2x128xf32> to vector<2x32xf32>
    %62 = vector.extract_strided_slice %59 {offsets = [0, 96], sizes = [2, 32], strides = [1, 1]} : vector<2x128xf32> to vector<2x32xf32>
    %63 = vector.extract_strided_slice %54 {offsets = [0, 64], sizes = [2, 32], strides = [1, 1]} : vector<2x128xf32> to vector<2x32xf32>
    %64 = math.tanh %63 : vector<2x32xf32>
    %65 = arith.mulf %61, %31 : vector<2x32xf32>
    %66 = arith.mulf %60, %64 : vector<2x32xf32>
    %67 = arith.addf %65, %66 : vector<2x32xf32>
    %68 = math.tanh %67 : vector<2x32xf32>
    %69 = arith.mulf %62, %68 : vector<2x32xf32>
    %cst_25 = arith.constant dense<0.000000e+00> : vector<2x128xf32>
    %70 = tpu.matmul %50, %4, %cst_25 {dimension_numbers = #tpu.dot_dimension_numbers<[1], [0], [0], [1], [0, 0, 1, 1], [], []>} : vector<2x32xf32>, vector<32x128xf32>, vector<2x128xf32> -> vector<2x128xf32>
    %71 = arith.addf %52, %70 : vector<2x128xf32>
    %72 = arith.negf %71 : vector<2x128xf32>
    %73 = math.exp %72 : vector<2x128xf32>
    %cst_26 = arith.constant 1.000000e+00 : f32
    %74 = vector.broadcast %cst_26 : f32 to vector<2x128xf32>
    %75 = arith.addf %74, %73 : vector<2x128xf32>
    %76 = arith.divf %74, %75 : vector<2x128xf32>
    %77 = vector.extract_strided_slice %76 {offsets = [0, 0], sizes = [2, 32], strides = [1, 1]} : vector<2x128xf32> to vector<2x32xf32>
    %78 = vector.extract_strided_slice %76 {offsets = [0, 32], sizes = [2, 32], strides = [1, 1]} : vector<2x128xf32> to vector<2x32xf32>
    %79 = vector.extract_strided_slice %76 {offsets = [0, 96], sizes = [2, 32], strides = [1, 1]} : vector<2x128xf32> to vector<2x32xf32>
    %80 = vector.extract_strided_slice %71 {offsets = [0, 64], sizes = [2, 32], strides = [1, 1]} : vector<2x128xf32> to vector<2x32xf32>
    %81 = math.tanh %80 : vector<2x32xf32>
    %82 = arith.mulf %78, %48 : vector<2x32xf32>
    %83 = arith.mulf %77, %81 : vector<2x32xf32>
    %84 = arith.addf %82, %83 : vector<2x32xf32>
    %85 = math.tanh %84 : vector<2x32xf32>
    %86 = arith.mulf %79, %85 : vector<2x32xf32>
    %87 = vector.extract_strided_slice %10 {offsets = [4, 0], sizes = [2, 128], strides = [1, 1]} : vector<16x256xf32> to vector<2x128xf32>
    %88 = vector.extract_strided_slice %10 {offsets = [10, 128], sizes = [2, 128], strides = [1, 1]} : vector<16x256xf32> to vector<2x128xf32>
    %cst_27 = arith.constant dense<0.000000e+00> : vector<2x128xf32>
    %89 = tpu.matmul %69, %3, %cst_27 {dimension_numbers = #tpu.dot_dimension_numbers<[1], [0], [0], [1], [0, 0, 1, 1], [], []>} : vector<2x32xf32>, vector<32x128xf32>, vector<2x128xf32> -> vector<2x128xf32>
    %90 = arith.addf %87, %89 : vector<2x128xf32>
    %91 = arith.negf %90 : vector<2x128xf32>
    %92 = math.exp %91 : vector<2x128xf32>
    %cst_28 = arith.constant 1.000000e+00 : f32
    %93 = vector.broadcast %cst_28 : f32 to vector<2x128xf32>
    %94 = arith.addf %93, %92 : vector<2x128xf32>
    %95 = arith.divf %93, %94 : vector<2x128xf32>
    %96 = vector.extract_strided_slice %95 {offsets = [0, 0], sizes = [2, 32], strides = [1, 1]} : vector<2x128xf32> to vector<2x32xf32>
    %97 = vector.extract_strided_slice %95 {offsets = [0, 32], sizes = [2, 32], strides = [1, 1]} : vector<2x128xf32> to vector<2x32xf32>
    %98 = vector.extract_strided_slice %95 {offsets = [0, 96], sizes = [2, 32], strides = [1, 1]} : vector<2x128xf32> to vector<2x32xf32>
    %99 = vector.extract_strided_slice %90 {offsets = [0, 64], sizes = [2, 32], strides = [1, 1]} : vector<2x128xf32> to vector<2x32xf32>
    %100 = math.tanh %99 : vector<2x32xf32>
    %101 = arith.mulf %97, %67 : vector<2x32xf32>
    %102 = arith.mulf %96, %100 : vector<2x32xf32>
    %103 = arith.addf %101, %102 : vector<2x32xf32>
    %104 = math.tanh %103 : vector<2x32xf32>
    %105 = arith.mulf %98, %104 : vector<2x32xf32>
    %cst_29 = arith.constant dense<0.000000e+00> : vector<2x128xf32>
    %106 = tpu.matmul %86, %4, %cst_29 {dimension_numbers = #tpu.dot_dimension_numbers<[1], [0], [0], [1], [0, 0, 1, 1], [], []>} : vector<2x32xf32>, vector<32x128xf32>, vector<2x128xf32> -> vector<2x128xf32>
    %107 = arith.addf %88, %106 : vector<2x128xf32>
    %108 = arith.negf %107 : vector<2x128xf32>
    %109 = math.exp %108 : vector<2x128xf32>
    %cst_30 = arith.constant 1.000000e+00 : f32
    %110 = vector.broadcast %cst_30 : f32 to vector<2x128xf32>
    %111 = arith.addf %110, %109 : vector<2x128xf32>
    %112 = arith.divf %110, %111 : vector<2x128xf32>
    %113 = vector.extract_strided_slice %112 {offsets = [0, 0], sizes = [2, 32], strides = [1, 1]} : vector<2x128xf32> to vector<2x32xf32>
    %114 = vector.extract_strided_slice %112 {offsets = [0, 32], sizes = [2, 32], strides = [1, 1]} : vector<2x128xf32> to vector<2x32xf32>
    %115 = vector.extract_strided_slice %112 {offsets = [0, 96], sizes = [2, 32], strides = [1, 1]} : vector<2x128xf32> to vector<2x32xf32>
    %116 = vector.extract_strided_slice %107 {offsets = [0, 64], sizes = [2, 32], strides = [1, 1]} : vector<2x128xf32> to vector<2x32xf32>
    %117 = math.tanh %116 : vector<2x32xf32>
    %118 = arith.mulf %114, %84 : vector<2x32xf32>
    %119 = arith.mulf %113, %117 : vector<2x32xf32>
    %120 = arith.addf %118, %119 : vector<2x32xf32>
    %121 = math.tanh %120 : vector<2x32xf32>
    %122 = arith.mulf %115, %121 : vector<2x32xf32>
    %123 = vector.extract_strided_slice %10 {offsets = [6, 0], sizes = [2, 128], strides = [1, 1]} : vector<16x256xf32> to vector<2x128xf32>
    %124 = vector.extract_strided_slice %10 {offsets = [8, 128], sizes = [2, 128], strides = [1, 1]} : vector<16x256xf32> to vector<2x128xf32>
    %cst_31 = arith.constant dense<0.000000e+00> : vector<2x128xf32>
    %125 = tpu.matmul %105, %3, %cst_31 {dimension_numbers = #tpu.dot_dimension_numbers<[1], [0], [0], [1], [0, 0, 1, 1], [], []>} : vector<2x32xf32>, vector<32x128xf32>, vector<2x128xf32> -> vector<2x128xf32>
    %126 = arith.addf %123, %125 : vector<2x128xf32>
    %127 = arith.negf %126 : vector<2x128xf32>
    %128 = math.exp %127 : vector<2x128xf32>
    %cst_32 = arith.constant 1.000000e+00 : f32
    %129 = vector.broadcast %cst_32 : f32 to vector<2x128xf32>
    %130 = arith.addf %129, %128 : vector<2x128xf32>
    %131 = arith.divf %129, %130 : vector<2x128xf32>
    %132 = vector.extract_strided_slice %131 {offsets = [0, 0], sizes = [2, 32], strides = [1, 1]} : vector<2x128xf32> to vector<2x32xf32>
    %133 = vector.extract_strided_slice %131 {offsets = [0, 32], sizes = [2, 32], strides = [1, 1]} : vector<2x128xf32> to vector<2x32xf32>
    %134 = vector.extract_strided_slice %131 {offsets = [0, 96], sizes = [2, 32], strides = [1, 1]} : vector<2x128xf32> to vector<2x32xf32>
    %135 = vector.extract_strided_slice %126 {offsets = [0, 64], sizes = [2, 32], strides = [1, 1]} : vector<2x128xf32> to vector<2x32xf32>
    %136 = math.tanh %135 : vector<2x32xf32>
    %137 = arith.mulf %133, %103 : vector<2x32xf32>
    %138 = arith.mulf %132, %136 : vector<2x32xf32>
    %139 = arith.addf %137, %138 : vector<2x32xf32>
    %140 = math.tanh %139 : vector<2x32xf32>
    %141 = arith.mulf %134, %140 : vector<2x32xf32>
    %cst_33 = arith.constant dense<0.000000e+00> : vector<2x128xf32>
    %142 = tpu.matmul %122, %4, %cst_33 {dimension_numbers = #tpu.dot_dimension_numbers<[1], [0], [0], [1], [0, 0, 1, 1], [], []>} : vector<2x32xf32>, vector<32x128xf32>, vector<2x128xf32> -> vector<2x128xf32>
    %143 = arith.addf %124, %142 : vector<2x128xf32>
    %144 = arith.negf %143 : vector<2x128xf32>
    %145 = math.exp %144 : vector<2x128xf32>
    %cst_34 = arith.constant 1.000000e+00 : f32
    %146 = vector.broadcast %cst_34 : f32 to vector<2x128xf32>
    %147 = arith.addf %146, %145 : vector<2x128xf32>
    %148 = arith.divf %146, %147 : vector<2x128xf32>
    %149 = vector.extract_strided_slice %148 {offsets = [0, 0], sizes = [2, 32], strides = [1, 1]} : vector<2x128xf32> to vector<2x32xf32>
    %150 = vector.extract_strided_slice %148 {offsets = [0, 32], sizes = [2, 32], strides = [1, 1]} : vector<2x128xf32> to vector<2x32xf32>
    %151 = vector.extract_strided_slice %148 {offsets = [0, 96], sizes = [2, 32], strides = [1, 1]} : vector<2x128xf32> to vector<2x32xf32>
    %152 = vector.extract_strided_slice %143 {offsets = [0, 64], sizes = [2, 32], strides = [1, 1]} : vector<2x128xf32> to vector<2x32xf32>
    %153 = math.tanh %152 : vector<2x32xf32>
    %154 = arith.mulf %150, %120 : vector<2x32xf32>
    %155 = arith.mulf %149, %153 : vector<2x32xf32>
    %156 = arith.addf %154, %155 : vector<2x32xf32>
    %157 = math.tanh %156 : vector<2x32xf32>
    %158 = arith.mulf %151, %157 : vector<2x32xf32>
    %159 = vector.extract_strided_slice %10 {offsets = [8, 0], sizes = [2, 128], strides = [1, 1]} : vector<16x256xf32> to vector<2x128xf32>
    %160 = vector.extract_strided_slice %10 {offsets = [6, 128], sizes = [2, 128], strides = [1, 1]} : vector<16x256xf32> to vector<2x128xf32>
    %cst_35 = arith.constant dense<0.000000e+00> : vector<2x128xf32>
    %161 = tpu.matmul %141, %3, %cst_35 {dimension_numbers = #tpu.dot_dimension_numbers<[1], [0], [0], [1], [0, 0, 1, 1], [], []>} : vector<2x32xf32>, vector<32x128xf32>, vector<2x128xf32> -> vector<2x128xf32>
    %162 = arith.addf %159, %161 : vector<2x128xf32>
    %163 = arith.negf %162 : vector<2x128xf32>
    %164 = math.exp %163 : vector<2x128xf32>
    %cst_36 = arith.constant 1.000000e+00 : f32
    %165 = vector.broadcast %cst_36 : f32 to vector<2x128xf32>
    %166 = arith.addf %165, %164 : vector<2x128xf32>
    %167 = arith.divf %165, %166 : vector<2x128xf32>
    %168 = vector.extract_strided_slice %167 {offsets = [0, 0], sizes = [2, 32], strides = [1, 1]} : vector<2x128xf32> to vector<2x32xf32>
    %169 = vector.extract_strided_slice %167 {offsets = [0, 32], sizes = [2, 32], strides = [1, 1]} : vector<2x128xf32> to vector<2x32xf32>
    %170 = vector.extract_strided_slice %167 {offsets = [0, 96], sizes = [2, 32], strides = [1, 1]} : vector<2x128xf32> to vector<2x32xf32>
    %171 = vector.extract_strided_slice %162 {offsets = [0, 64], sizes = [2, 32], strides = [1, 1]} : vector<2x128xf32> to vector<2x32xf32>
    %172 = math.tanh %171 : vector<2x32xf32>
    %173 = arith.mulf %169, %139 : vector<2x32xf32>
    %174 = arith.mulf %168, %172 : vector<2x32xf32>
    %175 = arith.addf %173, %174 : vector<2x32xf32>
    %176 = math.tanh %175 : vector<2x32xf32>
    %177 = arith.mulf %170, %176 : vector<2x32xf32>
    %cst_37 = arith.constant dense<0.000000e+00> : vector<2x128xf32>
    %178 = tpu.matmul %158, %4, %cst_37 {dimension_numbers = #tpu.dot_dimension_numbers<[1], [0], [0], [1], [0, 0, 1, 1], [], []>} : vector<2x32xf32>, vector<32x128xf32>, vector<2x128xf32> -> vector<2x128xf32>
    %179 = arith.addf %160, %178 : vector<2x128xf32>
    %180 = arith.negf %179 : vector<2x128xf32>
    %181 = math.exp %180 : vector<2x128xf32>
    %cst_38 = arith.constant 1.000000e+00 : f32
    %182 = vector.broadcast %cst_38 : f32 to vector<2x128xf32>
    %183 = arith.addf %182, %181 : vector<2x128xf32>
    %184 = arith.divf %182, %183 : vector<2x128xf32>
    %185 = vector.extract_strided_slice %184 {offsets = [0, 0], sizes = [2, 32], strides = [1, 1]} : vector<2x128xf32> to vector<2x32xf32>
    %186 = vector.extract_strided_slice %184 {offsets = [0, 32], sizes = [2, 32], strides = [1, 1]} : vector<2x128xf32> to vector<2x32xf32>
    %187 = vector.extract_strided_slice %184 {offsets = [0, 96], sizes = [2, 32], strides = [1, 1]} : vector<2x128xf32> to vector<2x32xf32>
    %188 = vector.extract_strided_slice %179 {offsets = [0, 64], sizes = [2, 32], strides = [1, 1]} : vector<2x128xf32> to vector<2x32xf32>
    %189 = math.tanh %188 : vector<2x32xf32>
    %190 = arith.mulf %186, %156 : vector<2x32xf32>
    %191 = arith.mulf %185, %189 : vector<2x32xf32>
    %192 = arith.addf %190, %191 : vector<2x32xf32>
    %193 = math.tanh %192 : vector<2x32xf32>
    %194 = arith.mulf %187, %193 : vector<2x32xf32>
    %195 = vector.extract_strided_slice %10 {offsets = [10, 0], sizes = [2, 128], strides = [1, 1]} : vector<16x256xf32> to vector<2x128xf32>
    %196 = vector.extract_strided_slice %10 {offsets = [4, 128], sizes = [2, 128], strides = [1, 1]} : vector<16x256xf32> to vector<2x128xf32>
    %cst_39 = arith.constant dense<0.000000e+00> : vector<2x128xf32>
    %197 = tpu.matmul %177, %3, %cst_39 {dimension_numbers = #tpu.dot_dimension_numbers<[1], [0], [0], [1], [0, 0, 1, 1], [], []>} : vector<2x32xf32>, vector<32x128xf32>, vector<2x128xf32> -> vector<2x128xf32>
    %198 = arith.addf %195, %197 : vector<2x128xf32>
    %199 = arith.negf %198 : vector<2x128xf32>
    %200 = math.exp %199 : vector<2x128xf32>
    %cst_40 = arith.constant 1.000000e+00 : f32
    %201 = vector.broadcast %cst_40 : f32 to vector<2x128xf32>
    %202 = arith.addf %201, %200 : vector<2x128xf32>
    %203 = arith.divf %201, %202 : vector<2x128xf32>
    %204 = vector.extract_strided_slice %203 {offsets = [0, 0], sizes = [2, 32], strides = [1, 1]} : vector<2x128xf32> to vector<2x32xf32>
    %205 = vector.extract_strided_slice %203 {offsets = [0, 32], sizes = [2, 32], strides = [1, 1]} : vector<2x128xf32> to vector<2x32xf32>
    %206 = vector.extract_strided_slice %203 {offsets = [0, 96], sizes = [2, 32], strides = [1, 1]} : vector<2x128xf32> to vector<2x32xf32>
    %207 = vector.extract_strided_slice %198 {offsets = [0, 64], sizes = [2, 32], strides = [1, 1]} : vector<2x128xf32> to vector<2x32xf32>
    %208 = math.tanh %207 : vector<2x32xf32>
    %209 = arith.mulf %205, %175 : vector<2x32xf32>
    %210 = arith.mulf %204, %208 : vector<2x32xf32>
    %211 = arith.addf %209, %210 : vector<2x32xf32>
    %212 = math.tanh %211 : vector<2x32xf32>
    %213 = arith.mulf %206, %212 : vector<2x32xf32>
    %cst_41 = arith.constant dense<0.000000e+00> : vector<2x128xf32>
    %214 = tpu.matmul %194, %4, %cst_41 {dimension_numbers = #tpu.dot_dimension_numbers<[1], [0], [0], [1], [0, 0, 1, 1], [], []>} : vector<2x32xf32>, vector<32x128xf32>, vector<2x128xf32> -> vector<2x128xf32>
    %215 = arith.addf %196, %214 : vector<2x128xf32>
    %216 = arith.negf %215 : vector<2x128xf32>
    %217 = math.exp %216 : vector<2x128xf32>
    %cst_42 = arith.constant 1.000000e+00 : f32
    %218 = vector.broadcast %cst_42 : f32 to vector<2x128xf32>
    %219 = arith.addf %218, %217 : vector<2x128xf32>
    %220 = arith.divf %218, %219 : vector<2x128xf32>
    %221 = vector.extract_strided_slice %220 {offsets = [0, 0], sizes = [2, 32], strides = [1, 1]} : vector<2x128xf32> to vector<2x32xf32>
    %222 = vector.extract_strided_slice %220 {offsets = [0, 32], sizes = [2, 32], strides = [1, 1]} : vector<2x128xf32> to vector<2x32xf32>
    %223 = vector.extract_strided_slice %220 {offsets = [0, 96], sizes = [2, 32], strides = [1, 1]} : vector<2x128xf32> to vector<2x32xf32>
    %224 = vector.extract_strided_slice %215 {offsets = [0, 64], sizes = [2, 32], strides = [1, 1]} : vector<2x128xf32> to vector<2x32xf32>
    %225 = math.tanh %224 : vector<2x32xf32>
    %226 = arith.mulf %222, %192 : vector<2x32xf32>
    %227 = arith.mulf %221, %225 : vector<2x32xf32>
    %228 = arith.addf %226, %227 : vector<2x32xf32>
    %229 = math.tanh %228 : vector<2x32xf32>
    %230 = arith.mulf %223, %229 : vector<2x32xf32>
    %231 = vector.extract_strided_slice %10 {offsets = [12, 0], sizes = [2, 128], strides = [1, 1]} : vector<16x256xf32> to vector<2x128xf32>
    %232 = vector.extract_strided_slice %10 {offsets = [2, 128], sizes = [2, 128], strides = [1, 1]} : vector<16x256xf32> to vector<2x128xf32>
    %cst_43 = arith.constant dense<0.000000e+00> : vector<2x128xf32>
    %233 = tpu.matmul %213, %3, %cst_43 {dimension_numbers = #tpu.dot_dimension_numbers<[1], [0], [0], [1], [0, 0, 1, 1], [], []>} : vector<2x32xf32>, vector<32x128xf32>, vector<2x128xf32> -> vector<2x128xf32>
    %234 = arith.addf %231, %233 : vector<2x128xf32>
    %235 = arith.negf %234 : vector<2x128xf32>
    %236 = math.exp %235 : vector<2x128xf32>
    %cst_44 = arith.constant 1.000000e+00 : f32
    %237 = vector.broadcast %cst_44 : f32 to vector<2x128xf32>
    %238 = arith.addf %237, %236 : vector<2x128xf32>
    %239 = arith.divf %237, %238 : vector<2x128xf32>
    %240 = vector.extract_strided_slice %239 {offsets = [0, 0], sizes = [2, 32], strides = [1, 1]} : vector<2x128xf32> to vector<2x32xf32>
    %241 = vector.extract_strided_slice %239 {offsets = [0, 32], sizes = [2, 32], strides = [1, 1]} : vector<2x128xf32> to vector<2x32xf32>
    %242 = vector.extract_strided_slice %239 {offsets = [0, 96], sizes = [2, 32], strides = [1, 1]} : vector<2x128xf32> to vector<2x32xf32>
    %243 = vector.extract_strided_slice %234 {offsets = [0, 64], sizes = [2, 32], strides = [1, 1]} : vector<2x128xf32> to vector<2x32xf32>
    %244 = math.tanh %243 : vector<2x32xf32>
    %245 = arith.mulf %241, %211 : vector<2x32xf32>
    %246 = arith.mulf %240, %244 : vector<2x32xf32>
    %247 = arith.addf %245, %246 : vector<2x32xf32>
    %248 = math.tanh %247 : vector<2x32xf32>
    %249 = arith.mulf %242, %248 : vector<2x32xf32>
    %cst_45 = arith.constant dense<0.000000e+00> : vector<2x128xf32>
    %250 = tpu.matmul %230, %4, %cst_45 {dimension_numbers = #tpu.dot_dimension_numbers<[1], [0], [0], [1], [0, 0, 1, 1], [], []>} : vector<2x32xf32>, vector<32x128xf32>, vector<2x128xf32> -> vector<2x128xf32>
    %251 = arith.addf %232, %250 : vector<2x128xf32>
    %252 = arith.negf %251 : vector<2x128xf32>
    %253 = math.exp %252 : vector<2x128xf32>
    %cst_46 = arith.constant 1.000000e+00 : f32
    %254 = vector.broadcast %cst_46 : f32 to vector<2x128xf32>
    %255 = arith.addf %254, %253 : vector<2x128xf32>
    %256 = arith.divf %254, %255 : vector<2x128xf32>
    %257 = vector.extract_strided_slice %256 {offsets = [0, 0], sizes = [2, 32], strides = [1, 1]} : vector<2x128xf32> to vector<2x32xf32>
    %258 = vector.extract_strided_slice %256 {offsets = [0, 32], sizes = [2, 32], strides = [1, 1]} : vector<2x128xf32> to vector<2x32xf32>
    %259 = vector.extract_strided_slice %256 {offsets = [0, 96], sizes = [2, 32], strides = [1, 1]} : vector<2x128xf32> to vector<2x32xf32>
    %260 = vector.extract_strided_slice %251 {offsets = [0, 64], sizes = [2, 32], strides = [1, 1]} : vector<2x128xf32> to vector<2x32xf32>
    %261 = math.tanh %260 : vector<2x32xf32>
    %262 = arith.mulf %258, %228 : vector<2x32xf32>
    %263 = arith.mulf %257, %261 : vector<2x32xf32>
    %264 = arith.addf %262, %263 : vector<2x32xf32>
    %265 = math.tanh %264 : vector<2x32xf32>
    %266 = arith.mulf %259, %265 : vector<2x32xf32>
    %267 = vector.extract_strided_slice %10 {offsets = [14, 0], sizes = [2, 128], strides = [1, 1]} : vector<16x256xf32> to vector<2x128xf32>
    %268 = vector.extract_strided_slice %10 {offsets = [0, 128], sizes = [2, 128], strides = [1, 1]} : vector<16x256xf32> to vector<2x128xf32>
    %cst_47 = arith.constant dense<0.000000e+00> : vector<2x128xf32>
    %269 = tpu.matmul %249, %3, %cst_47 {dimension_numbers = #tpu.dot_dimension_numbers<[1], [0], [0], [1], [0, 0, 1, 1], [], []>} : vector<2x32xf32>, vector<32x128xf32>, vector<2x128xf32> -> vector<2x128xf32>
    %270 = arith.addf %267, %269 : vector<2x128xf32>
    %271 = arith.negf %270 : vector<2x128xf32>
    %272 = math.exp %271 : vector<2x128xf32>
    %cst_48 = arith.constant 1.000000e+00 : f32
    %273 = vector.broadcast %cst_48 : f32 to vector<2x128xf32>
    %274 = arith.addf %273, %272 : vector<2x128xf32>
    %275 = arith.divf %273, %274 : vector<2x128xf32>
    %276 = vector.extract_strided_slice %275 {offsets = [0, 0], sizes = [2, 32], strides = [1, 1]} : vector<2x128xf32> to vector<2x32xf32>
    %277 = vector.extract_strided_slice %275 {offsets = [0, 32], sizes = [2, 32], strides = [1, 1]} : vector<2x128xf32> to vector<2x32xf32>
    %278 = vector.extract_strided_slice %275 {offsets = [0, 96], sizes = [2, 32], strides = [1, 1]} : vector<2x128xf32> to vector<2x32xf32>
    %279 = vector.extract_strided_slice %270 {offsets = [0, 64], sizes = [2, 32], strides = [1, 1]} : vector<2x128xf32> to vector<2x32xf32>
    %280 = math.tanh %279 : vector<2x32xf32>
    %281 = arith.mulf %277, %247 : vector<2x32xf32>
    %282 = arith.mulf %276, %280 : vector<2x32xf32>
    %283 = arith.addf %281, %282 : vector<2x32xf32>
    %284 = math.tanh %283 : vector<2x32xf32>
    %285 = arith.mulf %278, %284 : vector<2x32xf32>
    %cst_49 = arith.constant dense<0.000000e+00> : vector<2x128xf32>
    %286 = tpu.matmul %266, %4, %cst_49 {dimension_numbers = #tpu.dot_dimension_numbers<[1], [0], [0], [1], [0, 0, 1, 1], [], []>} : vector<2x32xf32>, vector<32x128xf32>, vector<2x128xf32> -> vector<2x128xf32>
    %287 = arith.addf %268, %286 : vector<2x128xf32>
    %288 = arith.negf %287 : vector<2x128xf32>
    %289 = math.exp %288 : vector<2x128xf32>
    %cst_50 = arith.constant 1.000000e+00 : f32
    %290 = vector.broadcast %cst_50 : f32 to vector<2x128xf32>
    %291 = arith.addf %290, %289 : vector<2x128xf32>
    %292 = arith.divf %290, %291 : vector<2x128xf32>
    %293 = vector.extract_strided_slice %292 {offsets = [0, 0], sizes = [2, 32], strides = [1, 1]} : vector<2x128xf32> to vector<2x32xf32>
    %294 = vector.extract_strided_slice %292 {offsets = [0, 32], sizes = [2, 32], strides = [1, 1]} : vector<2x128xf32> to vector<2x32xf32>
    %295 = vector.extract_strided_slice %292 {offsets = [0, 96], sizes = [2, 32], strides = [1, 1]} : vector<2x128xf32> to vector<2x32xf32>
    %296 = vector.extract_strided_slice %287 {offsets = [0, 64], sizes = [2, 32], strides = [1, 1]} : vector<2x128xf32> to vector<2x32xf32>
    %297 = math.tanh %296 : vector<2x32xf32>
    %298 = arith.mulf %294, %264 : vector<2x32xf32>
    %299 = arith.mulf %293, %297 : vector<2x32xf32>
    %300 = arith.addf %298, %299 : vector<2x32xf32>
    %301 = math.tanh %300 : vector<2x32xf32>
    %302 = arith.mulf %295, %301 : vector<2x32xf32>
    %303 = tpu.concatenate %33, %69, %105, %141, %177, %213, %249, %285 in 0 : vector<2x32xf32>, vector<2x32xf32>, vector<2x32xf32>, vector<2x32xf32>, vector<2x32xf32>, vector<2x32xf32>, vector<2x32xf32>, vector<2x32xf32> -> vector<16x32xf32>
    %304 = tpu.concatenate %302, %266, %230, %194, %158, %122, %86, %50 in 0 : vector<2x32xf32>, vector<2x32xf32>, vector<2x32xf32>, vector<2x32xf32>, vector<2x32xf32>, vector<2x32xf32>, vector<2x32xf32>, vector<2x32xf32> -> vector<16x32xf32>
    %cst_51 = arith.constant dense<0.000000e+00> : vector<16x32xf32>
    %305 = tpu.matmul %303, %5, %cst_51 {dimension_numbers = #tpu.dot_dimension_numbers<[1], [0], [0], [1], [0, 0, 1, 1], [], []>} : vector<16x32xf32>, vector<32x32xf32>, vector<16x32xf32> -> vector<16x32xf32>
    %cst_52 = arith.constant dense<0.000000e+00> : vector<16x32xf32>
    %306 = tpu.matmul %304, %6, %cst_52 {dimension_numbers = #tpu.dot_dimension_numbers<[1], [0], [0], [1], [0, 0, 1, 1], [], []>} : vector<16x32xf32>, vector<32x32xf32>, vector<16x32xf32> -> vector<16x32xf32>
    %307 = arith.addf %305, %306 : vector<16x32xf32>
    %308 = vector.broadcast %7 : vector<1x32xf32> to vector<16x32xf32>
    %309 = arith.addf %307, %308 : vector<16x32xf32>
    %c0_53 = arith.constant 0 : index
    %c0_54 = arith.constant 0 : index
    %310 = vector.load %arg8[%c0_53, %c0_54] : memref<32x256xf32, #tpu.memory_space<vmem>>, vector<32x256xf32>
    %c0_55 = arith.constant 0 : index
    %c0_56 = arith.constant 0 : index
    %311 = vector.load %arg9[%c0_55, %c0_56] : memref<1x256xf32, #tpu.memory_space<vmem>>, vector<1x256xf32>
    %c0_57 = arith.constant 0 : index
    %c0_58 = arith.constant 0 : index
    %312 = vector.load %arg10[%c0_57, %c0_58] : memref<32x128xf32, #tpu.memory_space<vmem>>, vector<32x128xf32>
    %c0_59 = arith.constant 0 : index
    %c0_60 = arith.constant 0 : index
    %313 = vector.load %arg11[%c0_59, %c0_60] : memref<32x128xf32, #tpu.memory_space<vmem>>, vector<32x128xf32>
    %c0_61 = arith.constant 0 : index
    %c0_62 = arith.constant 0 : index
    %314 = vector.load %arg12[%c0_61, %c0_62] : memref<32x64xf32, #tpu.memory_space<vmem>>, vector<32x64xf32>
    %c0_63 = arith.constant 0 : index
    %c0_64 = arith.constant 0 : index
    %315 = vector.load %arg13[%c0_63, %c0_64] : memref<32x64xf32, #tpu.memory_space<vmem>>, vector<32x64xf32>
    %c0_65 = arith.constant 0 : index
    %c0_66 = arith.constant 0 : index
    %316 = vector.load %arg14[%c0_65, %c0_66] : memref<1x64xf32, #tpu.memory_space<vmem>>, vector<1x64xf32>
    %cst_67 = arith.constant dense<0.000000e+00> : vector<16x256xf32>
    %317 = tpu.matmul %309, %310, %cst_67 {dimension_numbers = #tpu.dot_dimension_numbers<[1], [0], [0], [1], [0, 0, 1, 1], [], []>} : vector<16x32xf32>, vector<32x256xf32>, vector<16x256xf32> -> vector<16x256xf32>
    %318 = vector.broadcast %311 : vector<1x256xf32> to vector<16x256xf32>
    %319 = arith.addf %317, %318 : vector<16x256xf32>
    %cst_68 = arith.constant 0.000000e+00 : f32
    %320 = vector.broadcast %cst_68 : f32 to vector<2x32xf32>
    %cst_69 = arith.constant 0.000000e+00 : f32
    %321 = vector.broadcast %cst_69 : f32 to vector<2x32xf32>
    %cst_70 = arith.constant 0.000000e+00 : f32
    %322 = vector.broadcast %cst_70 : f32 to vector<2x32xf32>
    %cst_71 = arith.constant 0.000000e+00 : f32
    %323 = vector.broadcast %cst_71 : f32 to vector<2x32xf32>
    %324 = vector.extract_strided_slice %319 {offsets = [0, 0], sizes = [2, 128], strides = [1, 1]} : vector<16x256xf32> to vector<2x128xf32>
    %325 = vector.extract_strided_slice %319 {offsets = [14, 128], sizes = [2, 128], strides = [1, 1]} : vector<16x256xf32> to vector<2x128xf32>
    %cst_72 = arith.constant dense<0.000000e+00> : vector<2x128xf32>
    %326 = tpu.matmul %320, %312, %cst_72 {dimension_numbers = #tpu.dot_dimension_numbers<[1], [0], [0], [1], [0, 0, 1, 1], [], []>} : vector<2x32xf32>, vector<32x128xf32>, vector<2x128xf32> -> vector<2x128xf32>
    %327 = arith.addf %324, %326 : vector<2x128xf32>
    %328 = arith.negf %327 : vector<2x128xf32>
    %329 = math.exp %328 : vector<2x128xf32>
    %cst_73 = arith.constant 1.000000e+00 : f32
    %330 = vector.broadcast %cst_73 : f32 to vector<2x128xf32>
    %331 = arith.addf %330, %329 : vector<2x128xf32>
    %332 = arith.divf %330, %331 : vector<2x128xf32>
    %333 = vector.extract_strided_slice %332 {offsets = [0, 0], sizes = [2, 32], strides = [1, 1]} : vector<2x128xf32> to vector<2x32xf32>
    %334 = vector.extract_strided_slice %332 {offsets = [0, 32], sizes = [2, 32], strides = [1, 1]} : vector<2x128xf32> to vector<2x32xf32>
    %335 = vector.extract_strided_slice %332 {offsets = [0, 96], sizes = [2, 32], strides = [1, 1]} : vector<2x128xf32> to vector<2x32xf32>
    %336 = vector.extract_strided_slice %327 {offsets = [0, 64], sizes = [2, 32], strides = [1, 1]} : vector<2x128xf32> to vector<2x32xf32>
    %337 = math.tanh %336 : vector<2x32xf32>
    %338 = arith.mulf %334, %321 : vector<2x32xf32>
    %339 = arith.mulf %333, %337 : vector<2x32xf32>
    %340 = arith.addf %338, %339 : vector<2x32xf32>
    %341 = math.tanh %340 : vector<2x32xf32>
    %342 = arith.mulf %335, %341 : vector<2x32xf32>
    %cst_74 = arith.constant dense<0.000000e+00> : vector<2x128xf32>
    %343 = tpu.matmul %322, %313, %cst_74 {dimension_numbers = #tpu.dot_dimension_numbers<[1], [0], [0], [1], [0, 0, 1, 1], [], []>} : vector<2x32xf32>, vector<32x128xf32>, vector<2x128xf32> -> vector<2x128xf32>
    %344 = arith.addf %325, %343 : vector<2x128xf32>
    %345 = arith.negf %344 : vector<2x128xf32>
    %346 = math.exp %345 : vector<2x128xf32>
    %cst_75 = arith.constant 1.000000e+00 : f32
    %347 = vector.broadcast %cst_75 : f32 to vector<2x128xf32>
    %348 = arith.addf %347, %346 : vector<2x128xf32>
    %349 = arith.divf %347, %348 : vector<2x128xf32>
    %350 = vector.extract_strided_slice %349 {offsets = [0, 0], sizes = [2, 32], strides = [1, 1]} : vector<2x128xf32> to vector<2x32xf32>
    %351 = vector.extract_strided_slice %349 {offsets = [0, 32], sizes = [2, 32], strides = [1, 1]} : vector<2x128xf32> to vector<2x32xf32>
    %352 = vector.extract_strided_slice %349 {offsets = [0, 96], sizes = [2, 32], strides = [1, 1]} : vector<2x128xf32> to vector<2x32xf32>
    %353 = vector.extract_strided_slice %344 {offsets = [0, 64], sizes = [2, 32], strides = [1, 1]} : vector<2x128xf32> to vector<2x32xf32>
    %354 = math.tanh %353 : vector<2x32xf32>
    %355 = arith.mulf %351, %323 : vector<2x32xf32>
    %356 = arith.mulf %350, %354 : vector<2x32xf32>
    %357 = arith.addf %355, %356 : vector<2x32xf32>
    %358 = math.tanh %357 : vector<2x32xf32>
    %359 = arith.mulf %352, %358 : vector<2x32xf32>
    %360 = vector.extract_strided_slice %319 {offsets = [2, 0], sizes = [2, 128], strides = [1, 1]} : vector<16x256xf32> to vector<2x128xf32>
    %361 = vector.extract_strided_slice %319 {offsets = [12, 128], sizes = [2, 128], strides = [1, 1]} : vector<16x256xf32> to vector<2x128xf32>
    %cst_76 = arith.constant dense<0.000000e+00> : vector<2x128xf32>
    %362 = tpu.matmul %342, %312, %cst_76 {dimension_numbers = #tpu.dot_dimension_numbers<[1], [0], [0], [1], [0, 0, 1, 1], [], []>} : vector<2x32xf32>, vector<32x128xf32>, vector<2x128xf32> -> vector<2x128xf32>
    %363 = arith.addf %360, %362 : vector<2x128xf32>
    %364 = arith.negf %363 : vector<2x128xf32>
    %365 = math.exp %364 : vector<2x128xf32>
    %cst_77 = arith.constant 1.000000e+00 : f32
    %366 = vector.broadcast %cst_77 : f32 to vector<2x128xf32>
    %367 = arith.addf %366, %365 : vector<2x128xf32>
    %368 = arith.divf %366, %367 : vector<2x128xf32>
    %369 = vector.extract_strided_slice %368 {offsets = [0, 0], sizes = [2, 32], strides = [1, 1]} : vector<2x128xf32> to vector<2x32xf32>
    %370 = vector.extract_strided_slice %368 {offsets = [0, 32], sizes = [2, 32], strides = [1, 1]} : vector<2x128xf32> to vector<2x32xf32>
    %371 = vector.extract_strided_slice %368 {offsets = [0, 96], sizes = [2, 32], strides = [1, 1]} : vector<2x128xf32> to vector<2x32xf32>
    %372 = vector.extract_strided_slice %363 {offsets = [0, 64], sizes = [2, 32], strides = [1, 1]} : vector<2x128xf32> to vector<2x32xf32>
    %373 = math.tanh %372 : vector<2x32xf32>
    %374 = arith.mulf %370, %340 : vector<2x32xf32>
    %375 = arith.mulf %369, %373 : vector<2x32xf32>
    %376 = arith.addf %374, %375 : vector<2x32xf32>
    %377 = math.tanh %376 : vector<2x32xf32>
    %378 = arith.mulf %371, %377 : vector<2x32xf32>
    %cst_78 = arith.constant dense<0.000000e+00> : vector<2x128xf32>
    %379 = tpu.matmul %359, %313, %cst_78 {dimension_numbers = #tpu.dot_dimension_numbers<[1], [0], [0], [1], [0, 0, 1, 1], [], []>} : vector<2x32xf32>, vector<32x128xf32>, vector<2x128xf32> -> vector<2x128xf32>
    %380 = arith.addf %361, %379 : vector<2x128xf32>
    %381 = arith.negf %380 : vector<2x128xf32>
    %382 = math.exp %381 : vector<2x128xf32>
    %cst_79 = arith.constant 1.000000e+00 : f32
    %383 = vector.broadcast %cst_79 : f32 to vector<2x128xf32>
    %384 = arith.addf %383, %382 : vector<2x128xf32>
    %385 = arith.divf %383, %384 : vector<2x128xf32>
    %386 = vector.extract_strided_slice %385 {offsets = [0, 0], sizes = [2, 32], strides = [1, 1]} : vector<2x128xf32> to vector<2x32xf32>
    %387 = vector.extract_strided_slice %385 {offsets = [0, 32], sizes = [2, 32], strides = [1, 1]} : vector<2x128xf32> to vector<2x32xf32>
    %388 = vector.extract_strided_slice %385 {offsets = [0, 96], sizes = [2, 32], strides = [1, 1]} : vector<2x128xf32> to vector<2x32xf32>
    %389 = vector.extract_strided_slice %380 {offsets = [0, 64], sizes = [2, 32], strides = [1, 1]} : vector<2x128xf32> to vector<2x32xf32>
    %390 = math.tanh %389 : vector<2x32xf32>
    %391 = arith.mulf %387, %357 : vector<2x32xf32>
    %392 = arith.mulf %386, %390 : vector<2x32xf32>
    %393 = arith.addf %391, %392 : vector<2x32xf32>
    %394 = math.tanh %393 : vector<2x32xf32>
    %395 = arith.mulf %388, %394 : vector<2x32xf32>
    %396 = vector.extract_strided_slice %319 {offsets = [4, 0], sizes = [2, 128], strides = [1, 1]} : vector<16x256xf32> to vector<2x128xf32>
    %397 = vector.extract_strided_slice %319 {offsets = [10, 128], sizes = [2, 128], strides = [1, 1]} : vector<16x256xf32> to vector<2x128xf32>
    %cst_80 = arith.constant dense<0.000000e+00> : vector<2x128xf32>
    %398 = tpu.matmul %378, %312, %cst_80 {dimension_numbers = #tpu.dot_dimension_numbers<[1], [0], [0], [1], [0, 0, 1, 1], [], []>} : vector<2x32xf32>, vector<32x128xf32>, vector<2x128xf32> -> vector<2x128xf32>
    %399 = arith.addf %396, %398 : vector<2x128xf32>
    %400 = arith.negf %399 : vector<2x128xf32>
    %401 = math.exp %400 : vector<2x128xf32>
    %cst_81 = arith.constant 1.000000e+00 : f32
    %402 = vector.broadcast %cst_81 : f32 to vector<2x128xf32>
    %403 = arith.addf %402, %401 : vector<2x128xf32>
    %404 = arith.divf %402, %403 : vector<2x128xf32>
    %405 = vector.extract_strided_slice %404 {offsets = [0, 0], sizes = [2, 32], strides = [1, 1]} : vector<2x128xf32> to vector<2x32xf32>
    %406 = vector.extract_strided_slice %404 {offsets = [0, 32], sizes = [2, 32], strides = [1, 1]} : vector<2x128xf32> to vector<2x32xf32>
    %407 = vector.extract_strided_slice %404 {offsets = [0, 96], sizes = [2, 32], strides = [1, 1]} : vector<2x128xf32> to vector<2x32xf32>
    %408 = vector.extract_strided_slice %399 {offsets = [0, 64], sizes = [2, 32], strides = [1, 1]} : vector<2x128xf32> to vector<2x32xf32>
    %409 = math.tanh %408 : vector<2x32xf32>
    %410 = arith.mulf %406, %376 : vector<2x32xf32>
    %411 = arith.mulf %405, %409 : vector<2x32xf32>
    %412 = arith.addf %410, %411 : vector<2x32xf32>
    %413 = math.tanh %412 : vector<2x32xf32>
    %414 = arith.mulf %407, %413 : vector<2x32xf32>
    %cst_82 = arith.constant dense<0.000000e+00> : vector<2x128xf32>
    %415 = tpu.matmul %395, %313, %cst_82 {dimension_numbers = #tpu.dot_dimension_numbers<[1], [0], [0], [1], [0, 0, 1, 1], [], []>} : vector<2x32xf32>, vector<32x128xf32>, vector<2x128xf32> -> vector<2x128xf32>
    %416 = arith.addf %397, %415 : vector<2x128xf32>
    %417 = arith.negf %416 : vector<2x128xf32>
    %418 = math.exp %417 : vector<2x128xf32>
    %cst_83 = arith.constant 1.000000e+00 : f32
    %419 = vector.broadcast %cst_83 : f32 to vector<2x128xf32>
    %420 = arith.addf %419, %418 : vector<2x128xf32>
    %421 = arith.divf %419, %420 : vector<2x128xf32>
    %422 = vector.extract_strided_slice %421 {offsets = [0, 0], sizes = [2, 32], strides = [1, 1]} : vector<2x128xf32> to vector<2x32xf32>
    %423 = vector.extract_strided_slice %421 {offsets = [0, 32], sizes = [2, 32], strides = [1, 1]} : vector<2x128xf32> to vector<2x32xf32>
    %424 = vector.extract_strided_slice %421 {offsets = [0, 96], sizes = [2, 32], strides = [1, 1]} : vector<2x128xf32> to vector<2x32xf32>
    %425 = vector.extract_strided_slice %416 {offsets = [0, 64], sizes = [2, 32], strides = [1, 1]} : vector<2x128xf32> to vector<2x32xf32>
    %426 = math.tanh %425 : vector<2x32xf32>
    %427 = arith.mulf %423, %393 : vector<2x32xf32>
    %428 = arith.mulf %422, %426 : vector<2x32xf32>
    %429 = arith.addf %427, %428 : vector<2x32xf32>
    %430 = math.tanh %429 : vector<2x32xf32>
    %431 = arith.mulf %424, %430 : vector<2x32xf32>
    %432 = vector.extract_strided_slice %319 {offsets = [6, 0], sizes = [2, 128], strides = [1, 1]} : vector<16x256xf32> to vector<2x128xf32>
    %433 = vector.extract_strided_slice %319 {offsets = [8, 128], sizes = [2, 128], strides = [1, 1]} : vector<16x256xf32> to vector<2x128xf32>
    %cst_84 = arith.constant dense<0.000000e+00> : vector<2x128xf32>
    %434 = tpu.matmul %414, %312, %cst_84 {dimension_numbers = #tpu.dot_dimension_numbers<[1], [0], [0], [1], [0, 0, 1, 1], [], []>} : vector<2x32xf32>, vector<32x128xf32>, vector<2x128xf32> -> vector<2x128xf32>
    %435 = arith.addf %432, %434 : vector<2x128xf32>
    %436 = arith.negf %435 : vector<2x128xf32>
    %437 = math.exp %436 : vector<2x128xf32>
    %cst_85 = arith.constant 1.000000e+00 : f32
    %438 = vector.broadcast %cst_85 : f32 to vector<2x128xf32>
    %439 = arith.addf %438, %437 : vector<2x128xf32>
    %440 = arith.divf %438, %439 : vector<2x128xf32>
    %441 = vector.extract_strided_slice %440 {offsets = [0, 0], sizes = [2, 32], strides = [1, 1]} : vector<2x128xf32> to vector<2x32xf32>
    %442 = vector.extract_strided_slice %440 {offsets = [0, 32], sizes = [2, 32], strides = [1, 1]} : vector<2x128xf32> to vector<2x32xf32>
    %443 = vector.extract_strided_slice %440 {offsets = [0, 96], sizes = [2, 32], strides = [1, 1]} : vector<2x128xf32> to vector<2x32xf32>
    %444 = vector.extract_strided_slice %435 {offsets = [0, 64], sizes = [2, 32], strides = [1, 1]} : vector<2x128xf32> to vector<2x32xf32>
    %445 = math.tanh %444 : vector<2x32xf32>
    %446 = arith.mulf %442, %412 : vector<2x32xf32>
    %447 = arith.mulf %441, %445 : vector<2x32xf32>
    %448 = arith.addf %446, %447 : vector<2x32xf32>
    %449 = math.tanh %448 : vector<2x32xf32>
    %450 = arith.mulf %443, %449 : vector<2x32xf32>
    %cst_86 = arith.constant dense<0.000000e+00> : vector<2x128xf32>
    %451 = tpu.matmul %431, %313, %cst_86 {dimension_numbers = #tpu.dot_dimension_numbers<[1], [0], [0], [1], [0, 0, 1, 1], [], []>} : vector<2x32xf32>, vector<32x128xf32>, vector<2x128xf32> -> vector<2x128xf32>
    %452 = arith.addf %433, %451 : vector<2x128xf32>
    %453 = arith.negf %452 : vector<2x128xf32>
    %454 = math.exp %453 : vector<2x128xf32>
    %cst_87 = arith.constant 1.000000e+00 : f32
    %455 = vector.broadcast %cst_87 : f32 to vector<2x128xf32>
    %456 = arith.addf %455, %454 : vector<2x128xf32>
    %457 = arith.divf %455, %456 : vector<2x128xf32>
    %458 = vector.extract_strided_slice %457 {offsets = [0, 0], sizes = [2, 32], strides = [1, 1]} : vector<2x128xf32> to vector<2x32xf32>
    %459 = vector.extract_strided_slice %457 {offsets = [0, 32], sizes = [2, 32], strides = [1, 1]} : vector<2x128xf32> to vector<2x32xf32>
    %460 = vector.extract_strided_slice %457 {offsets = [0, 96], sizes = [2, 32], strides = [1, 1]} : vector<2x128xf32> to vector<2x32xf32>
    %461 = vector.extract_strided_slice %452 {offsets = [0, 64], sizes = [2, 32], strides = [1, 1]} : vector<2x128xf32> to vector<2x32xf32>
    %462 = math.tanh %461 : vector<2x32xf32>
    %463 = arith.mulf %459, %429 : vector<2x32xf32>
    %464 = arith.mulf %458, %462 : vector<2x32xf32>
    %465 = arith.addf %463, %464 : vector<2x32xf32>
    %466 = math.tanh %465 : vector<2x32xf32>
    %467 = arith.mulf %460, %466 : vector<2x32xf32>
    %468 = vector.extract_strided_slice %319 {offsets = [8, 0], sizes = [2, 128], strides = [1, 1]} : vector<16x256xf32> to vector<2x128xf32>
    %469 = vector.extract_strided_slice %319 {offsets = [6, 128], sizes = [2, 128], strides = [1, 1]} : vector<16x256xf32> to vector<2x128xf32>
    %cst_88 = arith.constant dense<0.000000e+00> : vector<2x128xf32>
    %470 = tpu.matmul %450, %312, %cst_88 {dimension_numbers = #tpu.dot_dimension_numbers<[1], [0], [0], [1], [0, 0, 1, 1], [], []>} : vector<2x32xf32>, vector<32x128xf32>, vector<2x128xf32> -> vector<2x128xf32>
    %471 = arith.addf %468, %470 : vector<2x128xf32>
    %472 = arith.negf %471 : vector<2x128xf32>
    %473 = math.exp %472 : vector<2x128xf32>
    %cst_89 = arith.constant 1.000000e+00 : f32
    %474 = vector.broadcast %cst_89 : f32 to vector<2x128xf32>
    %475 = arith.addf %474, %473 : vector<2x128xf32>
    %476 = arith.divf %474, %475 : vector<2x128xf32>
    %477 = vector.extract_strided_slice %476 {offsets = [0, 0], sizes = [2, 32], strides = [1, 1]} : vector<2x128xf32> to vector<2x32xf32>
    %478 = vector.extract_strided_slice %476 {offsets = [0, 32], sizes = [2, 32], strides = [1, 1]} : vector<2x128xf32> to vector<2x32xf32>
    %479 = vector.extract_strided_slice %476 {offsets = [0, 96], sizes = [2, 32], strides = [1, 1]} : vector<2x128xf32> to vector<2x32xf32>
    %480 = vector.extract_strided_slice %471 {offsets = [0, 64], sizes = [2, 32], strides = [1, 1]} : vector<2x128xf32> to vector<2x32xf32>
    %481 = math.tanh %480 : vector<2x32xf32>
    %482 = arith.mulf %478, %448 : vector<2x32xf32>
    %483 = arith.mulf %477, %481 : vector<2x32xf32>
    %484 = arith.addf %482, %483 : vector<2x32xf32>
    %485 = math.tanh %484 : vector<2x32xf32>
    %486 = arith.mulf %479, %485 : vector<2x32xf32>
    %cst_90 = arith.constant dense<0.000000e+00> : vector<2x128xf32>
    %487 = tpu.matmul %467, %313, %cst_90 {dimension_numbers = #tpu.dot_dimension_numbers<[1], [0], [0], [1], [0, 0, 1, 1], [], []>} : vector<2x32xf32>, vector<32x128xf32>, vector<2x128xf32> -> vector<2x128xf32>
    %488 = arith.addf %469, %487 : vector<2x128xf32>
    %489 = arith.negf %488 : vector<2x128xf32>
    %490 = math.exp %489 : vector<2x128xf32>
    %cst_91 = arith.constant 1.000000e+00 : f32
    %491 = vector.broadcast %cst_91 : f32 to vector<2x128xf32>
    %492 = arith.addf %491, %490 : vector<2x128xf32>
    %493 = arith.divf %491, %492 : vector<2x128xf32>
    %494 = vector.extract_strided_slice %493 {offsets = [0, 0], sizes = [2, 32], strides = [1, 1]} : vector<2x128xf32> to vector<2x32xf32>
    %495 = vector.extract_strided_slice %493 {offsets = [0, 32], sizes = [2, 32], strides = [1, 1]} : vector<2x128xf32> to vector<2x32xf32>
    %496 = vector.extract_strided_slice %493 {offsets = [0, 96], sizes = [2, 32], strides = [1, 1]} : vector<2x128xf32> to vector<2x32xf32>
    %497 = vector.extract_strided_slice %488 {offsets = [0, 64], sizes = [2, 32], strides = [1, 1]} : vector<2x128xf32> to vector<2x32xf32>
    %498 = math.tanh %497 : vector<2x32xf32>
    %499 = arith.mulf %495, %465 : vector<2x32xf32>
    %500 = arith.mulf %494, %498 : vector<2x32xf32>
    %501 = arith.addf %499, %500 : vector<2x32xf32>
    %502 = math.tanh %501 : vector<2x32xf32>
    %503 = arith.mulf %496, %502 : vector<2x32xf32>
    %504 = vector.extract_strided_slice %319 {offsets = [10, 0], sizes = [2, 128], strides = [1, 1]} : vector<16x256xf32> to vector<2x128xf32>
    %505 = vector.extract_strided_slice %319 {offsets = [4, 128], sizes = [2, 128], strides = [1, 1]} : vector<16x256xf32> to vector<2x128xf32>
    %cst_92 = arith.constant dense<0.000000e+00> : vector<2x128xf32>
    %506 = tpu.matmul %486, %312, %cst_92 {dimension_numbers = #tpu.dot_dimension_numbers<[1], [0], [0], [1], [0, 0, 1, 1], [], []>} : vector<2x32xf32>, vector<32x128xf32>, vector<2x128xf32> -> vector<2x128xf32>
    %507 = arith.addf %504, %506 : vector<2x128xf32>
    %508 = arith.negf %507 : vector<2x128xf32>
    %509 = math.exp %508 : vector<2x128xf32>
    %cst_93 = arith.constant 1.000000e+00 : f32
    %510 = vector.broadcast %cst_93 : f32 to vector<2x128xf32>
    %511 = arith.addf %510, %509 : vector<2x128xf32>
    %512 = arith.divf %510, %511 : vector<2x128xf32>
    %513 = vector.extract_strided_slice %512 {offsets = [0, 0], sizes = [2, 32], strides = [1, 1]} : vector<2x128xf32> to vector<2x32xf32>
    %514 = vector.extract_strided_slice %512 {offsets = [0, 32], sizes = [2, 32], strides = [1, 1]} : vector<2x128xf32> to vector<2x32xf32>
    %515 = vector.extract_strided_slice %512 {offsets = [0, 96], sizes = [2, 32], strides = [1, 1]} : vector<2x128xf32> to vector<2x32xf32>
    %516 = vector.extract_strided_slice %507 {offsets = [0, 64], sizes = [2, 32], strides = [1, 1]} : vector<2x128xf32> to vector<2x32xf32>
    %517 = math.tanh %516 : vector<2x32xf32>
    %518 = arith.mulf %514, %484 : vector<2x32xf32>
    %519 = arith.mulf %513, %517 : vector<2x32xf32>
    %520 = arith.addf %518, %519 : vector<2x32xf32>
    %521 = math.tanh %520 : vector<2x32xf32>
    %522 = arith.mulf %515, %521 : vector<2x32xf32>
    %cst_94 = arith.constant dense<0.000000e+00> : vector<2x128xf32>
    %523 = tpu.matmul %503, %313, %cst_94 {dimension_numbers = #tpu.dot_dimension_numbers<[1], [0], [0], [1], [0, 0, 1, 1], [], []>} : vector<2x32xf32>, vector<32x128xf32>, vector<2x128xf32> -> vector<2x128xf32>
    %524 = arith.addf %505, %523 : vector<2x128xf32>
    %525 = arith.negf %524 : vector<2x128xf32>
    %526 = math.exp %525 : vector<2x128xf32>
    %cst_95 = arith.constant 1.000000e+00 : f32
    %527 = vector.broadcast %cst_95 : f32 to vector<2x128xf32>
    %528 = arith.addf %527, %526 : vector<2x128xf32>
    %529 = arith.divf %527, %528 : vector<2x128xf32>
    %530 = vector.extract_strided_slice %529 {offsets = [0, 0], sizes = [2, 32], strides = [1, 1]} : vector<2x128xf32> to vector<2x32xf32>
    %531 = vector.extract_strided_slice %529 {offsets = [0, 32], sizes = [2, 32], strides = [1, 1]} : vector<2x128xf32> to vector<2x32xf32>
    %532 = vector.extract_strided_slice %529 {offsets = [0, 96], sizes = [2, 32], strides = [1, 1]} : vector<2x128xf32> to vector<2x32xf32>
    %533 = vector.extract_strided_slice %524 {offsets = [0, 64], sizes = [2, 32], strides = [1, 1]} : vector<2x128xf32> to vector<2x32xf32>
    %534 = math.tanh %533 : vector<2x32xf32>
    %535 = arith.mulf %531, %501 : vector<2x32xf32>
    %536 = arith.mulf %530, %534 : vector<2x32xf32>
    %537 = arith.addf %535, %536 : vector<2x32xf32>
    %538 = math.tanh %537 : vector<2x32xf32>
    %539 = arith.mulf %532, %538 : vector<2x32xf32>
    %540 = vector.extract_strided_slice %319 {offsets = [12, 0], sizes = [2, 128], strides = [1, 1]} : vector<16x256xf32> to vector<2x128xf32>
    %541 = vector.extract_strided_slice %319 {offsets = [2, 128], sizes = [2, 128], strides = [1, 1]} : vector<16x256xf32> to vector<2x128xf32>
    %cst_96 = arith.constant dense<0.000000e+00> : vector<2x128xf32>
    %542 = tpu.matmul %522, %312, %cst_96 {dimension_numbers = #tpu.dot_dimension_numbers<[1], [0], [0], [1], [0, 0, 1, 1], [], []>} : vector<2x32xf32>, vector<32x128xf32>, vector<2x128xf32> -> vector<2x128xf32>
    %543 = arith.addf %540, %542 : vector<2x128xf32>
    %544 = arith.negf %543 : vector<2x128xf32>
    %545 = math.exp %544 : vector<2x128xf32>
    %cst_97 = arith.constant 1.000000e+00 : f32
    %546 = vector.broadcast %cst_97 : f32 to vector<2x128xf32>
    %547 = arith.addf %546, %545 : vector<2x128xf32>
    %548 = arith.divf %546, %547 : vector<2x128xf32>
    %549 = vector.extract_strided_slice %548 {offsets = [0, 0], sizes = [2, 32], strides = [1, 1]} : vector<2x128xf32> to vector<2x32xf32>
    %550 = vector.extract_strided_slice %548 {offsets = [0, 32], sizes = [2, 32], strides = [1, 1]} : vector<2x128xf32> to vector<2x32xf32>
    %551 = vector.extract_strided_slice %548 {offsets = [0, 96], sizes = [2, 32], strides = [1, 1]} : vector<2x128xf32> to vector<2x32xf32>
    %552 = vector.extract_strided_slice %543 {offsets = [0, 64], sizes = [2, 32], strides = [1, 1]} : vector<2x128xf32> to vector<2x32xf32>
    %553 = math.tanh %552 : vector<2x32xf32>
    %554 = arith.mulf %550, %520 : vector<2x32xf32>
    %555 = arith.mulf %549, %553 : vector<2x32xf32>
    %556 = arith.addf %554, %555 : vector<2x32xf32>
    %557 = math.tanh %556 : vector<2x32xf32>
    %558 = arith.mulf %551, %557 : vector<2x32xf32>
    %cst_98 = arith.constant dense<0.000000e+00> : vector<2x128xf32>
    %559 = tpu.matmul %539, %313, %cst_98 {dimension_numbers = #tpu.dot_dimension_numbers<[1], [0], [0], [1], [0, 0, 1, 1], [], []>} : vector<2x32xf32>, vector<32x128xf32>, vector<2x128xf32> -> vector<2x128xf32>
    %560 = arith.addf %541, %559 : vector<2x128xf32>
    %561 = arith.negf %560 : vector<2x128xf32>
    %562 = math.exp %561 : vector<2x128xf32>
    %cst_99 = arith.constant 1.000000e+00 : f32
    %563 = vector.broadcast %cst_99 : f32 to vector<2x128xf32>
    %564 = arith.addf %563, %562 : vector<2x128xf32>
    %565 = arith.divf %563, %564 : vector<2x128xf32>
    %566 = vector.extract_strided_slice %565 {offsets = [0, 0], sizes = [2, 32], strides = [1, 1]} : vector<2x128xf32> to vector<2x32xf32>
    %567 = vector.extract_strided_slice %565 {offsets = [0, 32], sizes = [2, 32], strides = [1, 1]} : vector<2x128xf32> to vector<2x32xf32>
    %568 = vector.extract_strided_slice %565 {offsets = [0, 96], sizes = [2, 32], strides = [1, 1]} : vector<2x128xf32> to vector<2x32xf32>
    %569 = vector.extract_strided_slice %560 {offsets = [0, 64], sizes = [2, 32], strides = [1, 1]} : vector<2x128xf32> to vector<2x32xf32>
    %570 = math.tanh %569 : vector<2x32xf32>
    %571 = arith.mulf %567, %537 : vector<2x32xf32>
    %572 = arith.mulf %566, %570 : vector<2x32xf32>
    %573 = arith.addf %571, %572 : vector<2x32xf32>
    %574 = math.tanh %573 : vector<2x32xf32>
    %575 = arith.mulf %568, %574 : vector<2x32xf32>
    %576 = vector.extract_strided_slice %319 {offsets = [14, 0], sizes = [2, 128], strides = [1, 1]} : vector<16x256xf32> to vector<2x128xf32>
    %577 = vector.extract_strided_slice %319 {offsets = [0, 128], sizes = [2, 128], strides = [1, 1]} : vector<16x256xf32> to vector<2x128xf32>
    %cst_100 = arith.constant dense<0.000000e+00> : vector<2x128xf32>
    %578 = tpu.matmul %558, %312, %cst_100 {dimension_numbers = #tpu.dot_dimension_numbers<[1], [0], [0], [1], [0, 0, 1, 1], [], []>} : vector<2x32xf32>, vector<32x128xf32>, vector<2x128xf32> -> vector<2x128xf32>
    %579 = arith.addf %576, %578 : vector<2x128xf32>
    %580 = arith.negf %579 : vector<2x128xf32>
    %581 = math.exp %580 : vector<2x128xf32>
    %cst_101 = arith.constant 1.000000e+00 : f32
    %582 = vector.broadcast %cst_101 : f32 to vector<2x128xf32>
    %583 = arith.addf %582, %581 : vector<2x128xf32>
    %584 = arith.divf %582, %583 : vector<2x128xf32>
    %585 = vector.extract_strided_slice %584 {offsets = [0, 0], sizes = [2, 32], strides = [1, 1]} : vector<2x128xf32> to vector<2x32xf32>
    %586 = vector.extract_strided_slice %584 {offsets = [0, 32], sizes = [2, 32], strides = [1, 1]} : vector<2x128xf32> to vector<2x32xf32>
    %587 = vector.extract_strided_slice %584 {offsets = [0, 96], sizes = [2, 32], strides = [1, 1]} : vector<2x128xf32> to vector<2x32xf32>
    %588 = vector.extract_strided_slice %579 {offsets = [0, 64], sizes = [2, 32], strides = [1, 1]} : vector<2x128xf32> to vector<2x32xf32>
    %589 = math.tanh %588 : vector<2x32xf32>
    %590 = arith.mulf %586, %556 : vector<2x32xf32>
    %591 = arith.mulf %585, %589 : vector<2x32xf32>
    %592 = arith.addf %590, %591 : vector<2x32xf32>
    %593 = math.tanh %592 : vector<2x32xf32>
    %594 = arith.mulf %587, %593 : vector<2x32xf32>
    %cst_102 = arith.constant dense<0.000000e+00> : vector<2x128xf32>
    %595 = tpu.matmul %575, %313, %cst_102 {dimension_numbers = #tpu.dot_dimension_numbers<[1], [0], [0], [1], [0, 0, 1, 1], [], []>} : vector<2x32xf32>, vector<32x128xf32>, vector<2x128xf32> -> vector<2x128xf32>
    %596 = arith.addf %577, %595 : vector<2x128xf32>
    %597 = arith.negf %596 : vector<2x128xf32>
    %598 = math.exp %597 : vector<2x128xf32>
    %cst_103 = arith.constant 1.000000e+00 : f32
    %599 = vector.broadcast %cst_103 : f32 to vector<2x128xf32>
    %600 = arith.addf %599, %598 : vector<2x128xf32>
    %601 = arith.divf %599, %600 : vector<2x128xf32>
    %602 = vector.extract_strided_slice %601 {offsets = [0, 0], sizes = [2, 32], strides = [1, 1]} : vector<2x128xf32> to vector<2x32xf32>
    %603 = vector.extract_strided_slice %601 {offsets = [0, 32], sizes = [2, 32], strides = [1, 1]} : vector<2x128xf32> to vector<2x32xf32>
    %604 = vector.extract_strided_slice %601 {offsets = [0, 96], sizes = [2, 32], strides = [1, 1]} : vector<2x128xf32> to vector<2x32xf32>
    %605 = vector.extract_strided_slice %596 {offsets = [0, 64], sizes = [2, 32], strides = [1, 1]} : vector<2x128xf32> to vector<2x32xf32>
    %606 = math.tanh %605 : vector<2x32xf32>
    %607 = arith.mulf %603, %573 : vector<2x32xf32>
    %608 = arith.mulf %602, %606 : vector<2x32xf32>
    %609 = arith.addf %607, %608 : vector<2x32xf32>
    %610 = math.tanh %609 : vector<2x32xf32>
    %611 = arith.mulf %604, %610 : vector<2x32xf32>
    %612 = tpu.concatenate %342, %378, %414, %450, %486, %522, %558, %594 in 0 : vector<2x32xf32>, vector<2x32xf32>, vector<2x32xf32>, vector<2x32xf32>, vector<2x32xf32>, vector<2x32xf32>, vector<2x32xf32>, vector<2x32xf32> -> vector<16x32xf32>
    %613 = tpu.concatenate %611, %575, %539, %503, %467, %431, %395, %359 in 0 : vector<2x32xf32>, vector<2x32xf32>, vector<2x32xf32>, vector<2x32xf32>, vector<2x32xf32>, vector<2x32xf32>, vector<2x32xf32>, vector<2x32xf32> -> vector<16x32xf32>
    %cst_104 = arith.constant dense<0.000000e+00> : vector<16x64xf32>
    %614 = tpu.matmul %612, %314, %cst_104 {dimension_numbers = #tpu.dot_dimension_numbers<[1], [0], [0], [1], [0, 0, 1, 1], [], []>} : vector<16x32xf32>, vector<32x64xf32>, vector<16x64xf32> -> vector<16x64xf32>
    %cst_105 = arith.constant dense<0.000000e+00> : vector<16x64xf32>
    %615 = tpu.matmul %613, %315, %cst_105 {dimension_numbers = #tpu.dot_dimension_numbers<[1], [0], [0], [1], [0, 0, 1, 1], [], []>} : vector<16x32xf32>, vector<32x64xf32>, vector<16x64xf32> -> vector<16x64xf32>
    %616 = arith.addf %614, %615 : vector<16x64xf32>
    %617 = vector.broadcast %316 : vector<1x64xf32> to vector<16x64xf32>
    %618 = arith.addf %616, %617 : vector<16x64xf32>
    %c0_106 = arith.constant 0 : index
    %c0_107 = arith.constant 0 : index
    %619 = vector.load %arg15[%c0_106, %c0_107] : memref<16x64xf32, #tpu.memory_space<vmem>>, vector<16x64xf32>
    tpu.vector_store %arg15[%c0_106, %c0_107], %618 {strides = array<i32>} : memref<16x64xf32, #tpu.memory_space<vmem>>, vector<16x64xf32>,
    return
  }
}

</mosaic_0001>

<llo_original>
// kernel: crnn_head_forward.1
$region0: #{crnn_head_forward.1}
  #allocation0 [shape = 'u32[]', space=smem, size = 0x4, offset = 0x4, fixed_abs, tag = 'smem constant byte address 0x4 - core index']
  #allocation1 [shape = 'u32[72,128]{1,0:T(1,128)}', space=vmem, size = 0x9000, scoped, tag = 'internal scratch']
  %s0 = inlined_call_operand.vmem [shape: f32[16,32], index: 0, kind: input, shape index: {}]
  %s1 = inlined_call_operand.vmem [shape: f32[32,256], index: 1, kind: input, shape index: {}]
  %s2 = inlined_call_operand.vmem [shape: f32[1,256], index: 2, kind: input, shape index: {}]
  %s3 = inlined_call_operand.vmem [shape: f32[32,128], index: 3, kind: input, shape index: {}]
  %s4 = inlined_call_operand.vmem [shape: f32[32,128], index: 4, kind: input, shape index: {}]
  %s5 = inlined_call_operand.vmem [shape: f32[32,32], index: 5, kind: input, shape index: {}]
  %s6 = inlined_call_operand.vmem [shape: f32[32,32], index: 6, kind: input, shape index: {}]
  %s7 = inlined_call_operand.vmem [shape: f32[1,32], index: 7, kind: input, shape index: {}]
  %s8 = inlined_call_operand.vmem [shape: f32[32,256], index: 8, kind: input, shape index: {}]
  %s9 = inlined_call_operand.vmem [shape: f32[1,256], index: 9, kind: input, shape index: {}]
  %s10 = inlined_call_operand.vmem [shape: f32[32,128], index: 10, kind: input, shape index: {}]
  %s11 = inlined_call_operand.vmem [shape: f32[32,128], index: 11, kind: input, shape index: {}]
  %s12 = inlined_call_operand.vmem [shape: f32[32,64], index: 12, kind: input, shape index: {}]
  %s13 = inlined_call_operand.vmem [shape: f32[32,64], index: 13, kind: input, shape index: {}]
  %s14 = inlined_call_operand.vmem [shape: f32[1,64], index: 14, kind: input, shape index: {}]
  %s15 = inlined_call_operand.hbm [shape: f32[16,64], index: 15, kind: output, shape index: {}]
  %s16 = sld [smem:[#allocation0]]
  $region70: #{crnn_head_forward.1} parent=0
    _
  %s18 = ssub.s32 1, %s16
  %s19 = scalar_select 0, %s18, %s16
  $region1: #{crnn_head_forward.1} parent=0
    #allocation2 [shape = 'u8[8192]{0}', space=vmem, size = 0x2000, scoped, tag = 'output window, operand 0, single buffered']
    #allocation3 [shape = 's32[1]{0}', space=sflag, size = 0x4, scoped, tag = 'scoped memory for crnn_head_forward.1']
    %20 = vsyncpa [#allocation3], 0
    // Predicated region
    $region2: #{crnn_head_forward.1} parent=1 // pred_check
      _
    $region3: #{crnn_head_forward.1} parent=1 // pred_check_branch
      %22 = sbr.rel (0) target = $region5
    $region4: #{crnn_head_forward.1} parent=1 // pred_region
      _
    $region5: #{crnn_head_forward.1} parent=1 // pred_fallthru
      _
    // Predicated region
    $region6: #{crnn_head_forward.1} parent=1 // pred_check
      _
    $region7: #{crnn_head_forward.1} parent=1 // pred_check_branch
      %24 = sbr.rel (0) target = $region9
    $region8: #{crnn_head_forward.1} parent=1 // pred_region
      _
    $region9: #{crnn_head_forward.1} parent=1 // pred_fallthru
      _
    // Predicated region
    $region10: #{crnn_head_forward.1} parent=1 // pred_check
      _
    $region11: #{crnn_head_forward.1} parent=1 // pred_check_branch
      %26 = sbr.rel (0) target = $region13
    $region12: #{crnn_head_forward.1} parent=1 // pred_region
      _
    $region13: #{crnn_head_forward.1} parent=1 // pred_fallthru
      _
    // Predicated region
    $region14: #{crnn_head_forward.1} parent=1 // pred_check
      _
    $region15: #{crnn_head_forward.1} parent=1 // pred_check_branch
      %28 = sbr.rel (0) target = $region17
    $region16: #{crnn_head_forward.1} parent=1 // pred_region
      _
    $region17: #{crnn_head_forward.1} parent=1 // pred_fallthru
      _
    // Predicated region
    $region18: #{crnn_head_forward.1} parent=1 // pred_check
      _
    $region19: #{crnn_head_forward.1} parent=1 // pred_check_branch
      %30 = sbr.rel (0) target = $region21
    $region20: #{crnn_head_forward.1} parent=1 // pred_region
      _
    $region21: #{crnn_head_forward.1} parent=1 // pred_fallthru
      _
    // Predicated region
    $region22: #{crnn_head_forward.1} parent=1 // pred_check
      _
    $region23: #{crnn_head_forward.1} parent=1 // pred_check_branch
      %32 = sbr.rel (0) target = $region25
    $region24: #{crnn_head_forward.1} parent=1 // pred_region
      _
    $region25: #{crnn_head_forward.1} parent=1 // pred_fallthru
      _
    // Predicated region
    $region26: #{crnn_head_forward.1} parent=1 // pred_check
      _
    $region27: #{crnn_head_forward.1} parent=1 // pred_check_branch
      %34 = sbr.rel (0) target = $region29
    $region28: #{crnn_head_forward.1} parent=1 // pred_region
      _
    $region29: #{crnn_head_forward.1} parent=1 // pred_fallthru
      _
    // Predicated region
    $region30: #{crnn_head_forward.1} parent=1 // pred_check
      _
    $region31: #{crnn_head_forward.1} parent=1 // pred_check_branch
      %36 = sbr.rel (0) target = $region33
    $region32: #{crnn_head_forward.1} parent=1 // pred_region
      _
    $region33: #{crnn_head_forward.1} parent=1 // pred_fallthru
      _
    // Predicated region
    $region34: #{crnn_head_forward.1} parent=1 // pred_check
      _
    $region35: #{crnn_head_forward.1} parent=1 // pred_check_branch
      %38 = sbr.rel (0) target = $region37
    $region36: #{crnn_head_forward.1} parent=1 // pred_region
      _
    $region37: #{crnn_head_forward.1} parent=1 // pred_fallthru
      _
    // Predicated region
    $region38: #{crnn_head_forward.1} parent=1 // pred_check
      _
    $region39: #{crnn_head_forward.1} parent=1 // pred_check_branch
      %40 = sbr.rel (0) target = $region41
    $region40: #{crnn_head_forward.1} parent=1 // pred_region
      _
    $region41: #{crnn_head_forward.1} parent=1 // pred_fallthru
      _
    // Predicated region
    $region42: #{crnn_head_forward.1} parent=1 // pred_check
      _
    $region43: #{crnn_head_forward.1} parent=1 // pred_check_branch
      %42 = sbr.rel (0) target = $region45
    $region44: #{crnn_head_forward.1} parent=1 // pred_region
      _
    $region45: #{crnn_head_forward.1} parent=1 // pred_fallthru
      _
    // Predicated region
    $region46: #{crnn_head_forward.1} parent=1 // pred_check
      _
    $region47: #{crnn_head_forward.1} parent=1 // pred_check_branch
      %44 = sbr.rel (0) target = $region49
    $region48: #{crnn_head_forward.1} parent=1 // pred_region
      _
    $region49: #{crnn_head_forward.1} parent=1 // pred_fallthru
      _
    // Predicated region
    $region50: #{crnn_head_forward.1} parent=1 // pred_check
      _
    $region51: #{crnn_head_forward.1} parent=1 // pred_check_branch
      %46 = sbr.rel (0) target = $region53
    $region52: #{crnn_head_forward.1} parent=1 // pred_region
      _
    $region53: #{crnn_head_forward.1} parent=1 // pred_fallthru
      _
    // Predicated region
    $region54: #{crnn_head_forward.1} parent=1 // pred_check
      _
    $region55: #{crnn_head_forward.1} parent=1 // pred_check_branch
      %48 = sbr.rel (0) target = $region57
    $region56: #{crnn_head_forward.1} parent=1 // pred_region
      _
    $region57: #{crnn_head_forward.1} parent=1 // pred_fallthru
      _
    // Predicated region
    $region58: #{crnn_head_forward.1} parent=1 // pred_check
      _
    $region59: #{crnn_head_forward.1} parent=1 // pred_check_branch
      %50 = sbr.rel (0) target = $region61
    $region60: #{crnn_head_forward.1} parent=1 // pred_region
      _
    $region61: #{crnn_head_forward.1} parent=1 // pred_fallthru
      _
    %v51 = vld [vmem:[%s0] sm:$0xff]
    %v52 = vld [vmem:[%s0 + $0x8] sm:$0xff]
    %v53 = vld [vmem:[%s1] sm:$0xff]
    %v54 = vld [vmem:[%s1 + $0x8] sm:$0xff]
    %v55 = vld [vmem:[%s1 + $0x10] sm:$0xff]
    %v56 = vld [vmem:[%s1 + $0x18] sm:$0xff]
    %v57 = vld [vmem:[%s1 + $0x20] sm:$0xff]
    %v58 = vld [vmem:[%s1 + $0x28] sm:$0xff]
    %v59 = vld [vmem:[%s1 + $0x30] sm:$0xff]
    %v60 = vld [vmem:[%s1 + $0x38] sm:$0xff]
    %v61 = vld [vmem:[%s2] sm:$0x3]
    %v62 = vld [vmem:[%s3] sm:$0xff]
    %v63 = vld [vmem:[%s3 + $0x8] sm:$0xff]
    %v64 = vld [vmem:[%s3 + $0x10] sm:$0xff]
    %v65 = vld [vmem:[%s3 + $0x18] sm:$0xff]
    %v66 = vld [vmem:[%s4] sm:$0xff]
    %v67 = vld [vmem:[%s4 + $0x8] sm:$0xff]
    %v68 = vld [vmem:[%s4 + $0x10] sm:$0xff]
    %v69 = vld [vmem:[%s4 + $0x18] sm:$0xff]
    %v70 = vld [vmem:[%s5] sm:$0xff]
    %v71 = vld [vmem:[%s5 + $0x8] sm:$0xff]
    %v72 = vld [vmem:[%s5 + $0x10] sm:$0xff]
    %v73 = vld [vmem:[%s5 + $0x18] sm:$0xff]
    %v74 = vld [vmem:[%s6] sm:$0xff]
    %v75 = vld [vmem:[%s6 + $0x8] sm:$0xff]
    %v76 = vld [vmem:[%s6 + $0x10] sm:$0xff]
    %v77 = vld [vmem:[%s6 + $0x18] sm:$0xff]
    %v78 = vld [vmem:[%s7] sm:$0x1]
    %v80 = vperm.slane %v61, 0
    %v81 = vperm.slane %v61, 1
    %vm84 = vcmask 261120
    %v86 = vsel %vm84, %v51, 0
    %v89 = vsel %vm84, %v52, 0
    %91 = vmatpush.msra.mxu0 0.0
    %92 = vmatpush.msra.mxu0 0.0
    %93 = vmatpush.msra.mxu0 0.0
    %94 = vmatpush.msra.mxu0 0.0
    %95 = vmatpush.msra.mxu0 0.0
    %96 = vmatpush.msra.mxu0 0.0
    %97 = vmatpush.msra.mxu0 0.0
    %98 = vmatpush.msra.mxu0 0.0
    %99 = vmatpush.msra.mxu0 0.0
    %100 = vmatpush.msra.mxu0 0.0
    %101 = vmatpush.msra.mxu0 0.0
    %102 = vmatpush.msra.mxu0 0.0
    %103 = vmatpush.msra.mxu0 %v59
    %104 = vmatpush.msra.mxu0 %v57
    %105 = vmatpush.msra.mxu0 %v55
    %106 = vmatpush.msra.mxu0 %v53
    %107 = vmatmul.f32.gmra.mxu0 %v86
    %v108 = vpop.f32.mrf.mxu0
    %v109 = vadd.f32 %v80, %v108
    %110 = vmatmul.f32.gmra.mxu0 %v89
    %v111 = vpop.f32.mrf.mxu0
    %v112 = vadd.f32 %v80, %v111
    %113 = vdwg.mxu0
    %114 = vmatpush.msra.mxu0 0.0
    %115 = vmatpush.msra.mxu0 0.0
    %116 = vmatpush.msra.mxu0 0.0
    %117 = vmatpush.msra.mxu0 0.0
    %118 = vmatpush.msra.mxu0 0.0
    %119 = vmatpush.msra.mxu0 0.0
    %120 = vmatpush.msra.mxu0 0.0
    %121 = vmatpush.msra.mxu0 0.0
    %122 = vmatpush.msra.mxu0 0.0
    %123 = vmatpush.msra.mxu0 0.0
    %124 = vmatpush.msra.mxu0 0.0
    %125 = vmatpush.msra.mxu0 0.0
    %126 = vmatpush.msra.mxu0 %v60
    %127 = vmatpush.msra.mxu0 %v58
    %128 = vmatpush.msra.mxu0 %v56
    %129 = vmatpush.msra.mxu0 %v54
    %130 = vmatmul.f32.gmra.mxu0 %v86
    %v131 = vpop.f32.mrf.mxu0
    %v132 = vadd.f32 %v81, %v131
    %133 = vmatmul.f32.gmra.mxu0 %v89
    %v134 = vpop.f32.mrf.mxu0
    %v135 = vadd.f32 %v81, %v134
    %136 = vdwg.mxu0
    %v138 = vsel %vm84, 0.0, 0
    %140 = vmatpush.msra.mxu0 0.0
    %141 = vmatpush.msra.mxu0 0.0
    %142 = vmatpush.msra.mxu0 0.0
    %143 = vmatpush.msra.mxu0 0.0
    %144 = vmatpush.msra.mxu0 0.0
    %145 = vmatpush.msra.mxu0 0.0
    %146 = vmatpush.msra.mxu0 0.0
    %147 = vmatpush.msra.mxu0 0.0
    %148 = vmatpush.msra.mxu0 0.0
    %149 = vmatpush.msra.mxu0 0.0
    %150 = vmatpush.msra.mxu0 0.0
    %151 = vmatpush.msra.mxu0 0.0
    %152 = vmatpush.msra.mxu0 %v65
    %153 = vmatpush.msra.mxu0 %v64
    %154 = vmatpush.msra.mxu0 %v63
    %155 = vmatpush.msra.mxu0 %v62
    %156 = vmatmul.f32.gmra.mxu0 %v138
    %v157 = vpop.f32.mrf.mxu0
    %v158 = vadd.f32 0.0, %v157
    %159 = vdwg.mxu0
    %v160 = vadd.f32 %v109, %v158
    %v161 = vxor.u32 %v160, 2147483648
    %v162 = vmul.f32 %v161, 1.442695
    %v163 = vpow.pop %v162
    %v164 = vadd.f32 %v163, 1.0
    %v165 = vrcp.pop %v164
    %v166 = vmul.f32 %v164, %v165
    %v167 = vsub.f32 1.0, %v166
    %v168 = vmul.f32 %v165, %v167
    %v169 = vadd.f32 %v165, %v168
    %vm170 = vweird.f32 %v164
    %vm171 = vweird.f32 %v165
    %vm172 = vmor %vm170, %vm171
    %v173 = vsel %vm172, %v165, %v169
    %v174 = vand.u32 2147483647, %v164
    %vm175 = vcmp.eq.f32.partialorder %v174, 8.507059e+37
    %v176 = vand.u32 %v164, 2147483648
    %v177 = vor.u32 1.1754944e-38, %v176
    %v178 = vsel %vm175, %v177, %v173
    %v179 = vmul.f32 1.0, %v178
    %v180 = vtanh.pop %v160
    %v181 = vmul.f32 %v179, 0.0
    %183 = vrot.lane.b32.xlu0 %v180, 64
    %v184 = vpop.permute.xlu0 %183
    %v186 = vmul.f32 %v179, %v184
    %188 = vrot.lane.b32.xlu0 %v186, 32
    %v189 = vpop.permute.xlu0 %188
    %v191 = vadd.f32 %v181, %v189
    %v192 = vtanh.pop %v191
    %194 = vrot.lane.b32.xlu0 %v192, 64
    %v195 = vpop.permute.xlu0 %194
    %v197 = vmul.f32 %v179, %v195
    %198 = vmatpush.msra.mxu0 0.0
    %199 = vmatpush.msra.mxu0 0.0
    %200 = vmatpush.msra.mxu0 0.0
    %201 = vmatpush.msra.mxu0 0.0
    %202 = vmatpush.msra.mxu0 0.0
    %203 = vmatpush.msra.mxu0 0.0
    %204 = vmatpush.msra.mxu0 0.0
    %205 = vmatpush.msra.mxu0 0.0
    %206 = vmatpush.msra.mxu0 0.0
    %207 = vmatpush.msra.mxu0 0.0
    %208 = vmatpush.msra.mxu0 0.0
    %209 = vmatpush.msra.mxu0 0.0
    %210 = vmatpush.msra.mxu0 %v69
    %211 = vmatpush.msra.mxu0 %v68
    %212 = vmatpush.msra.mxu0 %v67
    %213 = vmatpush.msra.mxu0 %v66
    %214 = vmatmul.f32.gmra.mxu0 %v138
    %v215 = vpop.f32.mrf.mxu0
    %v216 = vadd.f32 0.0, %v215
    %217 = vdwg.mxu0
    %v219 = vrot.slane %v216, 2
    %v221 = vadd.f32 %v135, %v219
    %v222 = vxor.u32 %v221, 2147483648
    %v223 = vmul.f32 %v222, 1.442695
    %v224 = vpow.pop %v223
    %v225 = vadd.f32 %v224, 1.0
    %v226 = vrcp.pop %v225
    %v227 = vmul.f32 %v225, %v226
    %v228 = vsub.f32 1.0, %v227
    %v229 = vmul.f32 %v226, %v228
    %v230 = vadd.f32 %v226, %v229
    %vm231 = vweird.f32 %v225
    %vm232 = vweird.f32 %v226
    %vm233 = vmor %vm231, %vm232
    %v234 = vsel %vm233, %v226, %v230
    %v235 = vand.u32 2147483647, %v225
    %vm236 = vcmp.eq.f32.partialorder %v235, 8.507059e+37
    %v237 = vand.u32 %v225, 2147483648
    %v238 = vor.u32 1.1754944e-38, %v237
    %v239 = vsel %vm236, %v238, %v234
    %v240 = vmul.f32 1.0, %v239
    %v241 = vtanh.pop %v221
    %v242 = vmul.f32 %v240, 0.0
    %244 = vrot.lane.b32.xlu0 %v241, 64
    %v245 = vpop.permute.xlu0 %244
    %v247 = vmul.f32 %v240, %v245
    %249 = vrot.lane.b32.xlu0 %v247, 32
    %v250 = vpop.permute.xlu0 %249
    %v252 = vadd.f32 %v242, %v250
    %v253 = vtanh.pop %v252
    %255 = vrot.lane.b32.xlu0 %v253, 64
    %v256 = vpop.permute.xlu0 %255
    %v258 = vmul.f32 %v240, %v256
    %260 = vrot.lane.b32.xlu0 %v197, 32
    %v261 = vpop.permute.xlu0 %260
    %v262 = vsel %vm84, %v261, 0
    %264 = vmatpush.msra.mxu0 0.0
    %265 = vmatpush.msra.mxu0 0.0
    %266 = vmatpush.msra.mxu0 0.0
    %267 = vmatpush.msra.mxu0 0.0
    %268 = vmatpush.msra.mxu0 0.0
    %269 = vmatpush.msra.mxu0 0.0
    %270 = vmatpush.msra.mxu0 0.0
    %271 = vmatpush.msra.mxu0 0.0
    %272 = vmatpush.msra.mxu0 0.0
    %273 = vmatpush.msra.mxu0 0.0
    %274 = vmatpush.msra.mxu0 0.0
    %275 = vmatpush.msra.mxu0 0.0
    %276 = vmatpush.msra.mxu0 %v65
    %277 = vmatpush.msra.mxu0 %v64
    %278 = vmatpush.msra.mxu0 %v63
    %279 = vmatpush.msra.mxu0 %v62
    %280 = vmatmul.f32.gmra.mxu0 %v262
    %v281 = vpop.f32.mrf.mxu0
    %v282 = vadd.f32 0.0, %v281
    %283 = vdwg.mxu0
    %v285 = vrot.slane %v282, 6
    %v287 = vadd.f32 %v109, %v285
    %v288 = vxor.u32 %v287, 2147483648
    %v289 = vmul.f32 %v288, 1.442695
    %v290 = vpow.pop %v289
    %v291 = vadd.f32 %v290, 1.0
    %v292 = vrcp.pop %v291
    %v293 = vmul.f32 %v291, %v292
    %v294 = vsub.f32 1.0, %v293
    %v295 = vmul.f32 %v292, %v294
    %v296 = vadd.f32 %v292, %v295
    %vm297 = vweird.f32 %v291
    %vm298 = vweird.f32 %v292
    %vm299 = vmor %vm297, %vm298
    %v300 = vsel %vm299, %v292, %v296
    %v301 = vand.u32 2147483647, %v291
    %vm302 = vcmp.eq.f32.partialorder %v301, 8.507059e+37
    %v303 = vand.u32 %v291, 2147483648
    %v304 = vor.u32 1.1754944e-38, %v303
    %v305 = vsel %vm302, %v304, %v300
    %v306 = vmul.f32 1.0, %v305
    %v307 = vtanh.pop %v287
    %v309 = vrot.slane %v191, 6
    %v311 = vmul.f32 %v306, %v309
    %313 = vrot.lane.b32.xlu0 %v307, 64
    %v314 = vpop.permute.xlu0 %313
    %v316 = vmul.f32 %v306, %v314
    %318 = vrot.lane.b32.xlu0 %v316, 32
    %v319 = vpop.permute.xlu0 %318
    %v321 = vadd.f32 %v311, %v319
    %v322 = vtanh.pop %v321
    %324 = vrot.lane.b32.xlu0 %v322, 64
    %v325 = vpop.permute.xlu0 %324
    %v327 = vmul.f32 %v306, %v325
    %v329 = vrot.slane %v258, 6
    %330 = vrot.lane.b32.xlu0 %v329, 32
    %v331 = vpop.permute.xlu0 %330
    %v332 = vsel %vm84, %v331, 0
    %334 = vmatpush.msra.mxu0 0.0
    %335 = vmatpush.msra.mxu0 0.0
    %336 = vmatpush.msra.mxu0 0.0
    %337 = vmatpush.msra.mxu0 0.0
    %338 = vmatpush.msra.mxu0 0.0
    %339 = vmatpush.msra.mxu0 0.0
    %340 = vmatpush.msra.mxu0 0.0
    %341 = vmatpush.msra.mxu0 0.0
    %342 = vmatpush.msra.mxu0 0.0
    %343 = vmatpush.msra.mxu0 0.0
    %344 = vmatpush.msra.mxu0 0.0
    %345 = vmatpush.msra.mxu0 0.0
    %346 = vmatpush.msra.mxu0 %v69
    %347 = vmatpush.msra.mxu0 %v68
    %348 = vmatpush.msra.mxu0 %v67
    %349 = vmatpush.msra.mxu0 %v66
    %350 = vmatmul.f32.gmra.mxu0 %v332
    %v351 = vpop.f32.mrf.mxu0
    %v352 = vadd.f32 0.0, %v351
    %353 = vdwg.mxu0
    %v355 = vrot.slane %v352, 4
    %v357 = vadd.f32 %v135, %v355
    %v358 = vxor.u32 %v357, 2147483648
    %v359 = vmul.f32 %v358, 1.442695
    %v360 = vpow.pop %v359
    %v361 = vadd.f32 %v360, 1.0
    %v362 = vrcp.pop %v361
    %v363 = vmul.f32 %v361, %v362
    %v364 = vsub.f32 1.0, %v363
    %v365 = vmul.f32 %v362, %v364
    %v366 = vadd.f32 %v362, %v365
    %vm367 = vweird.f32 %v361
    %vm368 = vweird.f32 %v362
    %vm369 = vmor %vm367, %vm368
    %v370 = vsel %vm369, %v362, %v366
    %v371 = vand.u32 2147483647, %v361
    %vm372 = vcmp.eq.f32.partialorder %v371, 8.507059e+37
    %v373 = vand.u32 %v361, 2147483648
    %v374 = vor.u32 1.1754944e-38, %v373
    %v375 = vsel %vm372, %v374, %v370
    %v376 = vmul.f32 1.0, %v375
    %v377 = vtanh.pop %v357
    %v379 = vrot.slane %v252, 2
    %v381 = vmul.f32 %v376, %v379
    %383 = vrot.lane.b32.xlu0 %v377, 64
    %v384 = vpop.permute.xlu0 %383
    %v386 = vmul.f32 %v376, %v384
    %388 = vrot.lane.b32.xlu0 %v386, 32
    %v389 = vpop.permute.xlu0 %388
    %v391 = vadd.f32 %v381, %v389
    %v392 = vtanh.pop %v391
    %394 = vrot.lane.b32.xlu0 %v392, 64
    %v395 = vpop.permute.xlu0 %394
    %v397 = vmul.f32 %v376, %v395
    %v399 = vrot.slane %v327, 2
    %400 = vrot.lane.b32.xlu0 %v399, 32
    %v401 = vpop.permute.xlu0 %400
    %v402 = vsel %vm84, %v401, 0
    %404 = vmatpush.msra.mxu0 0.0
    %405 = vmatpush.msra.mxu0 0.0
    %406 = vmatpush.msra.mxu0 0.0
    %407 = vmatpush.msra.mxu0 0.0
    %408 = vmatpush.msra.mxu0 0.0
    %409 = vmatpush.msra.mxu0 0.0
    %410 = vmatpush.msra.mxu0 0.0
    %411 = vmatpush.msra.mxu0 0.0
    %412 = vmatpush.msra.mxu0 0.0
    %413 = vmatpush.msra.mxu0 0.0
    %414 = vmatpush.msra.mxu0 0.0
    %415 = vmatpush.msra.mxu0 0.0
    %416 = vmatpush.msra.mxu0 %v65
    %417 = vmatpush.msra.mxu0 %v64
    %418 = vmatpush.msra.mxu0 %v63
    %419 = vmatpush.msra.mxu0 %v62
    %420 = vmatmul.f32.gmra.mxu0 %v402
    %v421 = vpop.f32.mrf.mxu0
    %v422 = vadd.f32 0.0, %v421
    %423 = vdwg.mxu0
    %v425 = vrot.slane %v422, 4
    %v427 = vadd.f32 %v109, %v425
    %v428 = vxor.u32 %v427, 2147483648
    %v429 = vmul.f32 %v428, 1.442695
    %v430 = vpow.pop %v429
    %v431 = vadd.f32 %v430, 1.0
    %v432 = vrcp.pop %v431
    %v433 = vmul.f32 %v431, %v432
    %v434 = vsub.f32 1.0, %v433
    %v435 = vmul.f32 %v432, %v434
    %v436 = vadd.f32 %v432, %v435
    %vm437 = vweird.f32 %v431
    %vm438 = vweird.f32 %v432
    %vm439 = vmor %vm437, %vm438
    %v440 = vsel %vm439, %v432, %v436
    %v441 = vand.u32 2147483647, %v431
    %vm442 = vcmp.eq.f32.partialorder %v441, 8.507059e+37
    %v443 = vand.u32 %v431, 2147483648
    %v444 = vor.u32 1.1754944e-38, %v443
    %v445 = vsel %vm442, %v444, %v440
    %v446 = vmul.f32 1.0, %v445
    %v447 = vtanh.pop %v427
    %v449 = vrot.slane %v321, 6
    %v451 = vmul.f32 %v446, %v449
    %453 = vrot.lane.b32.xlu0 %v447, 64
    %v454 = vpop.permute.xlu0 %453
    %v456 = vmul.f32 %v446, %v454
    %458 = vrot.lane.b32.xlu0 %v456, 32
    %v459 = vpop.permute.xlu0 %458
    %v461 = vadd.f32 %v451, %v459
    %v462 = vtanh.pop %v461
    %464 = vrot.lane.b32.xlu0 %v462, 64
    %v465 = vpop.permute.xlu0 %464
    %v467 = vmul.f32 %v446, %v465
    %v469 = vrot.slane %v397, 4
    %470 = vrot.lane.b32.xlu0 %v469, 32
    %v471 = vpop.permute.xlu0 %470
    %v472 = vsel %vm84, %v471, 0
    %474 = vmatpush.msra.mxu0 0.0
    %475 = vmatpush.msra.mxu0 0.0
    %476 = vmatpush.msra.mxu0 0.0
    %477 = vmatpush.msra.mxu0 0.0
    %478 = vmatpush.msra.mxu0 0.0
    %479 = vmatpush.msra.mxu0 0.0
    %480 = vmatpush.msra.mxu0 0.0
    %481 = vmatpush.msra.mxu0 0.0
    %482 = vmatpush.msra.mxu0 0.0
    %483 = vmatpush.msra.mxu0 0.0
    %484 = vmatpush.msra.mxu0 0.0
    %485 = vmatpush.msra.mxu0 0.0
    %486 = vmatpush.msra.mxu0 %v69
    %487 = vmatpush.msra.mxu0 %v68
    %488 = vmatpush.msra.mxu0 %v67
    %489 = vmatpush.msra.mxu0 %v66
    %490 = vmatmul.f32.gmra.mxu0 %v472
    %v491 = vpop.f32.mrf.mxu0
    %v492 = vadd.f32 0.0, %v491
    %493 = vdwg.mxu0
    %v495 = vrot.slane %v492, 6
    %v497 = vadd.f32 %v135, %v495
    %v498 = vxor.u32 %v497, 2147483648
    %v499 = vmul.f32 %v498, 1.442695
    %v500 = vpow.pop %v499
    %v501 = vadd.f32 %v500, 1.0
    %v502 = vrcp.pop %v501
    %v503 = vmul.f32 %v501, %v502
    %v504 = vsub.f32 1.0, %v503
    %v505 = vmul.f32 %v502, %v504
    %v506 = vadd.f32 %v502, %v505
    %vm507 = vweird.f32 %v501
    %vm508 = vweird.f32 %v502
    %vm509 = vmor %vm507, %vm508
    %v510 = vsel %vm509, %v502, %v506
    %v511 = vand.u32 2147483647, %v501
    %vm512 = vcmp.eq.f32.partialorder %v511, 8.507059e+37
    %v513 = vand.u32 %v501, 2147483648
    %v514 = vor.u32 1.1754944e-38, %v513
    %v515 = vsel %vm512, %v514, %v510
    %v516 = vmul.f32 1.0, %v515
    %v517 = vtanh.pop %v497
    %v519 = vrot.slane %v391, 2
    %v521 = vmul.f32 %v516, %v519
    %523 = vrot.lane.b32.xlu0 %v517, 64
    %v524 = vpop.permute.xlu0 %523
    %v526 = vmul.f32 %v516, %v524
    %528 = vrot.lane.b32.xlu0 %v526, 32
    %v529 = vpop.permute.xlu0 %528
    %v531 = vadd.f32 %v521, %v529
    %v532 = vtanh.pop %v531
    %534 = vrot.lane.b32.xlu0 %v532, 64
    %v535 = vpop.permute.xlu0 %534
    %v537 = vmul.f32 %v516, %v535
    %v539 = vrot.slane %v467, 4
    %540 = vrot.lane.b32.xlu0 %v539, 32
    %v541 = vpop.permute.xlu0 %540
    %v542 = vsel %vm84, %v541, 0
    %544 = vmatpush.msra.mxu0 0.0
    %545 = vmatpush.msra.mxu0 0.0
    %546 = vmatpush.msra.mxu0 0.0
    %547 = vmatpush.msra.mxu0 0.0
    %548 = vmatpush.msra.mxu0 0.0
    %549 = vmatpush.msra.mxu0 0.0
    %550 = vmatpush.msra.mxu0 0.0
    %551 = vmatpush.msra.mxu0 0.0
    %552 = vmatpush.msra.mxu0 0.0
    %553 = vmatpush.msra.mxu0 0.0
    %554 = vmatpush.msra.mxu0 0.0
    %555 = vmatpush.msra.mxu0 0.0
    %556 = vmatpush.msra.mxu0 %v65
    %557 = vmatpush.msra.mxu0 %v64
    %558 = vmatpush.msra.mxu0 %v63
    %559 = vmatpush.msra.mxu0 %v62
    %560 = vmatmul.f32.gmra.mxu0 %v542
    %v561 = vpop.f32.mrf.mxu0
    %v562 = vadd.f32 0.0, %v561
    %563 = vdwg.mxu0
    %v565 = vrot.slane %v562, 2
    %v567 = vadd.f32 %v109, %v565
    %v568 = vxor.u32 %v567, 2147483648
    %v569 = vmul.f32 %v568, 1.442695
    %v570 = vpow.pop %v569
    %v571 = vadd.f32 %v570, 1.0
    %v572 = vrcp.pop %v571
    %v573 = vmul.f32 %v571, %v572
    %v574 = vsub.f32 1.0, %v573
    %v575 = vmul.f32 %v572, %v574
    %v576 = vadd.f32 %v572, %v575
    %vm577 = vweird.f32 %v571
    %vm578 = vweird.f32 %v572
    %vm579 = vmor %vm577, %vm578
    %v580 = vsel %vm579, %v572, %v576
    %v581 = vand.u32 2147483647, %v571
    %vm582 = vcmp.eq.f32.partialorder %v581, 8.507059e+37
    %v583 = vand.u32 %v571, 2147483648
    %v584 = vor.u32 1.1754944e-38, %v583
    %v585 = vsel %vm582, %v584, %v580
    %v586 = vmul.f32 1.0, %v585
    %v587 = vtanh.pop %v567
    %v589 = vrot.slane %v461, 6
    %v591 = vmul.f32 %v586, %v589
    %593 = vrot.lane.b32.xlu0 %v587, 64
    %v594 = vpop.permute.xlu0 %593
    %v596 = vmul.f32 %v586, %v594
    %598 = vrot.lane.b32.xlu0 %v596, 32
    %v599 = vpop.permute.xlu0 %598
    %v601 = vadd.f32 %v591, %v599
    %v602 = vtanh.pop %v601
    %604 = vrot.lane.b32.xlu0 %v602, 64
    %v605 = vpop.permute.xlu0 %604
    %v607 = vmul.f32 %v586, %v605
    %v609 = vrot.slane %v537, 2
    %610 = vrot.lane.b32.xlu0 %v609, 32
    %v611 = vpop.permute.xlu0 %610
    %v612 = vsel %vm84, %v611, 0
    %614 = vmatpush.msra.mxu0 0.0
    %615 = vmatpush.msra.mxu0 0.0
    %616 = vmatpush.msra.mxu0 0.0
    %617 = vmatpush.msra.mxu0 0.0
    %618 = vmatpush.msra.mxu0 0.0
    %619 = vmatpush.msra.mxu0 0.0
    %620 = vmatpush.msra.mxu0 0.0
    %621 = vmatpush.msra.mxu0 0.0
    %622 = vmatpush.msra.mxu0 0.0
    %623 = vmatpush.msra.mxu0 0.0
    %624 = vmatpush.msra.mxu0 0.0
    %625 = vmatpush.msra.mxu0 0.0
    %626 = vmatpush.msra.mxu0 %v69
    %627 = vmatpush.msra.mxu0 %v68
    %628 = vmatpush.msra.mxu0 %v67
    %629 = vmatpush.msra.mxu0 %v66
    %630 = vmatmul.f32.gmra.mxu0 %v612
    %v631 = vpop.f32.mrf.mxu0
    %v632 = vadd.f32 0.0, %v631
    %633 = vdwg.mxu0
    %v634 = vadd.f32 %v135, %v632
    %v635 = vxor.u32 %v634, 2147483648
    %v636 = vmul.f32 %v635, 1.442695
    %v637 = vpow.pop %v636
    %v638 = vadd.f32 %v637, 1.0
    %v639 = vrcp.pop %v638
    %v640 = vmul.f32 %v638, %v639
    %v641 = vsub.f32 1.0, %v640
    %v642 = vmul.f32 %v639, %v641
    %v643 = vadd.f32 %v639, %v642
    %vm644 = vweird.f32 %v638
    %vm645 = vweird.f32 %v639
    %vm646 = vmor %vm644, %vm645
    %v647 = vsel %vm646, %v639, %v643
    %v648 = vand.u32 2147483647, %v638
    %vm649 = vcmp.eq.f32.partialorder %v648, 8.507059e+37
    %v650 = vand.u32 %v638, 2147483648
    %v651 = vor.u32 1.1754944e-38, %v650
    %v652 = vsel %vm649, %v651, %v647
    %v653 = vmul.f32 1.0, %v652
    %v654 = vtanh.pop %v634
    %v656 = vrot.slane %v531, 2
    %v658 = vmul.f32 %v653, %v656
    %660 = vrot.lane.b32.xlu0 %v654, 64
    %v661 = vpop.permute.xlu0 %660
    %v663 = vmul.f32 %v653, %v661
    %665 = vrot.lane.b32.xlu0 %v663, 32
    %v666 = vpop.permute.xlu0 %665
    %v668 = vadd.f32 %v658, %v666
    %v669 = vtanh.pop %v668
    %671 = vrot.lane.b32.xlu0 %v669, 64
    %v672 = vpop.permute.xlu0 %671
    %v674 = vmul.f32 %v653, %v672
    %v676 = vrot.slane %v607, 6
    %677 = vrot.lane.b32.xlu0 %v676, 32
    %v678 = vpop.permute.xlu0 %677
    %v679 = vsel %vm84, %v678, 0
    %681 = vmatpush.msra.mxu0 0.0
    %682 = vmatpush.msra.mxu0 0.0
    %683 = vmatpush.msra.mxu0 0.0
    %684 = vmatpush.msra.mxu0 0.0
    %685 = vmatpush.msra.mxu0 0.0
    %686 = vmatpush.msra.mxu0 0.0
    %687 = vmatpush.msra.mxu0 0.0
    %688 = vmatpush.msra.mxu0 0.0
    %689 = vmatpush.msra.mxu0 0.0
    %690 = vmatpush.msra.mxu0 0.0
    %691 = vmatpush.msra.mxu0 0.0
    %692 = vmatpush.msra.mxu0 0.0
    %693 = vmatpush.msra.mxu0 %v65
    %694 = vmatpush.msra.mxu0 %v64
    %695 = vmatpush.msra.mxu0 %v63
    %696 = vmatpush.msra.mxu0 %v62
    %697 = vmatmul.f32.gmra.mxu0 %v679
    %v698 = vpop.f32.mrf.mxu0
    %v699 = vadd.f32 0.0, %v698
    %700 = vdwg.mxu0
    %v701 = vadd.f32 %v112, %v699
    %v702 = vxor.u32 %v701, 2147483648
    %v703 = vmul.f32 %v702, 1.442695
    %v704 = vpow.pop %v703
    %v705 = vadd.f32 %v704, 1.0
    %v706 = vrcp.pop %v705
    %v707 = vmul.f32 %v705, %v706
    %v708 = vsub.f32 1.0, %v707
    %v709 = vmul.f32 %v706, %v708
    %v710 = vadd.f32 %v706, %v709
    %vm711 = vweird.f32 %v705
    %vm712 = vweird.f32 %v706
    %vm713 = vmor %vm711, %vm712
    %v714 = vsel %vm713, %v706, %v710
    %v715 = vand.u32 2147483647, %v705
    %vm716 = vcmp.eq.f32.partialorder %v715, 8.507059e+37
    %v717 = vand.u32 %v705, 2147483648
    %v718 = vor.u32 1.1754944e-38, %v717
    %v719 = vsel %vm716, %v718, %v714
    %v720 = vmul.f32 1.0, %v719
    %v721 = vtanh.pop %v701
    %v723 = vrot.slane %v601, 6
    %v725 = vmul.f32 %v720, %v723
    %727 = vrot.lane.b32.xlu0 %v721, 64
    %v728 = vpop.permute.xlu0 %727
    %v730 = vmul.f32 %v720, %v728
    %732 = vrot.lane.b32.xlu0 %v730, 32
    %v733 = vpop.permute.xlu0 %732
    %v735 = vadd.f32 %v725, %v733
    %v736 = vtanh.pop %v735
    %738 = vrot.lane.b32.xlu0 %v736, 64
    %v739 = vpop.permute.xlu0 %738
    %v741 = vmul.f32 %v720, %v739
    %743 = vrot.lane.b32.xlu0 %v674, 32
    %v744 = vpop.permute.xlu0 %743
    %v745 = vsel %vm84, %v744, 0
    %747 = vmatpush.msra.mxu0 0.0
    %748 = vmatpush.msra.mxu0 0.0
    %749 = vmatpush.msra.mxu0 0.0
    %750 = vmatpush.msra.mxu0 0.0
    %751 = vmatpush.msra.mxu0 0.0
    %752 = vmatpush.msra.mxu0 0.0
    %753 = vmatpush.msra.mxu0 0.0
    %754 = vmatpush.msra.mxu0 0.0
    %755 = vmatpush.msra.mxu0 0.0
    %756 = vmatpush.msra.mxu0 0.0
    %757 = vmatpush.msra.mxu0 0.0
    %758 = vmatpush.msra.mxu0 0.0
    %759 = vmatpush.msra.mxu0 %v69
    %760 = vmatpush.msra.mxu0 %v68
    %761 = vmatpush.msra.mxu0 %v67
    %762 = vmatpush.msra.mxu0 %v66
    %763 = vmatmul.f32.gmra.mxu0 %v745
    %v764 = vpop.f32.mrf.mxu0
    %v765 = vadd.f32 0.0, %v764
    %766 = vdwg.mxu0
    %v768 = vrot.slane %v765, 2
    %v770 = vadd.f32 %v132, %v768
    %v771 = vxor.u32 %v770, 2147483648
    %v772 = vmul.f32 %v771, 1.442695
    %v773 = vpow.pop %v772
    %v774 = vadd.f32 %v773, 1.0
    %v775 = vrcp.pop %v774
    %v776 = vmul.f32 %v774, %v775
    %v777 = vsub.f32 1.0, %v776
    %v778 = vmul.f32 %v775, %v777
    %v779 = vadd.f32 %v775, %v778
    %vm780 = vweird.f32 %v774
    %vm781 = vweird.f32 %v775
    %vm782 = vmor %vm780, %vm781
    %v783 = vsel %vm782, %v775, %v779
    %v784 = vand.u32 2147483647, %v774
    %vm785 = vcmp.eq.f32.partialorder %v784, 8.507059e+37
    %v786 = vand.u32 %v774, 2147483648
    %v787 = vor.u32 1.1754944e-38, %v786
    %v788 = vsel %vm785, %v787, %v783
    %v789 = vmul.f32 1.0, %v788
    %v790 = vtanh.pop %v770
    %v792 = vrot.slane %v668, 2
    %v794 = vmul.f32 %v789, %v792
    %796 = vrot.lane.b32.xlu0 %v790, 64
    %v797 = vpop.permute.xlu0 %796
    %v799 = vmul.f32 %v789, %v797
    %801 = vrot.lane.b32.xlu0 %v799, 32
    %v802 = vpop.permute.xlu0 %801
    %v804 = vadd.f32 %v794, %v802
    %v805 = vtanh.pop %v804
    %807 = vrot.lane.b32.xlu0 %v805, 64
    %v808 = vpop.permute.xlu0 %807
    %v810 = vmul.f32 %v789, %v808
    %812 = vrot.lane.b32.xlu0 %v741, 32
    %v813 = vpop.permute.xlu0 %812
    %v814 = vsel %vm84, %v813, 0
    %816 = vmatpush.msra.mxu0 0.0
    %817 = vmatpush.msra.mxu0 0.0
    %818 = vmatpush.msra.mxu0 0.0
    %819 = vmatpush.msra.mxu0 0.0
    %820 = vmatpush.msra.mxu0 0.0
    %821 = vmatpush.msra.mxu0 0.0
    %822 = vmatpush.msra.mxu0 0.0
    %823 = vmatpush.msra.mxu0 0.0
    %824 = vmatpush.msra.mxu0 0.0
    %825 = vmatpush.msra.mxu0 0.0
    %826 = vmatpush.msra.mxu0 0.0
    %827 = vmatpush.msra.mxu0 0.0
    %828 = vmatpush.msra.mxu0 %v65
    %829 = vmatpush.msra.mxu0 %v64
    %830 = vmatpush.msra.mxu0 %v63
    %831 = vmatpush.msra.mxu0 %v62
    %832 = vmatmul.f32.gmra.mxu0 %v814
    %v833 = vpop.f32.mrf.mxu0
    %v834 = vadd.f32 0.0, %v833
    %835 = vdwg.mxu0
    %v837 = vrot.slane %v834, 6
    %v839 = vadd.f32 %v112, %v837
    %v840 = vxor.u32 %v839, 2147483648
    %v841 = vmul.f32 %v840, 1.442695
    %v842 = vpow.pop %v841
    %v843 = vadd.f32 %v842, 1.0
    %v844 = vrcp.pop %v843
    %v845 = vmul.f32 %v843, %v844
    %v846 = vsub.f32 1.0, %v845
    %v847 = vmul.f32 %v844, %v846
    %v848 = vadd.f32 %v844, %v847
    %vm849 = vweird.f32 %v843
    %vm850 = vweird.f32 %v844
    %vm851 = vmor %vm849, %vm850
    %v852 = vsel %vm851, %v844, %v848
    %v853 = vand.u32 2147483647, %v843
    %vm854 = vcmp.eq.f32.partialorder %v853, 8.507059e+37
    %v855 = vand.u32 %v843, 2147483648
    %v856 = vor.u32 1.1754944e-38, %v855
    %v857 = vsel %vm854, %v856, %v852
    %v858 = vmul.f32 1.0, %v857
    %v859 = vtanh.pop %v839
    %v861 = vrot.slane %v735, 6
    %v863 = vmul.f32 %v858, %v861
    %865 = vrot.lane.b32.xlu0 %v859, 64
    %v866 = vpop.permute.xlu0 %865
    %v868 = vmul.f32 %v858, %v866
    %870 = vrot.lane.b32.xlu0 %v868, 32
    %v871 = vpop.permute.xlu0 %870
    %v873 = vadd.f32 %v863, %v871
    %v874 = vtanh.pop %v873
    %876 = vrot.lane.b32.xlu0 %v874, 64
    %v877 = vpop.permute.xlu0 %876
    %v879 = vmul.f32 %v858, %v877
    %v881 = vrot.slane %v810, 6
    %882 = vrot.lane.b32.xlu0 %v881, 32
    %v883 = vpop.permute.xlu0 %882
    %v884 = vsel %vm84, %v883, 0
    %886 = vmatpush.msra.mxu0 0.0
    %887 = vmatpush.msra.mxu0 0.0
    %888 = vmatpush.msra.mxu0 0.0
    %889 = vmatpush.msra.mxu0 0.0
    %890 = vmatpush.msra.mxu0 0.0
    %891 = vmatpush.msra.mxu0 0.0
    %892 = vmatpush.msra.mxu0 0.0
    %893 = vmatpush.msra.mxu0 0.0
    %894 = vmatpush.msra.mxu0 0.0
    %895 = vmatpush.msra.mxu0 0.0
    %896 = vmatpush.msra.mxu0 0.0
    %897 = vmatpush.msra.mxu0 0.0
    %898 = vmatpush.msra.mxu0 %v69
    %899 = vmatpush.msra.mxu0 %v68
    %900 = vmatpush.msra.mxu0 %v67
    %901 = vmatpush.msra.mxu0 %v66
    %902 = vmatmul.f32.gmra.mxu0 %v884
    %v903 = vpop.f32.mrf.mxu0
    %v904 = vadd.f32 0.0, %v903
    %905 = vdwg.mxu0
    %v907 = vrot.slane %v904, 4
    %v909 = vadd.f32 %v132, %v907
    %v910 = vxor.u32 %v909, 2147483648
    %v911 = vmul.f32 %v910, 1.442695
    %v912 = vpow.pop %v911
    %v913 = vadd.f32 %v912, 1.0
    %v914 = vrcp.pop %v913
    %v915 = vmul.f32 %v913, %v914
    %v916 = vsub.f32 1.0, %v915
    %v917 = vmul.f32 %v914, %v916
    %v918 = vadd.f32 %v914, %v917
    %vm919 = vweird.f32 %v913
    %vm920 = vweird.f32 %v914
    %vm921 = vmor %vm919, %vm920
    %v922 = vsel %vm921, %v914, %v918
    %v923 = vand.u32 2147483647, %v913
    %vm924 = vcmp.eq.f32.partialorder %v923, 8.507059e+37
    %v925 = vand.u32 %v913, 2147483648
    %v926 = vor.u32 1.1754944e-38, %v925
    %v927 = vsel %vm924, %v926, %v922
    %v928 = vmul.f32 1.0, %v927
    %v929 = vtanh.pop %v909
    %v931 = vrot.slane %v804, 2
    %v933 = vmul.f32 %v928, %v931
    %935 = vrot.lane.b32.xlu0 %v929, 64
    %v936 = vpop.permute.xlu0 %935
    %v938 = vmul.f32 %v928, %v936
    %940 = vrot.lane.b32.xlu0 %v938, 32
    %v941 = vpop.permute.xlu0 %940
    %v943 = vadd.f32 %v933, %v941
    %v944 = vtanh.pop %v943
    %946 = vrot.lane.b32.xlu0 %v944, 64
    %v947 = vpop.permute.xlu0 %946
    %v949 = vmul.f32 %v928, %v947
    %v951 = vrot.slane %v879, 2
    %952 = vrot.lane.b32.xlu0 %v951, 32
    %v953 = vpop.permute.xlu0 %952
    %v954 = vsel %vm84, %v953, 0
    %956 = vmatpush.msra.mxu0 0.0
    %957 = vmatpush.msra.mxu0 0.0
    %958 = vmatpush.msra.mxu0 0.0
    %959 = vmatpush.msra.mxu0 0.0
    %960 = vmatpush.msra.mxu0 0.0
    %961 = vmatpush.msra.mxu0 0.0
    %962 = vmatpush.msra.mxu0 0.0
    %963 = vmatpush.msra.mxu0 0.0
    %964 = vmatpush.msra.mxu0 0.0
    %965 = vmatpush.msra.mxu0 0.0
    %966 = vmatpush.msra.mxu0 0.0
    %967 = vmatpush.msra.mxu0 0.0
    %968 = vmatpush.msra.mxu0 %v65
    %969 = vmatpush.msra.mxu0 %v64
    %970 = vmatpush.msra.mxu0 %v63
    %971 = vmatpush.msra.mxu0 %v62
    %972 = vmatmul.f32.gmra.mxu0 %v954
    %v973 = vpop.f32.mrf.mxu0
    %v974 = vadd.f32 0.0, %v973
    %975 = vdwg.mxu0
    %v977 = vrot.slane %v974, 4
    %v979 = vadd.f32 %v112, %v977
    %v980 = vxor.u32 %v979, 2147483648
    %v981 = vmul.f32 %v980, 1.442695
    %v982 = vpow.pop %v981
    %v983 = vadd.f32 %v982, 1.0
    %v984 = vrcp.pop %v983
    %v985 = vmul.f32 %v983, %v984
    %v986 = vsub.f32 1.0, %v985
    %v987 = vmul.f32 %v984, %v986
    %v988 = vadd.f32 %v984, %v987
    %vm989 = vweird.f32 %v983
    %vm990 = vweird.f32 %v984
    %vm991 = vmor %vm989, %vm990
    %v992 = vsel %vm991, %v984, %v988
    %v993 = vand.u32 2147483647, %v983
    %vm994 = vcmp.eq.f32.partialorder %v993, 8.507059e+37
    %v995 = vand.u32 %v983, 2147483648
    %v996 = vor.u32 1.1754944e-38, %v995
    %v997 = vsel %vm994, %v996, %v992
    %v998 = vmul.f32 1.0, %v997
    %v999 = vtanh.pop %v979
    %v1001 = vrot.slane %v873, 6
    %v1003 = vmul.f32 %v998, %v1001
    %1005 = vrot.lane.b32.xlu0 %v999, 64
    %v1006 = vpop.permute.xlu0 %1005
    %v1008 = vmul.f32 %v998, %v1006
    %1010 = vrot.lane.b32.xlu0 %v1008, 32
    %v1011 = vpop.permute.xlu0 %1010
    %v1013 = vadd.f32 %v1003, %v1011
    %v1014 = vtanh.pop %v1013
    %1016 = vrot.lane.b32.xlu0 %v1014, 64
    %v1017 = vpop.permute.xlu0 %1016
    %v1019 = vmul.f32 %v998, %v1017
    %v1021 = vrot.slane %v949, 4
    %1022 = vrot.lane.b32.xlu0 %v1021, 32
    %v1023 = vpop.permute.xlu0 %1022
    %v1024 = vsel %vm84, %v1023, 0
    %1026 = vmatpush.msra.mxu0 0.0
    %1027 = vmatpush.msra.mxu0 0.0
    %1028 = vmatpush.msra.mxu0 0.0
    %1029 = vmatpush.msra.mxu0 0.0
    %1030 = vmatpush.msra.mxu0 0.0
    %1031 = vmatpush.msra.mxu0 0.0
    %1032 = vmatpush.msra.mxu0 0.0
    %1033 = vmatpush.msra.mxu0 0.0
    %1034 = vmatpush.msra.mxu0 0.0
    %1035 = vmatpush.msra.mxu0 0.0
    %1036 = vmatpush.msra.mxu0 0.0
    %1037 = vmatpush.msra.mxu0 0.0
    %1038 = vmatpush.msra.mxu0 %v69
    %1039 = vmatpush.msra.mxu0 %v68
    %1040 = vmatpush.msra.mxu0 %v67
    %1041 = vmatpush.msra.mxu0 %v66
    %1042 = vmatmul.f32.gmra.mxu0 %v1024
    %v1043 = vpop.f32.mrf.mxu0
    %v1044 = vadd.f32 0.0, %v1043
    %1045 = vdwg.mxu0
    %v1047 = vrot.slane %v1044, 6
    %v1049 = vadd.f32 %v132, %v1047
    %v1050 = vxor.u32 %v1049, 2147483648
    %v1051 = vmul.f32 %v1050, 1.442695
    %v1052 = vpow.pop %v1051
    %v1053 = vadd.f32 %v1052, 1.0
    %v1054 = vrcp.pop %v1053
    %v1055 = vmul.f32 %v1053, %v1054
    %v1056 = vsub.f32 1.0, %v1055
    %v1057 = vmul.f32 %v1054, %v1056
    %v1058 = vadd.f32 %v1054, %v1057
    %vm1059 = vweird.f32 %v1053
    %vm1060 = vweird.f32 %v1054
    %vm1061 = vmor %vm1059, %vm1060
    %v1062 = vsel %vm1061, %v1054, %v1058
    %v1063 = vand.u32 2147483647, %v1053
    %vm1064 = vcmp.eq.f32.partialorder %v1063, 8.507059e+37
    %v1065 = vand.u32 %v1053, 2147483648
    %v1066 = vor.u32 1.1754944e-38, %v1065
    %v1067 = vsel %vm1064, %v1066, %v1062
    %v1068 = vmul.f32 1.0, %v1067
    %v1069 = vtanh.pop %v1049
    %v1071 = vrot.slane %v943, 2
    %v1073 = vmul.f32 %v1068, %v1071
    %1075 = vrot.lane.b32.xlu0 %v1069, 64
    %v1076 = vpop.permute.xlu0 %1075
    %v1078 = vmul.f32 %v1068, %v1076
    %1080 = vrot.lane.b32.xlu0 %v1078, 32
    %v1081 = vpop.permute.xlu0 %1080
    %v1083 = vadd.f32 %v1073, %v1081
    %v1084 = vtanh.pop %v1083
    %1086 = vrot.lane.b32.xlu0 %v1084, 64
    %v1087 = vpop.permute.xlu0 %1086
    %v1089 = vmul.f32 %v1068, %v1087
    %v1091 = vrot.slane %v1019, 4
    %1092 = vrot.lane.b32.xlu0 %v1091, 32
    %v1093 = vpop.permute.xlu0 %1092
    %v1094 = vsel %vm84, %v1093, 0
    %1096 = vmatpush.msra.mxu0 0.0
    %1097 = vmatpush.msra.mxu0 0.0
    %1098 = vmatpush.msra.mxu0 0.0
    %1099 = vmatpush.msra.mxu0 0.0
    %1100 = vmatpush.msra.mxu0 0.0
    %1101 = vmatpush.msra.mxu0 0.0
    %1102 = vmatpush.msra.mxu0 0.0
    %1103 = vmatpush.msra.mxu0 0.0
    %1104 = vmatpush.msra.mxu0 0.0
    %1105 = vmatpush.msra.mxu0 0.0
    %1106 = vmatpush.msra.mxu0 0.0
    %1107 = vmatpush.msra.mxu0 0.0
    %1108 = vmatpush.msra.mxu0 %v65
    %1109 = vmatpush.msra.mxu0 %v64
    %1110 = vmatpush.msra.mxu0 %v63
    %1111 = vmatpush.msra.mxu0 %v62
    %1112 = vmatmul.f32.gmra.mxu0 %v1094
    %v1113 = vpop.f32.mrf.mxu0
    %v1114 = vadd.f32 0.0, %v1113
    %1115 = vdwg.mxu0
    %v1117 = vrot.slane %v1114, 2
    %v1119 = vadd.f32 %v112, %v1117
    %v1120 = vxor.u32 %v1119, 2147483648
    %v1121 = vmul.f32 %v1120, 1.442695
    %v1122 = vpow.pop %v1121
    %v1123 = vadd.f32 %v1122, 1.0
    %v1124 = vrcp.pop %v1123
    %v1125 = vmul.f32 %v1123, %v1124
    %v1126 = vsub.f32 1.0, %v1125
    %v1127 = vmul.f32 %v1124, %v1126
    %v1128 = vadd.f32 %v1124, %v1127
    %vm1129 = vweird.f32 %v1123
    %vm1130 = vweird.f32 %v1124
    %vm1131 = vmor %vm1129, %vm1130
    %v1132 = vsel %vm1131, %v1124, %v1128
    %v1133 = vand.u32 2147483647, %v1123
    %vm1134 = vcmp.eq.f32.partialorder %v1133, 8.507059e+37
    %v1135 = vand.u32 %v1123, 2147483648
    %v1136 = vor.u32 1.1754944e-38, %v1135
    %v1137 = vsel %vm1134, %v1136, %v1132
    %v1138 = vmul.f32 1.0, %v1137
    %v1139 = vtanh.pop %v1119
    %v1141 = vrot.slane %v1013, 6
    %v1143 = vmul.f32 %v1138, %v1141
    %1145 = vrot.lane.b32.xlu0 %v1139, 64
    %v1146 = vpop.permute.xlu0 %1145
    %v1148 = vmul.f32 %v1138, %v1146
    %1150 = vrot.lane.b32.xlu0 %v1148, 32
    %v1151 = vpop.permute.xlu0 %1150
    %v1153 = vadd.f32 %v1143, %v1151
    %v1154 = vtanh.pop %v1153
    %1156 = vrot.lane.b32.xlu0 %v1154, 64
    %v1157 = vpop.permute.xlu0 %1156
    %v1159 = vmul.f32 %v1138, %v1157
    %v1161 = vrot.slane %v1089, 2
    %1162 = vrot.lane.b32.xlu0 %v1161, 32
    %v1163 = vpop.permute.xlu0 %1162
    %v1164 = vsel %vm84, %v1163, 0
    %1166 = vmatpush.msra.mxu0 0.0
    %1167 = vmatpush.msra.mxu0 0.0
    %1168 = vmatpush.msra.mxu0 0.0
    %1169 = vmatpush.msra.mxu0 0.0
    %1170 = vmatpush.msra.mxu0 0.0
    %1171 = vmatpush.msra.mxu0 0.0
    %1172 = vmatpush.msra.mxu0 0.0
    %1173 = vmatpush.msra.mxu0 0.0
    %1174 = vmatpush.msra.mxu0 0.0
    %1175 = vmatpush.msra.mxu0 0.0
    %1176 = vmatpush.msra.mxu0 0.0
    %1177 = vmatpush.msra.mxu0 0.0
    %1178 = vmatpush.msra.mxu0 %v69
    %1179 = vmatpush.msra.mxu0 %v68
    %1180 = vmatpush.msra.mxu0 %v67
    %1181 = vmatpush.msra.mxu0 %v66
    %1182 = vmatmul.f32.gmra.mxu0 %v1164
    %v1183 = vpop.f32.mrf.mxu0
    %v1184 = vadd.f32 0.0, %v1183
    %1185 = vdwg.mxu0
    %v1186 = vadd.f32 %v132, %v1184
    %v1187 = vxor.u32 %v1186, 2147483648
    %v1188 = vmul.f32 %v1187, 1.442695
    %v1189 = vpow.pop %v1188
    %v1190 = vadd.f32 %v1189, 1.0
    %v1191 = vrcp.pop %v1190
    %v1192 = vmul.f32 %v1190, %v1191
    %v1193 = vsub.f32 1.0, %v1192
    %v1194 = vmul.f32 %v1191, %v1193
    %v1195 = vadd.f32 %v1191, %v1194
    %vm1196 = vweird.f32 %v1190
    %vm1197 = vweird.f32 %v1191
    %vm1198 = vmor %vm1196, %vm1197
    %v1199 = vsel %vm1198, %v1191, %v1195
    %v1200 = vand.u32 2147483647, %v1190
    %vm1201 = vcmp.eq.f32.partialorder %v1200, 8.507059e+37
    %v1202 = vand.u32 %v1190, 2147483648
    %v1203 = vor.u32 1.1754944e-38, %v1202
    %v1204 = vsel %vm1201, %v1203, %v1199
    %v1205 = vmul.f32 1.0, %v1204
    %v1206 = vtanh.pop %v1186
    %v1208 = vrot.slane %v1083, 2
    %v1210 = vmul.f32 %v1205, %v1208
    %1212 = vrot.lane.b32.xlu0 %v1206, 64
    %v1213 = vpop.permute.xlu0 %1212
    %v1215 = vmul.f32 %v1205, %v1213
    %1217 = vrot.lane.b32.xlu0 %v1215, 32
    %v1218 = vpop.permute.xlu0 %1217
    %v1220 = vadd.f32 %v1210, %v1218
    %v1221 = vtanh.pop %v1220
    %1223 = vrot.lane.b32.xlu0 %v1221, 64
    %v1224 = vpop.permute.xlu0 %1223
    %v1226 = vmul.f32 %v1205, %v1224
    %vm1227 = vcmask 1041408
    %v1228 = vsel %vm1227, %v197, %v327
    %vm1229 = vcmask 1043456
    %v1230 = vsel %vm1229, %v1228, %v467
    %vm1231 = vcmask 1045504
    %v1232 = vsel %vm1231, %v1230, %v607
    %v1233 = vsel %vm1227, %v741, %v879
    %v1234 = vsel %vm1229, %v1233, %v1019
    %v1235 = vsel %vm1231, %v1234, %v1159
    %v1236 = vsel %vm1227, %v1226, %v1089
    %v1237 = vsel %vm1229, %v1236, %v949
    %v1238 = vsel %vm1231, %v1237, %v810
    %v1239 = vsel %vm1227, %v674, %v537
    %v1240 = vsel %vm1229, %v1239, %v397
    %v1241 = vsel %vm1231, %v1240, %v258
    %1244 = vrot.lane.b32.xlu0 %v1238, 32
    %v1245 = vpop.permute.xlu0 %1244
    %1246 = vrot.lane.b32.xlu0 %v1241, 32
    %v1247 = vpop.permute.xlu0 %1246
    %v1248 = vsel %vm84, %v1245, 0
    %v1250 = vsel %vm84, %v1247, 0
    %1252 = vmatpush.msra.mxu0 0.0
    %1253 = vmatpush.msra.mxu0 0.0
    %1254 = vmatpush.msra.mxu0 0.0
    %1255 = vmatpush.msra.mxu0 0.0
    %1256 = vmatpush.msra.mxu0 0.0
    %1257 = vmatpush.msra.mxu0 0.0
    %1258 = vmatpush.msra.mxu0 0.0
    %1259 = vmatpush.msra.mxu0 0.0
    %1260 = vmatpush.msra.mxu0 0.0
    %1261 = vmatpush.msra.mxu0 0.0
    %1262 = vmatpush.msra.mxu0 0.0
    %1263 = vmatpush.msra.mxu0 0.0
    %1264 = vmatpush.msra.mxu0 %v77
    %1265 = vmatpush.msra.mxu0 %v76
    %1266 = vmatpush.msra.mxu0 %v75
    %1267 = vmatpush.msra.mxu0 %v74
    %1268 = vmatmul.f32.gmra.mxu0 %v1248
    %v1269 = vpop.f32.mrf.mxu0
    %v1270 = vadd.f32 0.0, %v1269
    %1271 = vmatmul.f32.gmra.mxu0 %v1250
    %v1272 = vpop.f32.mrf.mxu0
    %v1273 = vadd.f32 0.0, %v1272
    %1274 = vdwg.mxu0
    %1277 = vrot.lane.b32.xlu0 %v1232, 32
    %v1278 = vpop.permute.xlu0 %1277
    %1279 = vrot.lane.b32.xlu0 %v1235, 32
    %v1280 = vpop.permute.xlu0 %1279
    %v1281 = vsel %vm84, %v1278, 0
    %v1283 = vsel %vm84, %v1280, 0
    %1285 = vmatpush.msra.mxu0 0.0
    %1286 = vmatpush.msra.mxu0 0.0
    %1287 = vmatpush.msra.mxu0 0.0
    %1288 = vmatpush.msra.mxu0 0.0
    %1289 = vmatpush.msra.mxu0 0.0
    %1290 = vmatpush.msra.mxu0 0.0
    %1291 = vmatpush.msra.mxu0 0.0
    %1292 = vmatpush.msra.mxu0 0.0
    %1293 = vmatpush.msra.mxu0 0.0
    %1294 = vmatpush.msra.mxu0 0.0
    %1295 = vmatpush.msra.mxu0 0.0
    %1296 = vmatpush.msra.mxu0 0.0
    %1297 = vmatpush.msra.mxu0 %v73
    %1298 = vmatpush.msra.mxu0 %v72
    %1299 = vmatpush.msra.mxu0 %v71
    %1300 = vmatpush.msra.mxu0 %v70
    %1301 = vmatmul.f32.gmra.mxu0 %v1281
    %v1302 = vpop.f32.mrf.mxu0
    %v1303 = vadd.f32 %v1270, %v1302
    %1304 = vmatmul.f32.gmra.mxu0 %v1283
    %v1305 = vpop.f32.mrf.mxu0
    %v1306 = vadd.f32 %v1273, %v1305
    %1307 = vdwg.mxu0
    %v1309 = vperm.slane %v78, 0
    %v1311 = vadd.f32 %v1303, %v1309
    %v1312 = vadd.f32 %v1306, %v1309
    %v1313 = vld [vmem:[%s8] sm:$0xff]
    %v1314 = vld [vmem:[%s8 + $0x8] sm:$0xff]
    %v1315 = vld [vmem:[%s8 + $0x10] sm:$0xff]
    %v1316 = vld [vmem:[%s8 + $0x18] sm:$0xff]
    %v1317 = vld [vmem:[%s8 + $0x20] sm:$0xff]
    %v1318 = vld [vmem:[%s8 + $0x28] sm:$0xff]
    %v1319 = vld [vmem:[%s8 + $0x30] sm:$0xff]
    %v1320 = vld [vmem:[%s8 + $0x38] sm:$0xff]
    %v1321 = vld [vmem:[%s9] sm:$0x3]
    %v1322 = vld [vmem:[%s10] sm:$0xff]
    %v1323 = vld [vmem:[%s10 + $0x8] sm:$0xff]
    %v1324 = vld [vmem:[%s10 + $0x10] sm:$0xff]
    %v1325 = vld [vmem:[%s10 + $0x18] sm:$0xff]
    %v1326 = vld [vmem:[%s11] sm:$0xff]
    %v1327 = vld [vmem:[%s11 + $0x8] sm:$0xff]
    %v1328 = vld [vmem:[%s11 + $0x10] sm:$0xff]
    %v1329 = vld [vmem:[%s11 + $0x18] sm:$0xff]
    %v1330 = vld [vmem:[%s12] sm:$0xff]
    %v1331 = vld [vmem:[%s12 + $0x8] sm:$0xff]
    %v1332 = vld [vmem:[%s12 + $0x10] sm:$0xff]
    %v1333 = vld [vmem:[%s12 + $0x18] sm:$0xff]
    %v1334 = vld [vmem:[%s13] sm:$0xff]
    %v1335 = vld [vmem:[%s13 + $0x8] sm:$0xff]
    %v1336 = vld [vmem:[%s13 + $0x10] sm:$0xff]
    %v1337 = vld [vmem:[%s13 + $0x18] sm:$0xff]
    %v1338 = vld [vmem:[%s14] sm:$0x1]
    %v1340 = vperm.slane %v1321, 0
    %v1341 = vperm.slane %v1321, 1
    %v1345 = vsel %vm84, %v1311, 0
    %v1348 = vsel %vm84, %v1312, 0
    %1350 = vmatpush.msra.mxu0 0.0
    %1351 = vmatpush.msra.mxu0 0.0
    %1352 = vmatpush.msra.mxu0 0.0
    %1353 = vmatpush.msra.mxu0 0.0
    %1354 = vmatpush.msra.mxu0 0.0
    %1355 = vmatpush.msra.mxu0 0.0
    %1356 = vmatpush.msra.mxu0 0.0
    %1357 = vmatpush.msra.mxu0 0.0
    %1358 = vmatpush.msra.mxu0 0.0
    %1359 = vmatpush.msra.mxu0 0.0
    %1360 = vmatpush.msra.mxu0 0.0
    %1361 = vmatpush.msra.mxu0 0.0
    %1362 = vmatpush.msra.mxu0 %v1319
    %1363 = vmatpush.msra.mxu0 %v1317
    %1364 = vmatpush.msra.mxu0 %v1315
    %1365 = vmatpush.msra.mxu0 %v1313
    %1366 = vmatmul.f32.gmra.mxu0 %v1345
    %v1367 = vpop.f32.mrf.mxu0
    %v1368 = vadd.f32 %v1340, %v1367
    %1369 = vmatmul.f32.gmra.mxu0 %v1348
    %v1370 = vpop.f32.mrf.mxu0
    %v1371 = vadd.f32 %v1340, %v1370
    %1372 = vdwg.mxu0
    %1373 = vmatpush.msra.mxu0 0.0
    %1374 = vmatpush.msra.mxu0 0.0
    %1375 = vmatpush.msra.mxu0 0.0
    %1376 = vmatpush.msra.mxu0 0.0
    %1377 = vmatpush.msra.mxu0 0.0
    %1378 = vmatpush.msra.mxu0 0.0
    %1379 = vmatpush.msra.mxu0 0.0
    %1380 = vmatpush.msra.mxu0 0.0
    %1381 = vmatpush.msra.mxu0 0.0
    %1382 = vmatpush.msra.mxu0 0.0
    %1383 = vmatpush.msra.mxu0 0.0
    %1384 = vmatpush.msra.mxu0 0.0
    %1385 = vmatpush.msra.mxu0 %v1320
    %1386 = vmatpush.msra.mxu0 %v1318
    %1387 = vmatpush.msra.mxu0 %v1316
    %1388 = vmatpush.msra.mxu0 %v1314
    %1389 = vmatmul.f32.gmra.mxu0 %v1345
    %v1390 = vpop.f32.mrf.mxu0
    %v1391 = vadd.f32 %v1341, %v1390
    %1392 = vmatmul.f32.gmra.mxu0 %v1348
    %v1393 = vpop.f32.mrf.mxu0
    %v1394 = vadd.f32 %v1341, %v1393
    %1395 = vdwg.mxu0
    %1396 = vmatpush.msra.mxu0 0.0
    %1397 = vmatpush.msra.mxu0 0.0
    %1398 = vmatpush.msra.mxu0 0.0
    %1399 = vmatpush.msra.mxu0 0.0
    %1400 = vmatpush.msra.mxu0 0.0
    %1401 = vmatpush.msra.mxu0 0.0
    %1402 = vmatpush.msra.mxu0 0.0
    %1403 = vmatpush.msra.mxu0 0.0
    %1404 = vmatpush.msra.mxu0 0.0
    %1405 = vmatpush.msra.mxu0 0.0
    %1406 = vmatpush.msra.mxu0 0.0
    %1407 = vmatpush.msra.mxu0 0.0
    %1408 = vmatpush.msra.mxu0 %v1325
    %1409 = vmatpush.msra.mxu0 %v1324
    %1410 = vmatpush.msra.mxu0 %v1323
    %1411 = vmatpush.msra.mxu0 %v1322
    %1412 = vmatmul.f32.gmra.mxu0 %v138
    %v1413 = vpop.f32.mrf.mxu0
    %v1414 = vadd.f32 0.0, %v1413
    %1415 = vdwg.mxu0
    %v1416 = vadd.f32 %v1368, %v1414
    %v1417 = vxor.u32 %v1416, 2147483648
    %v1418 = vmul.f32 %v1417, 1.442695
    %v1419 = vpow.pop %v1418
    %v1420 = vadd.f32 %v1419, 1.0
    %v1421 = vrcp.pop %v1420
    %v1422 = vmul.f32 %v1420, %v1421
    %v1423 = vsub.f32 1.0, %v1422
    %v1424 = vmul.f32 %v1421, %v1423
    %v1425 = vadd.f32 %v1421, %v1424
    %vm1426 = vweird.f32 %v1420
    %vm1427 = vweird.f32 %v1421
    %vm1428 = vmor %vm1426, %vm1427
    %v1429 = vsel %vm1428, %v1421, %v1425
    %v1430 = vand.u32 2147483647, %v1420
    %vm1431 = vcmp.eq.f32.partialorder %v1430, 8.507059e+37
    %v1432 = vand.u32 %v1420, 2147483648
    %v1433 = vor.u32 1.1754944e-38, %v1432
    %v1434 = vsel %vm1431, %v1433, %v1429
    %v1435 = vmul.f32 1.0, %v1434
    %v1436 = vtanh.pop %v1416
    %v1437 = vmul.f32 %v1435, 0.0
    %1439 = vrot.lane.b32.xlu0 %v1436, 64
    %v1440 = vpop.permute.xlu0 %1439
    %v1442 = vmul.f32 %v1435, %v1440
    %1444 = vrot.lane.b32.xlu0 %v1442, 32
    %v1445 = vpop.permute.xlu0 %1444
    %v1447 = vadd.f32 %v1437, %v1445
    %v1448 = vtanh.pop %v1447
    %1450 = vrot.lane.b32.xlu0 %v1448, 64
    %v1451 = vpop.permute.xlu0 %1450
    %v1453 = vmul.f32 %v1435, %v1451
    %1454 = vmatpush.msra.mxu0 0.0
    %1455 = vmatpush.msra.mxu0 0.0
    %1456 = vmatpush.msra.mxu0 0.0
    %1457 = vmatpush.msra.mxu0 0.0
    %1458 = vmatpush.msra.mxu0 0.0
    %1459 = vmatpush.msra.mxu0 0.0
    %1460 = vmatpush.msra.mxu0 0.0
    %1461 = vmatpush.msra.mxu0 0.0
    %1462 = vmatpush.msra.mxu0 0.0
    %1463 = vmatpush.msra.mxu0 0.0
    %1464 = vmatpush.msra.mxu0 0.0
    %1465 = vmatpush.msra.mxu0 0.0
    %1466 = vmatpush.msra.mxu0 %v1329
    %1467 = vmatpush.msra.mxu0 %v1328
    %1468 = vmatpush.msra.mxu0 %v1327
    %1469 = vmatpush.msra.mxu0 %v1326
    %1470 = vmatmul.f32.gmra.mxu0 %v138
    %v1471 = vpop.f32.mrf.mxu0
    %v1472 = vadd.f32 0.0, %v1471
    %1473 = vdwg.mxu0
    %v1475 = vrot.slane %v1472, 2
    %v1477 = vadd.f32 %v1394, %v1475
    %v1478 = vxor.u32 %v1477, 2147483648
    %v1479 = vmul.f32 %v1478, 1.442695
    %v1480 = vpow.pop %v1479
    %v1481 = vadd.f32 %v1480, 1.0
    %v1482 = vrcp.pop %v1481
    %v1483 = vmul.f32 %v1481, %v1482
    %v1484 = vsub.f32 1.0, %v1483
    %v1485 = vmul.f32 %v1482, %v1484
    %v1486 = vadd.f32 %v1482, %v1485
    %vm1487 = vweird.f32 %v1481
    %vm1488 = vweird.f32 %v1482
    %vm1489 = vmor %vm1487, %vm1488
    %v1490 = vsel %vm1489, %v1482, %v1486
    %v1491 = vand.u32 2147483647, %v1481
    %vm1492 = vcmp.eq.f32.partialorder %v1491, 8.507059e+37
    %v1493 = vand.u32 %v1481, 2147483648
    %v1494 = vor.u32 1.1754944e-38, %v1493
    %v1495 = vsel %vm1492, %v1494, %v1490
    %v1496 = vmul.f32 1.0, %v1495
    %v1497 = vtanh.pop %v1477
    %v1498 = vmul.f32 %v1496, 0.0
    %1500 = vrot.lane.b32.xlu0 %v1497, 64
    %v1501 = vpop.permute.xlu0 %1500
    %v1503 = vmul.f32 %v1496, %v1501
    %1505 = vrot.lane.b32.xlu0 %v1503, 32
    %v1506 = vpop.permute.xlu0 %1505
    %v1508 = vadd.f32 %v1498, %v1506
    %v1509 = vtanh.pop %v1508
    %1511 = vrot.lane.b32.xlu0 %v1509, 64
    %v1512 = vpop.permute.xlu0 %1511
    %v1514 = vmul.f32 %v1496, %v1512
    %1516 = vrot.lane.b32.xlu0 %v1453, 32
    %v1517 = vpop.permute.xlu0 %1516
    %v1518 = vsel %vm84, %v1517, 0
    %1520 = vmatpush.msra.mxu0 0.0
    %1521 = vmatpush.msra.mxu0 0.0
    %1522 = vmatpush.msra.mxu0 0.0
    %1523 = vmatpush.msra.mxu0 0.0
    %1524 = vmatpush.msra.mxu0 0.0
    %1525 = vmatpush.msra.mxu0 0.0
    %1526 = vmatpush.msra.mxu0 0.0
    %1527 = vmatpush.msra.mxu0 0.0
    %1528 = vmatpush.msra.mxu0 0.0
    %1529 = vmatpush.msra.mxu0 0.0
    %1530 = vmatpush.msra.mxu0 0.0
    %1531 = vmatpush.msra.mxu0 0.0
    %1532 = vmatpush.msra.mxu0 %v1325
    %1533 = vmatpush.msra.mxu0 %v1324
    %1534 = vmatpush.msra.mxu0 %v1323
    %1535 = vmatpush.msra.mxu0 %v1322
    %1536 = vmatmul.f32.gmra.mxu0 %v1518
    %v1537 = vpop.f32.mrf.mxu0
    %v1538 = vadd.f32 0.0, %v1537
    %1539 = vdwg.mxu0
    %v1541 = vrot.slane %v1538, 6
    %v1543 = vadd.f32 %v1368, %v1541
    %v1544 = vxor.u32 %v1543, 2147483648
    %v1545 = vmul.f32 %v1544, 1.442695
    %v1546 = vpow.pop %v1545
    %v1547 = vadd.f32 %v1546, 1.0
    %v1548 = vrcp.pop %v1547
    %v1549 = vmul.f32 %v1547, %v1548
    %v1550 = vsub.f32 1.0, %v1549
    %v1551 = vmul.f32 %v1548, %v1550
    %v1552 = vadd.f32 %v1548, %v1551
    %vm1553 = vweird.f32 %v1547
    %vm1554 = vweird.f32 %v1548
    %vm1555 = vmor %vm1553, %vm1554
    %v1556 = vsel %vm1555, %v1548, %v1552
    %v1557 = vand.u32 2147483647, %v1547
    %vm1558 = vcmp.eq.f32.partialorder %v1557, 8.507059e+37
    %v1559 = vand.u32 %v1547, 2147483648
    %v1560 = vor.u32 1.1754944e-38, %v1559
    %v1561 = vsel %vm1558, %v1560, %v1556
    %v1562 = vmul.f32 1.0, %v1561
    %v1563 = vtanh.pop %v1543
    %v1565 = vrot.slane %v1447, 6
    %v1567 = vmul.f32 %v1562, %v1565
    %1569 = vrot.lane.b32.xlu0 %v1563, 64
    %v1570 = vpop.permute.xlu0 %1569
    %v1572 = vmul.f32 %v1562, %v1570
    %1574 = vrot.lane.b32.xlu0 %v1572, 32
    %v1575 = vpop.permute.xlu0 %1574
    %v1577 = vadd.f32 %v1567, %v1575
    %v1578 = vtanh.pop %v1577
    %1580 = vrot.lane.b32.xlu0 %v1578, 64
    %v1581 = vpop.permute.xlu0 %1580
    %v1583 = vmul.f32 %v1562, %v1581
    %v1585 = vrot.slane %v1514, 6
    %1586 = vrot.lane.b32.xlu0 %v1585, 32
    %v1587 = vpop.permute.xlu0 %1586
    %v1588 = vsel %vm84, %v1587, 0
    %1590 = vmatpush.msra.mxu0 0.0
    %1591 = vmatpush.msra.mxu0 0.0
    %1592 = vmatpush.msra.mxu0 0.0
    %1593 = vmatpush.msra.mxu0 0.0
    %1594 = vmatpush.msra.mxu0 0.0
    %1595 = vmatpush.msra.mxu0 0.0
    %1596 = vmatpush.msra.mxu0 0.0
    %1597 = vmatpush.msra.mxu0 0.0
    %1598 = vmatpush.msra.mxu0 0.0
    %1599 = vmatpush.msra.mxu0 0.0
    %1600 = vmatpush.msra.mxu0 0.0
    %1601 = vmatpush.msra.mxu0 0.0
    %1602 = vmatpush.msra.mxu0 %v1329
    %1603 = vmatpush.msra.mxu0 %v1328
    %1604 = vmatpush.msra.mxu0 %v1327
    %1605 = vmatpush.msra.mxu0 %v1326
    %1606 = vmatmul.f32.gmra.mxu0 %v1588
    %v1607 = vpop.f32.mrf.mxu0
    %v1608 = vadd.f32 0.0, %v1607
    %1609 = vdwg.mxu0
    %v1611 = vrot.slane %v1608, 4
    %v1613 = vadd.f32 %v1394, %v1611
    %v1614 = vxor.u32 %v1613, 2147483648
    %v1615 = vmul.f32 %v1614, 1.442695
    %v1616 = vpow.pop %v1615
    %v1617 = vadd.f32 %v1616, 1.0
    %v1618 = vrcp.pop %v1617
    %v1619 = vmul.f32 %v1617, %v1618
    %v1620 = vsub.f32 1.0, %v1619
    %v1621 = vmul.f32 %v1618, %v1620
    %v1622 = vadd.f32 %v1618, %v1621
    %vm1623 = vweird.f32 %v1617
    %vm1624 = vweird.f32 %v1618
    %vm1625 = vmor %vm1623, %vm1624
    %v1626 = vsel %vm1625, %v1618, %v1622
    %v1627 = vand.u32 2147483647, %v1617
    %vm1628 = vcmp.eq.f32.partialorder %v1627, 8.507059e+37
    %v1629 = vand.u32 %v1617, 2147483648
    %v1630 = vor.u32 1.1754944e-38, %v1629
    %v1631 = vsel %vm1628, %v1630, %v1626
    %v1632 = vmul.f32 1.0, %v1631
    %v1633 = vtanh.pop %v1613
    %v1635 = vrot.slane %v1508, 2
    %v1637 = vmul.f32 %v1632, %v1635
    %1639 = vrot.lane.b32.xlu0 %v1633, 64
    %v1640 = vpop.permute.xlu0 %1639
    %v1642 = vmul.f32 %v1632, %v1640
    %1644 = vrot.lane.b32.xlu0 %v1642, 32
    %v1645 = vpop.permute.xlu0 %1644
    %v1647 = vadd.f32 %v1637, %v1645
    %v1648 = vtanh.pop %v1647
    %1650 = vrot.lane.b32.xlu0 %v1648, 64
    %v1651 = vpop.permute.xlu0 %1650
    %v1653 = vmul.f32 %v1632, %v1651
    %v1655 = vrot.slane %v1583, 2
    %1656 = vrot.lane.b32.xlu0 %v1655, 32
    %v1657 = vpop.permute.xlu0 %1656
    %v1658 = vsel %vm84, %v1657, 0
    %1660 = vmatpush.msra.mxu0 0.0
    %1661 = vmatpush.msra.mxu0 0.0
    %1662 = vmatpush.msra.mxu0 0.0
    %1663 = vmatpush.msra.mxu0 0.0
    %1664 = vmatpush.msra.mxu0 0.0
    %1665 = vmatpush.msra.mxu0 0.0
    %1666 = vmatpush.msra.mxu0 0.0
    %1667 = vmatpush.msra.mxu0 0.0
    %1668 = vmatpush.msra.mxu0 0.0
    %1669 = vmatpush.msra.mxu0 0.0
    %1670 = vmatpush.msra.mxu0 0.0
    %1671 = vmatpush.msra.mxu0 0.0
    %1672 = vmatpush.msra.mxu0 %v1325
    %1673 = vmatpush.msra.mxu0 %v1324
    %1674 = vmatpush.msra.mxu0 %v1323
    %1675 = vmatpush.msra.mxu0 %v1322
    %1676 = vmatmul.f32.gmra.mxu0 %v1658
    %v1677 = vpop.f32.mrf.mxu0
    %v1678 = vadd.f32 0.0, %v1677
    %1679 = vdwg.mxu0
    %v1681 = vrot.slane %v1678, 4
    %v1683 = vadd.f32 %v1368, %v1681
    %v1684 = vxor.u32 %v1683, 2147483648
    %v1685 = vmul.f32 %v1684, 1.442695
    %v1686 = vpow.pop %v1685
    %v1687 = vadd.f32 %v1686, 1.0
    %v1688 = vrcp.pop %v1687
    %v1689 = vmul.f32 %v1687, %v1688
    %v1690 = vsub.f32 1.0, %v1689
    %v1691 = vmul.f32 %v1688, %v1690
    %v1692 = vadd.f32 %v1688, %v1691
    %vm1693 = vweird.f32 %v1687
    %vm1694 = vweird.f32 %v1688
    %vm1695 = vmor %vm1693, %vm1694
    %v1696 = vsel %vm1695, %v1688, %v1692
    %v1697 = vand.u32 2147483647, %v1687
    %vm1698 = vcmp.eq.f32.partialorder %v1697, 8.507059e+37
    %v1699 = vand.u32 %v1687, 2147483648
    %v1700 = vor.u32 1.1754944e-38, %v1699
    %v1701 = vsel %vm1698, %v1700, %v1696
    %v1702 = vmul.f32 1.0, %v1701
    %v1703 = vtanh.pop %v1683
    %v1705 = vrot.slane %v1577, 6
    %v1707 = vmul.f32 %v1702, %v1705
    %1709 = vrot.lane.b32.xlu0 %v1703, 64
    %v1710 = vpop.permute.xlu0 %1709
    %v1712 = vmul.f32 %v1702, %v1710
    %1714 = vrot.lane.b32.xlu0 %v1712, 32
    %v1715 = vpop.permute.xlu0 %1714
    %v1717 = vadd.f32 %v1707, %v1715
    %v1718 = vtanh.pop %v1717
    %1720 = vrot.lane.b32.xlu0 %v1718, 64
    %v1721 = vpop.permute.xlu0 %1720
    %v1723 = vmul.f32 %v1702, %v1721
    %v1725 = vrot.slane %v1653, 4
    %1726 = vrot.lane.b32.xlu0 %v1725, 32
    %v1727 = vpop.permute.xlu0 %1726
    %v1728 = vsel %vm84, %v1727, 0
    %1730 = vmatpush.msra.mxu0 0.0
    %1731 = vmatpush.msra.mxu0 0.0
    %1732 = vmatpush.msra.mxu0 0.0
    %1733 = vmatpush.msra.mxu0 0.0
    %1734 = vmatpush.msra.mxu0 0.0
    %1735 = vmatpush.msra.mxu0 0.0
    %1736 = vmatpush.msra.mxu0 0.0
    %1737 = vmatpush.msra.mxu0 0.0
    %1738 = vmatpush.msra.mxu0 0.0
    %1739 = vmatpush.msra.mxu0 0.0
    %1740 = vmatpush.msra.mxu0 0.0
    %1741 = vmatpush.msra.mxu0 0.0
    %1742 = vmatpush.msra.mxu0 %v1329
    %1743 = vmatpush.msra.mxu0 %v1328
    %1744 = vmatpush.msra.mxu0 %v1327
    %1745 = vmatpush.msra.mxu0 %v1326
    %1746 = vmatmul.f32.gmra.mxu0 %v1728
    %v1747 = vpop.f32.mrf.mxu0
    %v1748 = vadd.f32 0.0, %v1747
    %1749 = vdwg.mxu0
    %v1751 = vrot.slane %v1748, 6
    %v1753 = vadd.f32 %v1394, %v1751
    %v1754 = vxor.u32 %v1753, 2147483648
    %v1755 = vmul.f32 %v1754, 1.442695
    %v1756 = vpow.pop %v1755
    %v1757 = vadd.f32 %v1756, 1.0
    %v1758 = vrcp.pop %v1757
    %v1759 = vmul.f32 %v1757, %v1758
    %v1760 = vsub.f32 1.0, %v1759
    %v1761 = vmul.f32 %v1758, %v1760
    %v1762 = vadd.f32 %v1758, %v1761
    %vm1763 = vweird.f32 %v1757
    %vm1764 = vweird.f32 %v1758
    %vm1765 = vmor %vm1763, %vm1764
    %v1766 = vsel %vm1765, %v1758, %v1762
    %v1767 = vand.u32 2147483647, %v1757
    %vm1768 = vcmp.eq.f32.partialorder %v1767, 8.507059e+37
    %v1769 = vand.u32 %v1757, 2147483648
    %v1770 = vor.u32 1.1754944e-38, %v1769
    %v1771 = vsel %vm1768, %v1770, %v1766
    %v1772 = vmul.f32 1.0, %v1771
    %v1773 = vtanh.pop %v1753
    %v1775 = vrot.slane %v1647, 2
    %v1777 = vmul.f32 %v1772, %v1775
    %1779 = vrot.lane.b32.xlu0 %v1773, 64
    %v1780 = vpop.permute.xlu0 %1779
    %v1782 = vmul.f32 %v1772, %v1780
    %1784 = vrot.lane.b32.xlu0 %v1782, 32
    %v1785 = vpop.permute.xlu0 %1784
    %v1787 = vadd.f32 %v1777, %v1785
    %v1788 = vtanh.pop %v1787
    %1790 = vrot.lane.b32.xlu0 %v1788, 64
    %v1791 = vpop.permute.xlu0 %1790
    %v1793 = vmul.f32 %v1772, %v1791
    %v1795 = vrot.slane %v1723, 4
    %1796 = vrot.lane.b32.xlu0 %v1795, 32
    %v1797 = vpop.permute.xlu0 %1796
    %v1798 = vsel %vm84, %v1797, 0
    %1800 = vmatpush.msra.mxu0 0.0
    %1801 = vmatpush.msra.mxu0 0.0
    %1802 = vmatpush.msra.mxu0 0.0
    %1803 = vmatpush.msra.mxu0 0.0
    %1804 = vmatpush.msra.mxu0 0.0
    %1805 = vmatpush.msra.mxu0 0.0
    %1806 = vmatpush.msra.mxu0 0.0
    %1807 = vmatpush.msra.mxu0 0.0
    %1808 = vmatpush.msra.mxu0 0.0
    %1809 = vmatpush.msra.mxu0 0.0
    %1810 = vmatpush.msra.mxu0 0.0
    %1811 = vmatpush.msra.mxu0 0.0
    %1812 = vmatpush.msra.mxu0 %v1325
    %1813 = vmatpush.msra.mxu0 %v1324
    %1814 = vmatpush.msra.mxu0 %v1323
    %1815 = vmatpush.msra.mxu0 %v1322
    %1816 = vmatmul.f32.gmra.mxu0 %v1798
    %v1817 = vpop.f32.mrf.mxu0
    %v1818 = vadd.f32 0.0, %v1817
    %1819 = vdwg.mxu0
    %v1821 = vrot.slane %v1818, 2
    %v1823 = vadd.f32 %v1368, %v1821
    %v1824 = vxor.u32 %v1823, 2147483648
    %v1825 = vmul.f32 %v1824, 1.442695
    %v1826 = vpow.pop %v1825
    %v1827 = vadd.f32 %v1826, 1.0
    %v1828 = vrcp.pop %v1827
    %v1829 = vmul.f32 %v1827, %v1828
    %v1830 = vsub.f32 1.0, %v1829
    %v1831 = vmul.f32 %v1828, %v1830
    %v1832 = vadd.f32 %v1828, %v1831
    %vm1833 = vweird.f32 %v1827
    %vm1834 = vweird.f32 %v1828
    %vm1835 = vmor %vm1833, %vm1834
    %v1836 = vsel %vm1835, %v1828, %v1832
    %v1837 = vand.u32 2147483647, %v1827
    %vm1838 = vcmp.eq.f32.partialorder %v1837, 8.507059e+37
    %v1839 = vand.u32 %v1827, 2147483648
    %v1840 = vor.u32 1.1754944e-38, %v1839
    %v1841 = vsel %vm1838, %v1840, %v1836
    %v1842 = vmul.f32 1.0, %v1841
    %v1843 = vtanh.pop %v1823
    %v1845 = vrot.slane %v1717, 6
    %v1847 = vmul.f32 %v1842, %v1845
    %1849 = vrot.lane.b32.xlu0 %v1843, 64
    %v1850 = vpop.permute.xlu0 %1849
    %v1852 = vmul.f32 %v1842, %v1850
    %1854 = vrot.lane.b32.xlu0 %v1852, 32
    %v1855 = vpop.permute.xlu0 %1854
    %v1857 = vadd.f32 %v1847, %v1855
    %v1858 = vtanh.pop %v1857
    %1860 = vrot.lane.b32.xlu0 %v1858, 64
    %v1861 = vpop.permute.xlu0 %1860
    %v1863 = vmul.f32 %v1842, %v1861
    %v1865 = vrot.slane %v1793, 2
    %1866 = vrot.lane.b32.xlu0 %v1865, 32
    %v1867 = vpop.permute.xlu0 %1866
    %v1868 = vsel %vm84, %v1867, 0
    %1870 = vmatpush.msra.mxu0 0.0
    %1871 = vmatpush.msra.mxu0 0.0
    %1872 = vmatpush.msra.mxu0 0.0
    %1873 = vmatpush.msra.mxu0 0.0
    %1874 = vmatpush.msra.mxu0 0.0
    %1875 = vmatpush.msra.mxu0 0.0
    %1876 = vmatpush.msra.mxu0 0.0
    %1877 = vmatpush.msra.mxu0 0.0
    %1878 = vmatpush.msra.mxu0 0.0
    %1879 = vmatpush.msra.mxu0 0.0
    %1880 = vmatpush.msra.mxu0 0.0
    %1881 = vmatpush.msra.mxu0 0.0
    %1882 = vmatpush.msra.mxu0 %v1329
    %1883 = vmatpush.msra.mxu0 %v1328
    %1884 = vmatpush.msra.mxu0 %v1327
    %1885 = vmatpush.msra.mxu0 %v1326
    %1886 = vmatmul.f32.gmra.mxu0 %v1868
    %v1887 = vpop.f32.mrf.mxu0
    %v1888 = vadd.f32 0.0, %v1887
    %1889 = vdwg.mxu0
    %v1890 = vadd.f32 %v1394, %v1888
    %v1891 = vxor.u32 %v1890, 2147483648
    %v1892 = vmul.f32 %v1891, 1.442695
    %v1893 = vpow.pop %v1892
    %v1894 = vadd.f32 %v1893, 1.0
    %v1895 = vrcp.pop %v1894
    %v1896 = vmul.f32 %v1894, %v1895
    %v1897 = vsub.f32 1.0, %v1896
    %v1898 = vmul.f32 %v1895, %v1897
    %v1899 = vadd.f32 %v1895, %v1898
    %vm1900 = vweird.f32 %v1894
    %vm1901 = vweird.f32 %v1895
    %vm1902 = vmor %vm1900, %vm1901
    %v1903 = vsel %vm1902, %v1895, %v1899
    %v1904 = vand.u32 2147483647, %v1894
    %vm1905 = vcmp.eq.f32.partialorder %v1904, 8.507059e+37
    %v1906 = vand.u32 %v1894, 2147483648
    %v1907 = vor.u32 1.1754944e-38, %v1906
    %v1908 = vsel %vm1905, %v1907, %v1903
    %v1909 = vmul.f32 1.0, %v1908
    %v1910 = vtanh.pop %v1890
    %v1912 = vrot.slane %v1787, 2
    %v1914 = vmul.f32 %v1909, %v1912
    %1916 = vrot.lane.b32.xlu0 %v1910, 64
    %v1917 = vpop.permute.xlu0 %1916
    %v1919 = vmul.f32 %v1909, %v1917
    %1921 = vrot.lane.b32.xlu0 %v1919, 32
    %v1922 = vpop.permute.xlu0 %1921
    %v1924 = vadd.f32 %v1914, %v1922
    %v1925 = vtanh.pop %v1924
    %1927 = vrot.lane.b32.xlu0 %v1925, 64
    %v1928 = vpop.permute.xlu0 %1927
    %v1930 = vmul.f32 %v1909, %v1928
    %v1932 = vrot.slane %v1863, 6
    %1933 = vrot.lane.b32.xlu0 %v1932, 32
    %v1934 = vpop.permute.xlu0 %1933
    %v1935 = vsel %vm84, %v1934, 0
    %1937 = vmatpush.msra.mxu0 0.0
    %1938 = vmatpush.msra.mxu0 0.0
    %1939 = vmatpush.msra.mxu0 0.0
    %1940 = vmatpush.msra.mxu0 0.0
    %1941 = vmatpush.msra.mxu0 0.0
    %1942 = vmatpush.msra.mxu0 0.0
    %1943 = vmatpush.msra.mxu0 0.0
    %1944 = vmatpush.msra.mxu0 0.0
    %1945 = vmatpush.msra.mxu0 0.0
    %1946 = vmatpush.msra.mxu0 0.0
    %1947 = vmatpush.msra.mxu0 0.0
    %1948 = vmatpush.msra.mxu0 0.0
    %1949 = vmatpush.msra.mxu0 %v1325
    %1950 = vmatpush.msra.mxu0 %v1324
    %1951 = vmatpush.msra.mxu0 %v1323
    %1952 = vmatpush.msra.mxu0 %v1322
    %1953 = vmatmul.f32.gmra.mxu0 %v1935
    %v1954 = vpop.f32.mrf.mxu0
    %v1955 = vadd.f32 0.0, %v1954
    %1956 = vdwg.mxu0
    %v1957 = vadd.f32 %v1371, %v1955
    %v1958 = vxor.u32 %v1957, 2147483648
    %v1959 = vmul.f32 %v1958, 1.442695
    %v1960 = vpow.pop %v1959
    %v1961 = vadd.f32 %v1960, 1.0
    %v1962 = vrcp.pop %v1961
    %v1963 = vmul.f32 %v1961, %v1962
    %v1964 = vsub.f32 1.0, %v1963
    %v1965 = vmul.f32 %v1962, %v1964
    %v1966 = vadd.f32 %v1962, %v1965
    %vm1967 = vweird.f32 %v1961
    %vm1968 = vweird.f32 %v1962
    %vm1969 = vmor %vm1967, %vm1968
    %v1970 = vsel %vm1969, %v1962, %v1966
    %v1971 = vand.u32 2147483647, %v1961
    %vm1972 = vcmp.eq.f32.partialorder %v1971, 8.507059e+37
    %v1973 = vand.u32 %v1961, 2147483648
    %v1974 = vor.u32 1.1754944e-38, %v1973
    %v1975 = vsel %vm1972, %v1974, %v1970
    %v1976 = vmul.f32 1.0, %v1975
    %v1977 = vtanh.pop %v1957
    %v1979 = vrot.slane %v1857, 6
    %v1981 = vmul.f32 %v1976, %v1979
    %1983 = vrot.lane.b32.xlu0 %v1977, 64
    %v1984 = vpop.permute.xlu0 %1983
    %v1986 = vmul.f32 %v1976, %v1984
    %1988 = vrot.lane.b32.xlu0 %v1986, 32
    %v1989 = vpop.permute.xlu0 %1988
    %v1991 = vadd.f32 %v1981, %v1989
    %v1992 = vtanh.pop %v1991
    %1994 = vrot.lane.b32.xlu0 %v1992, 64
    %v1995 = vpop.permute.xlu0 %1994
    %v1997 = vmul.f32 %v1976, %v1995
    %1999 = vrot.lane.b32.xlu0 %v1930, 32
    %v2000 = vpop.permute.xlu0 %1999
    %v2001 = vsel %vm84, %v2000, 0
    %2003 = vmatpush.msra.mxu0 0.0
    %2004 = vmatpush.msra.mxu0 0.0
    %2005 = vmatpush.msra.mxu0 0.0
    %2006 = vmatpush.msra.mxu0 0.0
    %2007 = vmatpush.msra.mxu0 0.0
    %2008 = vmatpush.msra.mxu0 0.0
    %2009 = vmatpush.msra.mxu0 0.0
    %2010 = vmatpush.msra.mxu0 0.0
    %2011 = vmatpush.msra.mxu0 0.0
    %2012 = vmatpush.msra.mxu0 0.0
    %2013 = vmatpush.msra.mxu0 0.0
    %2014 = vmatpush.msra.mxu0 0.0
    %2015 = vmatpush.msra.mxu0 %v1329
    %2016 = vmatpush.msra.mxu0 %v1328
    %2017 = vmatpush.msra.mxu0 %v1327
    %2018 = vmatpush.msra.mxu0 %v1326
    %2019 = vmatmul.f32.gmra.mxu0 %v2001
    %v2020 = vpop.f32.mrf.mxu0
    %v2021 = vadd.f32 0.0, %v2020
    %2022 = vdwg.mxu0
    %v2024 = vrot.slane %v2021, 2
    %v2026 = vadd.f32 %v1391, %v2024
    %v2027 = vxor.u32 %v2026, 2147483648
    %v2028 = vmul.f32 %v2027, 1.442695
    %v2029 = vpow.pop %v2028
    %v2030 = vadd.f32 %v2029, 1.0
    %v2031 = vrcp.pop %v2030
    %v2032 = vmul.f32 %v2030, %v2031
    %v2033 = vsub.f32 1.0, %v2032
    %v2034 = vmul.f32 %v2031, %v2033
    %v2035 = vadd.f32 %v2031, %v2034
    %vm2036 = vweird.f32 %v2030
    %vm2037 = vweird.f32 %v2031
    %vm2038 = vmor %vm2036, %vm2037
    %v2039 = vsel %vm2038, %v2031, %v2035
    %v2040 = vand.u32 2147483647, %v2030
    %vm2041 = vcmp.eq.f32.partialorder %v2040, 8.507059e+37
    %v2042 = vand.u32 %v2030, 2147483648
    %v2043 = vor.u32 1.1754944e-38, %v2042
    %v2044 = vsel %vm2041, %v2043, %v2039
    %v2045 = vmul.f32 1.0, %v2044
    %v2046 = vtanh.pop %v2026
    %v2048 = vrot.slane %v1924, 2
    %v2050 = vmul.f32 %v2045, %v2048
    %2052 = vrot.lane.b32.xlu0 %v2046, 64
    %v2053 = vpop.permute.xlu0 %2052
    %v2055 = vmul.f32 %v2045, %v2053
    %2057 = vrot.lane.b32.xlu0 %v2055, 32
    %v2058 = vpop.permute.xlu0 %2057
    %v2060 = vadd.f32 %v2050, %v2058
    %v2061 = vtanh.pop %v2060
    %2063 = vrot.lane.b32.xlu0 %v2061, 64
    %v2064 = vpop.permute.xlu0 %2063
    %v2066 = vmul.f32 %v2045, %v2064
    %2068 = vrot.lane.b32.xlu0 %v1997, 32
    %v2069 = vpop.permute.xlu0 %2068
    %v2070 = vsel %vm84, %v2069, 0
    %2072 = vmatpush.msra.mxu0 0.0
    %2073 = vmatpush.msra.mxu0 0.0
    %2074 = vmatpush.msra.mxu0 0.0
    %2075 = vmatpush.msra.mxu0 0.0
    %2076 = vmatpush.msra.mxu0 0.0
    %2077 = vmatpush.msra.mxu0 0.0
    %2078 = vmatpush.msra.mxu0 0.0
    %2079 = vmatpush.msra.mxu0 0.0
    %2080 = vmatpush.msra.mxu0 0.0
    %2081 = vmatpush.msra.mxu0 0.0
    %2082 = vmatpush.msra.mxu0 0.0
    %2083 = vmatpush.msra.mxu0 0.0
    %2084 = vmatpush.msra.mxu0 %v1325
    %2085 = vmatpush.msra.mxu0 %v1324
    %2086 = vmatpush.msra.mxu0 %v1323
    %2087 = vmatpush.msra.mxu0 %v1322
    %2088 = vmatmul.f32.gmra.mxu0 %v2070
    %v2089 = vpop.f32.mrf.mxu0
    %v2090 = vadd.f32 0.0, %v2089
    %2091 = vdwg.mxu0
    %v2093 = vrot.slane %v2090, 6
    %v2095 = vadd.f32 %v1371, %v2093
    %v2096 = vxor.u32 %v2095, 2147483648
    %v2097 = vmul.f32 %v2096, 1.442695
    %v2098 = vpow.pop %v2097
    %v2099 = vadd.f32 %v2098, 1.0
    %v2100 = vrcp.pop %v2099
    %v2101 = vmul.f32 %v2099, %v2100
    %v2102 = vsub.f32 1.0, %v2101
    %v2103 = vmul.f32 %v2100, %v2102
    %v2104 = vadd.f32 %v2100, %v2103
    %vm2105 = vweird.f32 %v2099
    %vm2106 = vweird.f32 %v2100
    %vm2107 = vmor %vm2105, %vm2106
    %v2108 = vsel %vm2107, %v2100, %v2104
    %v2109 = vand.u32 2147483647, %v2099
    %vm2110 = vcmp.eq.f32.partialorder %v2109, 8.507059e+37
    %v2111 = vand.u32 %v2099, 2147483648
    %v2112 = vor.u32 1.1754944e-38, %v2111
    %v2113 = vsel %vm2110, %v2112, %v2108
    %v2114 = vmul.f32 1.0, %v2113
    %v2115 = vtanh.pop %v2095
    %v2117 = vrot.slane %v1991, 6
    %v2119 = vmul.f32 %v2114, %v2117
    %2121 = vrot.lane.b32.xlu0 %v2115, 64
    %v2122 = vpop.permute.xlu0 %2121
    %v2124 = vmul.f32 %v2114, %v2122
    %2126 = vrot.lane.b32.xlu0 %v2124, 32
    %v2127 = vpop.permute.xlu0 %2126
    %v2129 = vadd.f32 %v2119, %v2127
    %v2130 = vtanh.pop %v2129
    %2132 = vrot.lane.b32.xlu0 %v2130, 64
    %v2133 = vpop.permute.xlu0 %2132
    %v2135 = vmul.f32 %v2114, %v2133
    %v2137 = vrot.slane %v2066, 6
    %2138 = vrot.lane.b32.xlu0 %v2137, 32
    %v2139 = vpop.permute.xlu0 %2138
    %v2140 = vsel %vm84, %v2139, 0
    %2142 = vmatpush.msra.mxu0 0.0
    %2143 = vmatpush.msra.mxu0 0.0
    %2144 = vmatpush.msra.mxu0 0.0
    %2145 = vmatpush.msra.mxu0 0.0
    %2146 = vmatpush.msra.mxu0 0.0
    %2147 = vmatpush.msra.mxu0 0.0
    %2148 = vmatpush.msra.mxu0 0.0
    %2149 = vmatpush.msra.mxu0 0.0
    %2150 = vmatpush.msra.mxu0 0.0
    %2151 = vmatpush.msra.mxu0 0.0
    %2152 = vmatpush.msra.mxu0 0.0
    %2153 = vmatpush.msra.mxu0 0.0
    %2154 = vmatpush.msra.mxu0 %v1329
    %2155 = vmatpush.msra.mxu0 %v1328
    %2156 = vmatpush.msra.mxu0 %v1327
    %2157 = vmatpush.msra.mxu0 %v1326
    %2158 = vmatmul.f32.gmra.mxu0 %v2140
    %v2159 = vpop.f32.mrf.mxu0
    %v2160 = vadd.f32 0.0, %v2159
    %2161 = vdwg.mxu0
    %v2163 = vrot.slane %v2160, 4
    %v2165 = vadd.f32 %v1391, %v2163
    %v2166 = vxor.u32 %v2165, 2147483648
    %v2167 = vmul.f32 %v2166, 1.442695
    %v2168 = vpow.pop %v2167
    %v2169 = vadd.f32 %v2168, 1.0
    %v2170 = vrcp.pop %v2169
    %v2171 = vmul.f32 %v2169, %v2170
    %v2172 = vsub.f32 1.0, %v2171
    %v2173 = vmul.f32 %v2170, %v2172
    %v2174 = vadd.f32 %v2170, %v2173
    %vm2175 = vweird.f32 %v2169
    %vm2176 = vweird.f32 %v2170
    %vm2177 = vmor %vm2175, %vm2176
    %v2178 = vsel %vm2177, %v2170, %v2174
    %v2179 = vand.u32 2147483647, %v2169
    %vm2180 = vcmp.eq.f32.partialorder %v2179, 8.507059e+37
    %v2181 = vand.u32 %v2169, 2147483648
    %v2182 = vor.u32 1.1754944e-38, %v2181
    %v2183 = vsel %vm2180, %v2182, %v2178
    %v2184 = vmul.f32 1.0, %v2183
    %v2185 = vtanh.pop %v2165
    %v2187 = vrot.slane %v2060, 2
    %v2189 = vmul.f32 %v2184, %v2187
    %2191 = vrot.lane.b32.xlu0 %v2185, 64
    %v2192 = vpop.permute.xlu0 %2191
    %v2194 = vmul.f32 %v2184, %v2192
    %2196 = vrot.lane.b32.xlu0 %v2194, 32
    %v2197 = vpop.permute.xlu0 %2196
    %v2199 = vadd.f32 %v2189, %v2197
    %v2200 = vtanh.pop %v2199
    %2202 = vrot.lane.b32.xlu0 %v2200, 64
    %v2203 = vpop.permute.xlu0 %2202
    %v2205 = vmul.f32 %v2184, %v2203
    %v2207 = vrot.slane %v2135, 2
    %2208 = vrot.lane.b32.xlu0 %v2207, 32
    %v2209 = vpop.permute.xlu0 %2208
    %v2210 = vsel %vm84, %v2209, 0
    %2212 = vmatpush.msra.mxu0 0.0
    %2213 = vmatpush.msra.mxu0 0.0
    %2214 = vmatpush.msra.mxu0 0.0
    %2215 = vmatpush.msra.mxu0 0.0
    %2216 = vmatpush.msra.mxu0 0.0
    %2217 = vmatpush.msra.mxu0 0.0
    %2218 = vmatpush.msra.mxu0 0.0
    %2219 = vmatpush.msra.mxu0 0.0
    %2220 = vmatpush.msra.mxu0 0.0
    %2221 = vmatpush.msra.mxu0 0.0
    %2222 = vmatpush.msra.mxu0 0.0
    %2223 = vmatpush.msra.mxu0 0.0
    %2224 = vmatpush.msra.mxu0 %v1325
    %2225 = vmatpush.msra.mxu0 %v1324
    %2226 = vmatpush.msra.mxu0 %v1323
    %2227 = vmatpush.msra.mxu0 %v1322
    %2228 = vmatmul.f32.gmra.mxu0 %v2210
    %v2229 = vpop.f32.mrf.mxu0
    %v2230 = vadd.f32 0.0, %v2229
    %2231 = vdwg.mxu0
    %v2233 = vrot.slane %v2230, 4
    %v2235 = vadd.f32 %v1371, %v2233
    %v2236 = vxor.u32 %v2235, 2147483648
    %v2237 = vmul.f32 %v2236, 1.442695
    %v2238 = vpow.pop %v2237
    %v2239 = vadd.f32 %v2238, 1.0
    %v2240 = vrcp.pop %v2239
    %v2241 = vmul.f32 %v2239, %v2240
    %v2242 = vsub.f32 1.0, %v2241
    %v2243 = vmul.f32 %v2240, %v2242
    %v2244 = vadd.f32 %v2240, %v2243
    %vm2245 = vweird.f32 %v2239
    %vm2246 = vweird.f32 %v2240
    %vm2247 = vmor %vm2245, %vm2246
    %v2248 = vsel %vm2247, %v2240, %v2244
    %v2249 = vand.u32 2147483647, %v2239
    %vm2250 = vcmp.eq.f32.partialorder %v2249, 8.507059e+37
    %v2251 = vand.u32 %v2239, 2147483648
    %v2252 = vor.u32 1.1754944e-38, %v2251
    %v2253 = vsel %vm2250, %v2252, %v2248
    %v2254 = vmul.f32 1.0, %v2253
    %v2255 = vtanh.pop %v2235
    %v2257 = vrot.slane %v2129, 6
    %v2259 = vmul.f32 %v2254, %v2257
    %2261 = vrot.lane.b32.xlu0 %v2255, 64
    %v2262 = vpop.permute.xlu0 %2261
    %v2264 = vmul.f32 %v2254, %v2262
    %2266 = vrot.lane.b32.xlu0 %v2264, 32
    %v2267 = vpop.permute.xlu0 %2266
    %v2269 = vadd.f32 %v2259, %v2267
    %v2270 = vtanh.pop %v2269
    %2272 = vrot.lane.b32.xlu0 %v2270, 64
    %v2273 = vpop.permute.xlu0 %2272
    %v2275 = vmul.f32 %v2254, %v2273
    %v2277 = vrot.slane %v2205, 4
    %2278 = vrot.lane.b32.xlu0 %v2277, 32
    %v2279 = vpop.permute.xlu0 %2278
    %v2280 = vsel %vm84, %v2279, 0
    %2282 = vmatpush.msra.mxu0 0.0
    %2283 = vmatpush.msra.mxu0 0.0
    %2284 = vmatpush.msra.mxu0 0.0
    %2285 = vmatpush.msra.mxu0 0.0
    %2286 = vmatpush.msra.mxu0 0.0
    %2287 = vmatpush.msra.mxu0 0.0
    %2288 = vmatpush.msra.mxu0 0.0
    %2289 = vmatpush.msra.mxu0 0.0
    %2290 = vmatpush.msra.mxu0 0.0
    %2291 = vmatpush.msra.mxu0 0.0
    %2292 = vmatpush.msra.mxu0 0.0
    %2293 = vmatpush.msra.mxu0 0.0
    %2294 = vmatpush.msra.mxu0 %v1329
    %2295 = vmatpush.msra.mxu0 %v1328
    %2296 = vmatpush.msra.mxu0 %v1327
    %2297 = vmatpush.msra.mxu0 %v1326
    %2298 = vmatmul.f32.gmra.mxu0 %v2280
    %v2299 = vpop.f32.mrf.mxu0
    %v2300 = vadd.f32 0.0, %v2299
    %2301 = vdwg.mxu0
    %v2303 = vrot.slane %v2300, 6
    %v2305 = vadd.f32 %v1391, %v2303
    %v2306 = vxor.u32 %v2305, 2147483648
    %v2307 = vmul.f32 %v2306, 1.442695
    %v2308 = vpow.pop %v2307
    %v2309 = vadd.f32 %v2308, 1.0
    %v2310 = vrcp.pop %v2309
    %v2311 = vmul.f32 %v2309, %v2310
    %v2312 = vsub.f32 1.0, %v2311
    %v2313 = vmul.f32 %v2310, %v2312
    %v2314 = vadd.f32 %v2310, %v2313
    %vm2315 = vweird.f32 %v2309
    %vm2316 = vweird.f32 %v2310
    %vm2317 = vmor %vm2315, %vm2316
    %v2318 = vsel %vm2317, %v2310, %v2314
    %v2319 = vand.u32 2147483647, %v2309
    %vm2320 = vcmp.eq.f32.partialorder %v2319, 8.507059e+37
    %v2321 = vand.u32 %v2309, 2147483648
    %v2322 = vor.u32 1.1754944e-38, %v2321
    %v2323 = vsel %vm2320, %v2322, %v2318
    %v2324 = vmul.f32 1.0, %v2323
    %v2325 = vtanh.pop %v2305
    %v2327 = vrot.slane %v2199, 2
    %v2329 = vmul.f32 %v2324, %v2327
    %2331 = vrot.lane.b32.xlu0 %v2325, 64
    %v2332 = vpop.permute.xlu0 %2331
    %v2334 = vmul.f32 %v2324, %v2332
    %2336 = vrot.lane.b32.xlu0 %v2334, 32
    %v2337 = vpop.permute.xlu0 %2336
    %v2339 = vadd.f32 %v2329, %v2337
    %v2340 = vtanh.pop %v2339
    %2342 = vrot.lane.b32.xlu0 %v2340, 64
    %v2343 = vpop.permute.xlu0 %2342
    %v2345 = vmul.f32 %v2324, %v2343
    %v2347 = vrot.slane %v2275, 4
    %2348 = vrot.lane.b32.xlu0 %v2347, 32
    %v2349 = vpop.permute.xlu0 %2348
    %v2350 = vsel %vm84, %v2349, 0
    %2352 = vmatpush.msra.mxu0 0.0
    %2353 = vmatpush.msra.mxu0 0.0
    %2354 = vmatpush.msra.mxu0 0.0
    %2355 = vmatpush.msra.mxu0 0.0
    %2356 = vmatpush.msra.mxu0 0.0
    %2357 = vmatpush.msra.mxu0 0.0
    %2358 = vmatpush.msra.mxu0 0.0
    %2359 = vmatpush.msra.mxu0 0.0
    %2360 = vmatpush.msra.mxu0 0.0
    %2361 = vmatpush.msra.mxu0 0.0
    %2362 = vmatpush.msra.mxu0 0.0
    %2363 = vmatpush.msra.mxu0 0.0
    %2364 = vmatpush.msra.mxu0 %v1325
    %2365 = vmatpush.msra.mxu0 %v1324
    %2366 = vmatpush.msra.mxu0 %v1323
    %2367 = vmatpush.msra.mxu0 %v1322
    %2368 = vmatmul.f32.gmra.mxu0 %v2350
    %v2369 = vpop.f32.mrf.mxu0
    %v2370 = vadd.f32 0.0, %v2369
    %2371 = vdwg.mxu0
    %v2373 = vrot.slane %v2370, 2
    %v2375 = vadd.f32 %v1371, %v2373
    %v2376 = vxor.u32 %v2375, 2147483648
    %v2377 = vmul.f32 %v2376, 1.442695
    %v2378 = vpow.pop %v2377
    %v2379 = vadd.f32 %v2378, 1.0
    %v2380 = vrcp.pop %v2379
    %v2381 = vmul.f32 %v2379, %v2380
    %v2382 = vsub.f32 1.0, %v2381
    %v2383 = vmul.f32 %v2380, %v2382
    %v2384 = vadd.f32 %v2380, %v2383
    %vm2385 = vweird.f32 %v2379
    %vm2386 = vweird.f32 %v2380
    %vm2387 = vmor %vm2385, %vm2386
    %v2388 = vsel %vm2387, %v2380, %v2384
    %v2389 = vand.u32 2147483647, %v2379
    %vm2390 = vcmp.eq.f32.partialorder %v2389, 8.507059e+37
    %v2391 = vand.u32 %v2379, 2147483648
    %v2392 = vor.u32 1.1754944e-38, %v2391
    %v2393 = vsel %vm2390, %v2392, %v2388
    %v2394 = vmul.f32 1.0, %v2393
    %v2395 = vtanh.pop %v2375
    %v2397 = vrot.slane %v2269, 6
    %v2399 = vmul.f32 %v2394, %v2397
    %2401 = vrot.lane.b32.xlu0 %v2395, 64
    %v2402 = vpop.permute.xlu0 %2401
    %v2404 = vmul.f32 %v2394, %v2402
    %2406 = vrot.lane.b32.xlu0 %v2404, 32
    %v2407 = vpop.permute.xlu0 %2406
    %v2409 = vadd.f32 %v2399, %v2407
    %v2410 = vtanh.pop %v2409
    %2412 = vrot.lane.b32.xlu0 %v2410, 64
    %v2413 = vpop.permute.xlu0 %2412
    %v2415 = vmul.f32 %v2394, %v2413
    %v2417 = vrot.slane %v2345, 2
    %2418 = vrot.lane.b32.xlu0 %v2417, 32
    %v2419 = vpop.permute.xlu0 %2418
    %v2420 = vsel %vm84, %v2419, 0
    %2422 = vmatpush.msra.mxu0 0.0
    %2423 = vmatpush.msra.mxu0 0.0
    %2424 = vmatpush.msra.mxu0 0.0
    %2425 = vmatpush.msra.mxu0 0.0
    %2426 = vmatpush.msra.mxu0 0.0
    %2427 = vmatpush.msra.mxu0 0.0
    %2428 = vmatpush.msra.mxu0 0.0
    %2429 = vmatpush.msra.mxu0 0.0
    %2430 = vmatpush.msra.mxu0 0.0
    %2431 = vmatpush.msra.mxu0 0.0
    %2432 = vmatpush.msra.mxu0 0.0
    %2433 = vmatpush.msra.mxu0 0.0
    %2434 = vmatpush.msra.mxu0 %v1329
    %2435 = vmatpush.msra.mxu0 %v1328
    %2436 = vmatpush.msra.mxu0 %v1327
    %2437 = vmatpush.msra.mxu0 %v1326
    %2438 = vmatmul.f32.gmra.mxu0 %v2420
    %v2439 = vpop.f32.mrf.mxu0
    %v2440 = vadd.f32 0.0, %v2439
    %2441 = vdwg.mxu0
    %v2442 = vadd.f32 %v1391, %v2440
    %v2443 = vxor.u32 %v2442, 2147483648
    %v2444 = vmul.f32 %v2443, 1.442695
    %v2445 = vpow.pop %v2444
    %v2446 = vadd.f32 %v2445, 1.0
    %v2447 = vrcp.pop %v2446
    %v2448 = vmul.f32 %v2446, %v2447
    %v2449 = vsub.f32 1.0, %v2448
    %v2450 = vmul.f32 %v2447, %v2449
    %v2451 = vadd.f32 %v2447, %v2450
    %vm2452 = vweird.f32 %v2446
    %vm2453 = vweird.f32 %v2447
    %vm2454 = vmor %vm2452, %vm2453
    %v2455 = vsel %vm2454, %v2447, %v2451
    %v2456 = vand.u32 2147483647, %v2446
    %vm2457 = vcmp.eq.f32.partialorder %v2456, 8.507059e+37
    %v2458 = vand.u32 %v2446, 2147483648
    %v2459 = vor.u32 1.1754944e-38, %v2458
    %v2460 = vsel %vm2457, %v2459, %v2455
    %v2461 = vmul.f32 1.0, %v2460
    %v2462 = vtanh.pop %v2442
    %v2464 = vrot.slane %v2339, 2
    %v2466 = vmul.f32 %v2461, %v2464
    %2468 = vrot.lane.b32.xlu0 %v2462, 64
    %v2469 = vpop.permute.xlu0 %2468
    %v2471 = vmul.f32 %v2461, %v2469
    %2473 = vrot.lane.b32.xlu0 %v2471, 32
    %v2474 = vpop.permute.xlu0 %2473
    %v2476 = vadd.f32 %v2466, %v2474
    %v2477 = vtanh.pop %v2476
    %2479 = vrot.lane.b32.xlu0 %v2477, 64
    %v2480 = vpop.permute.xlu0 %2479
    %v2482 = vmul.f32 %v2461, %v2480
    %v2483 = vsel %vm1227, %v1453, %v1583
    %v2484 = vsel %vm1229, %v2483, %v1723
    %v2485 = vsel %vm1231, %v2484, %v1863
    %v2486 = vsel %vm1227, %v1997, %v2135
    %v2487 = vsel %vm1229, %v2486, %v2275
    %v2488 = vsel %vm1231, %v2487, %v2415
    %v2489 = vsel %vm1227, %v2482, %v2345
    %v2490 = vsel %vm1229, %v2489, %v2205
    %v2491 = vsel %vm1231, %v2490, %v2066
    %v2492 = vsel %vm1227, %v1930, %v1793
    %v2493 = vsel %vm1229, %v2492, %v1653
    %v2494 = vsel %vm1231, %v2493, %v1514
    %2497 = vrot.lane.b32.xlu0 %v2491, 32
    %v2498 = vpop.permute.xlu0 %2497
    %2499 = vrot.lane.b32.xlu0 %v2494, 32
    %v2500 = vpop.permute.xlu0 %2499
    %v2501 = vsel %vm84, %v2498, 0
    %v2503 = vsel %vm84, %v2500, 0
    %2505 = vmatpush.msra.mxu0 0.0
    %2506 = vmatpush.msra.mxu0 0.0
    %2507 = vmatpush.msra.mxu0 0.0
    %2508 = vmatpush.msra.mxu0 0.0
    %2509 = vmatpush.msra.mxu0 0.0
    %2510 = vmatpush.msra.mxu0 0.0
    %2511 = vmatpush.msra.mxu0 0.0
    %2512 = vmatpush.msra.mxu0 0.0
    %2513 = vmatpush.msra.mxu0 0.0
    %2514 = vmatpush.msra.mxu0 0.0
    %2515 = vmatpush.msra.mxu0 0.0
    %2516 = vmatpush.msra.mxu0 0.0
    %2517 = vmatpush.msra.mxu0 %v1337
    %2518 = vmatpush.msra.mxu0 %v1336
    %2519 = vmatpush.msra.mxu0 %v1335
    %2520 = vmatpush.msra.mxu0 %v1334
    %2521 = vmatmul.f32.gmra.mxu0 %v2501
    %v2522 = vpop.f32.mrf.mxu0
    %v2523 = vadd.f32 0.0, %v2522
    %2524 = vmatmul.f32.gmra.mxu0 %v2503
    %v2525 = vpop.f32.mrf.mxu0
    %v2526 = vadd.f32 0.0, %v2525
    %2527 = vdwg.mxu0
    %2530 = vrot.lane.b32.xlu0 %v2485, 32
    %v2531 = vpop.permute.xlu0 %2530
    %2532 = vrot.lane.b32.xlu0 %v2488, 32
    %v2533 = vpop.permute.xlu0 %2532
    %v2534 = vsel %vm84, %v2531, 0
    %v2536 = vsel %vm84, %v2533, 0
    %2538 = vmatpush.msra.mxu0 0.0
    %2539 = vmatpush.msra.mxu0 0.0
    %2540 = vmatpush.msra.mxu0 0.0
    %2541 = vmatpush.msra.mxu0 0.0
    %2542 = vmatpush.msra.mxu0 0.0
    %2543 = vmatpush.msra.mxu0 0.0
    %2544 = vmatpush.msra.mxu0 0.0
    %2545 = vmatpush.msra.mxu0 0.0
    %2546 = vmatpush.msra.mxu0 0.0
    %2547 = vmatpush.msra.mxu0 0.0
    %2548 = vmatpush.msra.mxu0 0.0
    %2549 = vmatpush.msra.mxu0 0.0
    %2550 = vmatpush.msra.mxu0 %v1333
    %2551 = vmatpush.msra.mxu0 %v1332
    %2552 = vmatpush.msra.mxu0 %v1331
    %2553 = vmatpush.msra.mxu0 %v1330
    %2554 = vmatmul.f32.gmra.mxu0 %v2534
    %v2555 = vpop.f32.mrf.mxu0
    %v2556 = vadd.f32 %v2523, %v2555
    %2557 = vmatmul.f32.gmra.mxu0 %v2536
    %v2558 = vpop.f32.mrf.mxu0
    %v2559 = vadd.f32 %v2526, %v2558
    %2560 = vdwg.mxu0
    %v2562 = vperm.slane %v1338, 0
    %v2564 = vadd.f32 %v2556, %v2562
    %v2565 = vadd.f32 %v2559, %v2562
    %vm2566 = vcmask 523264
    %2567 = vst.msk [vmem:[#allocation2] sm:$0xff] %vm2566, %v2564
    %2568 = vst.msk [vmem:[#allocation2 + $0x8] sm:$0xff] %vm2566, %v2565
    // Predicated region
    $region62: #{crnn_head_forward.1} parent=1 // pred_check
      _
    $region63: #{crnn_head_forward.1} parent=1 // pred_check_branch
      %2570 = sbr.rel (0) target = $region65
    $region64: #{crnn_head_forward.1} parent=1 // pred_region
      %2572 = vsyncadd [#allocation3], 0
      %s2573 = sshll.u32 [#allocation2], 4
      %s2574 = int_to_ptr.vmem [resolvable:$true] %s2573
      %s2575 = sshll.u32 %s15, 4
      %s2576 = int_to_ptr.hbm [resolvable:$true] %s2575
      %2581 = dma.vmem_to_hbm [thread:$0]  %s2574, 256, %s2576, [#allocation3], 128, 128, 8
    $region65: #{crnn_head_forward.1} parent=1 // pred_fallthru
      _
    // Predicated region
    $region66: #{crnn_head_forward.1} parent=1 // pred_check
      _
    $region67: #{crnn_head_forward.1} parent=1 // pred_check_branch
      %2583 = sbr.rel (0) target = $region69
    $region68: #{crnn_head_forward.1} parent=1 // pred_region
      %2585 = dma.done [#allocation3], 256
    $region69: #{crnn_head_forward.1} parent=1 // pred_fallthru
      _
    %2586 = vsyncpa [#allocation3], 1

</llo_original>
